<compile_context>
chip_gen: v7x
topology: tpu7x:2x2x1
jax: 0.10.0
libtpu: 0.0.40
codegen_flags: <defaults>
</compile_context>

<pallas_src>
import jax
import jax.numpy as jnp
from jax.experimental import pallas as pl
from jax.experimental.pallas import tpu as pltpu

LN_EPS = 1e-5

H_IN = 192    # resize1 in_ch  (image H, fixed by LinearResize(192 -> 62))
W_IN = 64     # resize2 in_ch  (image W, fixed by LinearResize(64  -> 19))
H_OUT = 62    # resize1 out_ch
W_OUT = 19    # resize2 out_ch


# ----------------------------- fused kernel --------------------------------

def _make_kernel(T, C):
    f32 = jnp.float32
    bf16 = jnp.bfloat16

    def mm(a, b):
        # MXU matmul: bf16 operands, f32 accumulation.
        return jnp.dot(a.astype(bf16), b.astype(bf16), preferred_element_type=f32)

    def ln_rows(y, gb):
        # LayerNorm over axis 0 (features on sublanes); gb: (N, 2) = [gamma | beta]
        # Single-pass statistics: sum and sum-of-squares reductions are independent.
        n = y.shape[0]
        mu = jnp.sum(y, axis=0, keepdims=True) * (1.0 / n)
        ms = jnp.sum(y * y, axis=0, keepdims=True) * (1.0 / n)
        var = ms - mu * mu
        return (y - mu) * jax.lax.rsqrt(var + LN_EPS) * gb[:, 0:1] + gb[:, 1:2]

    def ln_cols(y, gb):
        # LayerNorm over axis 1 (features on lanes); gb: (2, N) = [gamma ; beta]
        n = y.shape[1]
        mu = jnp.sum(y, axis=1, keepdims=True) * (1.0 / n)
        ms = jnp.sum(y * y, axis=1, keepdims=True) * (1.0 / n)
        var = ms - mu * mu
        return (y - mu) * jax.lax.rsqrt(var + LN_EPS) * gb[0:1, :] + gb[1:2, :]

    def kernel(x_ref,
               w1t_ref, gb11_ref, w2t_ref, gb12_ref, w3t_ref, gb13_ref,
               v1_ref, gb21_ref, v2_ref, gb22_ref, v3_ref, gb23_ref,
               w1e_ref, b1_ref, w2e_ref, b2_ref,
               y1_ref, y2_ref):
        x = x_ref[0]                                        # (192, C*64) bf16

        # resize1 over H=192, all channels at once (channels concatenated on lanes;
        # weights pre-transposed host-side -> plain matmuls, LN over the sublane
        # (feature) axis; ln_rows is column-independent so concat is transparent).
        h = ln_rows(mm(w1t_ref[...], x), gb11_ref[...])     # (186, C*64)
        h = ln_rows(mm(w2t_ref[...], h), gb12_ref[...])     # (186, C*64)
        h = ln_rows(mm(w3t_ref[...], h), gb13_ref[...])     # (62,  C*64)

        # [-T:] slice hoisted here: valid only AFTER the third ln_rows (its stats
        # span all 62 features); resize2 + conv are row-independent downstream.
        h = h[H_OUT - T:, :]                                # (T, C*64)

        v1, v2, v3 = v1_ref[...], v2_ref[...], v3_ref[...]
        gb21, gb22, gb23 = gb21_ref[...], gb22_ref[...], gb23_ref[...]

        # resize2 per channel (tiny after the slice hoist) fused with the layer1
        # channel contraction: identity-expanded folded conv weights turn the
        # C-contraction into accumulated matmuls on a lane-dense (T, ch1*19) slab.
        y1 = b1_ref[...]                                    # (1, ch1*19) folded bias
        for c in range(C):
            xc = h[:, c * W_IN:(c + 1) * W_IN]              # (T, 64)
            g = ln_cols(mm(xc, v1), gb21)                   # (T, 57)
            g = ln_cols(mm(g, v2), gb22)                    # (T, 57)
            g = ln_cols(mm(g, v3), gb23)                    # (T, 19)
            y1 = y1 + jnp.dot(g, w1e_ref[c],
                              preferred_element_type=f32)   # (T, ch1*19)
        y1 = jnp.maximum(y1, 0.0)
        y1_ref[0] = y1                                      # lane-dense store

        # layer2: 1x1 conv (BN + bias folded), identity-expanded -> one matmul.
        y2 = jnp.dot(y1, w2e_ref[...], preferred_element_type=f32) + b2_ref[...]
        y2_ref[0] = jnp.maximum(y2, 0.0)                    # (T, ch2*19)

    return kernel


# ----------------------------- wrapper --------------------------------------

def _full_spec(a):
    nd = a.ndim
    return pl.BlockSpec(a.shape, lambda i, _nd=nd: (0,) * _nd)


def resize_img_forward(img, T, kernel_params, ch1, ch2):
    """Full fused ResizeImg.forward. img: (B, C, 192, 64) f32. Returns NCHW (y1, y2)."""
    B, C = img.shape[0], img.shape[1]
    # Host-side layout: concatenate channels along the lane axis (B, 192, C*64)
    # and cast to bf16 (matmuls run in bf16 anyway; halves input DMA).
    x = jnp.transpose(img, (0, 2, 1, 3)).reshape(B, H_IN, C * W_IN)
    x = x.astype(jnp.bfloat16)

    kernel = _make_kernel(T, C)
    n1, n2 = ch1 * W_OUT, ch2 * W_OUT
    in_specs = [pl.BlockSpec((1, H_IN, C * W_IN), lambda i: (i, 0, 0))]
    in_specs += [_full_spec(p) for p in kernel_params]
    y1f, y2f = pl.pallas_call(
        kernel,
        out_shape=(jax.ShapeDtypeStruct((B, T, n1), jnp.float32),
                   jax.ShapeDtypeStruct((B, T, n2), jnp.float32)),
        grid=(B,),
        in_specs=in_specs,
        out_specs=(pl.BlockSpec((1, T, n1), lambda i: (i, 0, 0)),
                   pl.BlockSpec((1, T, n2), lambda i: (i, 0, 0))),
        compiler_params=pltpu.CompilerParams(dimension_semantics=("parallel",)),
    )(x, *kernel_params)

    # Lane-dense kernel outputs -> NCHW (KB-scale reshape/transpose outside kernel).
    y1 = y1f.reshape(B, T, ch1, W_OUT).transpose(0, 2, 1, 3)
    y2 = y2f.reshape(B, T, ch2, W_OUT).transpose(0, 2, 1, 3)
    return y1, y2


# ----------------------------- parameters ----------------------------------

def make_linear_resize_params(key, in_ch, out_ch):
    mid = out_ch * 3
    ks = jax.random.split(key, 9)
    w1 = jax.random.normal(ks[0], (in_ch, mid), jnp.float32) / jnp.sqrt(in_ch)
    w2 = jax.random.normal(ks[1], (mid, mid), jnp.float32) / jnp.sqrt(mid)
    w3 = jax.random.normal(ks[2], (mid, out_ch), jnp.float32) / jnp.sqrt(mid)
    gamma = lambda k, n: 1.0 + 0.1 * jax.random.normal(k, (n,), jnp.float32)
    beta = lambda k, n: 0.1 * jax.random.normal(k, (n,), jnp.float32)
    # [W (in,out), LN gamma, LN beta] x 3   (Linear weights stored as (in, out))
    return [w1, gamma(ks[3], mid), beta(ks[4], mid),
            w2, gamma(ks[5], mid), beta(ks[6], mid),
            w3, gamma(ks[7], out_ch), beta(ks[8], out_ch)]


def make_conv_params(key, ch, ch1, ch2):
    ks = jax.random.split(key, 8)
    wc1 = jax.random.normal(ks[0], (ch, ch1), jnp.float32) / jnp.sqrt(ch)
    bc1 = 0.1 * jax.random.normal(ks[1], (ch1,), jnp.float32)
    s1 = 1.0 + 0.1 * jax.random.normal(ks[2], (ch1,), jnp.float32)   # BN scale
    t1 = 0.1 * jax.random.normal(ks[3], (ch1,), jnp.float32)         # BN shift
    wc2 = jax.random.normal(ks[4], (ch1, ch2), jnp.float32) / jnp.sqrt(ch1)
    bc2 = 0.1 * jax.random.normal(ks[5], (ch2,), jnp.float32)
    s2 = 1.0 + 0.1 * jax.random.normal(ks[6], (ch2,), jnp.float32)
    t2 = 0.1 * jax.random.normal(ks[7], (ch2,), jnp.float32)
    # TODO(synk): PyTorch training-mode BatchNorm would use batch statistics;
    # inference-mode (folded scale/shift) semantics are used here.
    return [wc1, bc1, s1, t1, wc2, bc2, s2, t2]


def prep_kernel_params(rp1, rp2, cp):
    """Convert reference-layout params into the packed/folded kernel layout."""
    w1, g1, b1, w2, g2, b2, w3, g3, b3 = rp1
    v1, q1g, q1b, v2, q2g, q2b, v3, q3g, q3b = rp2
    wc1, bc1, s1, t1, wc2, bc2, s2, t2 = cp
    bf16 = jnp.bfloat16
    col = lambda g, b: jnp.stack([g, b], axis=1)    # (n, 2) for sublane-axis LN
    row = lambda g, b: jnp.stack([g, b], axis=0)    # (2, n) for lane-axis LN

    # Fold BN scale/shift and conv bias into the 1x1-conv weights, then expand the
    # channel contractions into identity-block matrices acting on flat (T, ch*19)
    # lane-dense slabs (y1_flat[t, o*19+v], y2_flat[t, p*19+v]).
    C, ch1 = wc1.shape
    ch2 = wc2.shape[1]
    wc1f = (wc1 * s1[None, :]).T                    # (ch1, C)
    b1f = bc1 * s1 + t1                             # (ch1,)
    wc2f = (wc2 * s2[None, :]).T                    # (ch2, ch1)
    b2f = bc2 * s2 + t2                             # (ch2,)
    eye = jnp.eye(W_OUT, dtype=jnp.float32)
    w1e = jnp.einsum('oc,wv->cwov', wc1f, eye).reshape(C, W_OUT, ch1 * W_OUT)
    w2e = jnp.einsum('po,wv->owpv', wc2f, eye).reshape(ch1 * W_OUT, ch2 * W_OUT)
    b1row = jnp.repeat(b1f, W_OUT)[None, :]         # (1, ch1*19)
    b2row = jnp.repeat(b2f, W_OUT)[None, :]         # (1, ch2*19)

    return [
        w1.T.astype(bf16), col(g1, b1),             # resize1 (pre-transposed, bf16)
        w2.T.astype(bf16), col(g2, b2),
        w3.T.astype(bf16), col(g3, b3),
        v1.astype(bf16), row(q1g, q1b),             # resize2 (bf16)
        v2.astype(bf16), row(q2g, q2b),
        v3.astype(bf16), row(q3g, q3b),
        w1e, b1row, w2e, b2row,                     # folded + expanded conv (f32)
    ]


# ----------------------------- pure-JAX reference ---------------------------

def reference_forward(img, T, rp1, rp2, cp):
    hp = jax.lax.Precision.HIGHEST

    def ln(y, g, b):
        mu = y.mean(-1, keepdims=True)
        var = ((y - mu) ** 2).mean(-1, keepdims=True)
        return (y - mu) / jnp.sqrt(var + LN_EPS) * g + b

    def lresize(x, p):
        w1, g1, b1, w2, g2, b2, w3, g3, b3 = p
        h = ln(jnp.matmul(x, w1, precision=hp), g1, b1)
        h = ln(jnp.matmul(h, w2, precision=hp), g2, b2)
        return ln(jnp.matmul(h, w3, precision=hp), g3, b3)

    x = jnp.swapaxes(img, -1, -2)          # (B, C, 64, 192)
    x = lresize(x, rp1)                    # (B, C, 64, 62)
    x = jnp.swapaxes(x, -1, -2)            # (B, C, 62, 64)
    x = lresize(x, rp2)                    # (B, C, 62, 19)
    x = x[:, :, -T:, :]                    # (B, C, T, 19)
    wc1, bc1, s1, t1, wc2, bc2, s2, t2 = cp
    bc = lambda v: v[None, :, None, None]
    y1 = jnp.einsum('bchw,co->bohw', x, wc1, precision=hp) + bc(bc1)
    y1 = jnp.maximum(y1 * bc(s1) + bc(t1), 0.0)
    y2 = jnp.einsum('bchw,co->bohw', y1, wc2, precision=hp) + bc(bc2)
    y2 = jnp.maximum(y2 * bc(s2) + bc(t2), 0.0)
    return y1, y2


# ----------------------------- main -----------------------------------------

if __name__ == "__main__":
    B, CH, CH1, CH2, T = 2, 4, 8, 16, 8

    key = jax.random.PRNGKey(0)
    k_img, k_r1, k_r2, k_c = jax.random.split(key, 4)

    # img: (B, ch, 192, 64) -- H=192 / W=64 are fixed by LinearResize(192->62)/(64->19)
    img = jax.random.normal(k_img, (B, CH, H_IN, W_IN), jnp.float32)

    rp1 = make_linear_resize_params(k_r1, H_IN, H_OUT)   # resize1: 192 -> 62
    rp2 = make_linear_resize_params(k_r2, W_IN, W_OUT)   # resize2: 64  -> 19
    cp = make_conv_params(k_c, CH, CH1, CH2)
    kparams = prep_kernel_params(rp1, rp2, cp)

    y1, y2 = resize_img_forward(img, T, kparams, CH1, CH2)
    y1 = jax.block_until_ready(y1)
    y2 = jax.block_until_ready(y2)

    assert y1.shape == (B, CH1, T, W_OUT), y1.shape
    assert y2.shape == (B, CH2, T, W_OUT), y2.shape
    assert bool(jnp.all(jnp.isfinite(y1))) and bool(jnp.all(jnp.isfinite(y2)))

    r1, r2 = reference_forward(img, T, rp1, rp2, cp)
    assert jnp.allclose(y1, r1, atol=1e-1, rtol=1e-1), float(jnp.max(jnp.abs(y1 - r1)))
    assert jnp.allclose(y2, r2, atol=1e-1, rtol=1e-1), float(jnp.max(jnp.abs(y2 - r2)))

    print("KERNEL_OK")
</pallas_src>

<mosaic_0001>
module attributes {stable_mosaic.version = 11 : i64} {
  func.func @kernel(%arg0: i32, %arg1: memref<1x192x256xbf16, #tpu.memory_space<vmem>>, %arg2: memref<186x192xbf16, #tpu.memory_space<vmem>>, %arg3: memref<186x2xf32, #tpu.memory_space<vmem>>, %arg4: memref<186x186xbf16, #tpu.memory_space<vmem>>, %arg5: memref<186x2xf32, #tpu.memory_space<vmem>>, %arg6: memref<62x186xbf16, #tpu.memory_space<vmem>>, %arg7: memref<62x2xf32, #tpu.memory_space<vmem>>, %arg8: memref<64x57xbf16, #tpu.memory_space<vmem>>, %arg9: memref<2x57xf32, #tpu.memory_space<vmem>>, %arg10: memref<57x57xbf16, #tpu.memory_space<vmem>>, %arg11: memref<2x57xf32, #tpu.memory_space<vmem>>, %arg12: memref<57x19xbf16, #tpu.memory_space<vmem>>, %arg13: memref<2x19xf32, #tpu.memory_space<vmem>>, %arg14: memref<4x19x152xf32, #tpu.memory_space<vmem>>, %arg15: memref<1x152xf32, #tpu.memory_space<vmem>>, %arg16: memref<152x304xf32, #tpu.memory_space<vmem>>, %arg17: memref<1x304xf32, #tpu.memory_space<vmem>>, %arg18: memref<1x8x152xf32, #tpu.memory_space<vmem>>, %arg19: memref<1x8x304xf32, #tpu.memory_space<vmem>>) attributes {dimension_semantics = [#tpu.dimension_semantics<parallel>], iteration_bounds = array<i64: 2>, scalar_prefetch = 0 : i64, scratch_operands = 0 : i64, tpu.core_type = #tpu.core_type<tc>, window_params = [{transform_indices = @transform_0, window_bounds = array<i64: 1, 192, 256>}, {pipeline_mode = #tpu.pipeline_mode<synchronous>, transform_indices = @transform_1, window_bounds = array<i64: 186, 192>}, {pipeline_mode = #tpu.pipeline_mode<synchronous>, transform_indices = @transform_2, window_bounds = array<i64: 186, 2>}, {pipeline_mode = #tpu.pipeline_mode<synchronous>, transform_indices = @transform_3, window_bounds = array<i64: 186, 186>}, {pipeline_mode = #tpu.pipeline_mode<synchronous>, transform_indices = @transform_4, window_bounds = array<i64: 186, 2>}, {pipeline_mode = #tpu.pipeline_mode<synchronous>, transform_indices = @transform_5, window_bounds = array<i64: 62, 186>}, {pipeline_mode = #tpu.pipeline_mode<synchronous>, transform_indices = @transform_6, window_bounds = array<i64: 62, 2>}, {pipeline_mode = #tpu.pipeline_mode<synchronous>, transform_indices = @transform_7, window_bounds = array<i64: 64, 57>}, {pipeline_mode = #tpu.pipeline_mode<synchronous>, transform_indices = @transform_8, window_bounds = array<i64: 2, 57>}, {pipeline_mode = #tpu.pipeline_mode<synchronous>, transform_indices = @transform_9, window_bounds = array<i64: 57, 57>}, {pipeline_mode = #tpu.pipeline_mode<synchronous>, transform_indices = @transform_10, window_bounds = array<i64: 2, 57>}, {pipeline_mode = #tpu.pipeline_mode<synchronous>, transform_indices = @transform_11, window_bounds = array<i64: 57, 19>}, {pipeline_mode = #tpu.pipeline_mode<synchronous>, transform_indices = @transform_12, window_bounds = array<i64: 2, 19>}, {pipeline_mode = #tpu.pipeline_mode<synchronous>, transform_indices = @transform_13, window_bounds = array<i64: 4, 19, 152>}, {pipeline_mode = #tpu.pipeline_mode<synchronous>, transform_indices = @transform_14, window_bounds = array<i64: 1, 152>}, {pipeline_mode = #tpu.pipeline_mode<synchronous>, transform_indices = @transform_15, window_bounds = array<i64: 152, 304>}, {pipeline_mode = #tpu.pipeline_mode<synchronous>, transform_indices = @transform_16, window_bounds = array<i64: 1, 304>}, {transform_indices = @transform_17, window_bounds = array<i64: 1, 8, 152>}, {transform_indices = @transform_18, window_bounds = array<i64: 1, 8, 304>}]} {
    %c0 = arith.constant 0 : index
    %c0_0 = arith.constant 0 : index
    %c0_1 = arith.constant 0 : index
    %0 = vector.load %arg1[%c0, %c0_0, %c0_1] : memref<1x192x256xbf16, #tpu.memory_space<vmem>>, vector<1x192x256xbf16>
    %1 = vector.shape_cast %0 : vector<1x192x256xbf16> to vector<192x256xbf16>
    %c0_2 = arith.constant 0 : index
    %c0_3 = arith.constant 0 : index
    %2 = vector.load %arg2[%c0_2, %c0_3] : memref<186x192xbf16, #tpu.memory_space<vmem>>, vector<186x192xbf16>
    %cst = arith.constant dense<0.000000e+00> : vector<186x256xf32>
    %3 = tpu.matmul %2, %1, %cst {dimension_numbers = #tpu.dot_dimension_numbers<[1], [0], [0], [1], [0, 0, 1, 1], [], []>} : vector<186x192xbf16>, vector<192x256xbf16>, vector<186x256xf32> -> vector<186x256xf32>
    %c0_4 = arith.constant 0 : index
    %c0_5 = arith.constant 0 : index
    %4 = vector.load %arg3[%c0_4, %c0_5] : memref<186x2xf32, #tpu.memory_space<vmem>>, vector<186x2xf32>
    %cst_6 = arith.constant dense<0.000000e+00> : vector<256xf32>
    %5 = vector.multi_reduction <add>, %3, %cst_6 [0] : vector<186x256xf32> to vector<256xf32>
    %6 = vector.shape_cast %5 : vector<256xf32> to vector<1x256xf32>
    %cst_7 = arith.constant 0.00537634408 : f32
    %7 = vector.broadcast %cst_7 : f32 to vector<1x256xf32>
    %8 = arith.mulf %6, %7 : vector<1x256xf32>
    %9 = arith.mulf %3, %3 : vector<186x256xf32>
    %cst_8 = arith.constant dense<0.000000e+00> : vector<256xf32>
    %10 = vector.multi_reduction <add>, %9, %cst_8 [0] : vector<186x256xf32> to vector<256xf32>
    %11 = vector.shape_cast %10 : vector<256xf32> to vector<1x256xf32>
    %cst_9 = arith.constant 0.00537634408 : f32
    %12 = vector.broadcast %cst_9 : f32 to vector<1x256xf32>
    %13 = arith.mulf %11, %12 : vector<1x256xf32>
    %14 = arith.mulf %8, %8 : vector<1x256xf32>
    %15 = arith.subf %13, %14 : vector<1x256xf32>
    %16 = vector.broadcast %8 : vector<1x256xf32> to vector<186x256xf32>
    %17 = arith.subf %3, %16 : vector<186x256xf32>
    %cst_10 = arith.constant 9.99999974E-6 : f32
    %18 = vector.broadcast %cst_10 : f32 to vector<1x256xf32>
    %19 = arith.addf %15, %18 : vector<1x256xf32>
    %20 = math.rsqrt %19 : vector<1x256xf32>
    %21 = vector.broadcast %20 : vector<1x256xf32> to vector<186x256xf32>
    %22 = arith.mulf %17, %21 : vector<186x256xf32>
    %23 = vector.extract_strided_slice %4 {offsets = [0, 0], sizes = [186, 1], strides = [1, 1]} : vector<186x2xf32> to vector<186x1xf32>
    %24 = vector.broadcast %23 : vector<186x1xf32> to vector<186x256xf32>
    %25 = arith.mulf %22, %24 : vector<186x256xf32>
    %26 = vector.extract_strided_slice %4 {offsets = [0, 1], sizes = [186, 1], strides = [1, 1]} : vector<186x2xf32> to vector<186x1xf32>
    %27 = vector.broadcast %26 : vector<186x1xf32> to vector<186x256xf32>
    %28 = arith.addf %25, %27 : vector<186x256xf32>
    %c0_11 = arith.constant 0 : index
    %c0_12 = arith.constant 0 : index
    %29 = vector.load %arg4[%c0_11, %c0_12] : memref<186x186xbf16, #tpu.memory_space<vmem>>, vector<186x186xbf16>
    %30 = arith.truncf %28 : vector<186x256xf32> to vector<186x256xbf16>
    %cst_13 = arith.constant dense<0.000000e+00> : vector<186x256xf32>
    %31 = tpu.matmul %29, %30, %cst_13 {dimension_numbers = #tpu.dot_dimension_numbers<[1], [0], [0], [1], [0, 0, 1, 1], [], []>} : vector<186x186xbf16>, vector<186x256xbf16>, vector<186x256xf32> -> vector<186x256xf32>
    %c0_14 = arith.constant 0 : index
    %c0_15 = arith.constant 0 : index
    %32 = vector.load %arg5[%c0_14, %c0_15] : memref<186x2xf32, #tpu.memory_space<vmem>>, vector<186x2xf32>
    %cst_16 = arith.constant dense<0.000000e+00> : vector<256xf32>
    %33 = vector.multi_reduction <add>, %31, %cst_16 [0] : vector<186x256xf32> to vector<256xf32>
    %34 = vector.shape_cast %33 : vector<256xf32> to vector<1x256xf32>
    %cst_17 = arith.constant 0.00537634408 : f32
    %35 = vector.broadcast %cst_17 : f32 to vector<1x256xf32>
    %36 = arith.mulf %34, %35 : vector<1x256xf32>
    %37 = arith.mulf %31, %31 : vector<186x256xf32>
    %cst_18 = arith.constant dense<0.000000e+00> : vector<256xf32>
    %38 = vector.multi_reduction <add>, %37, %cst_18 [0] : vector<186x256xf32> to vector<256xf32>
    %39 = vector.shape_cast %38 : vector<256xf32> to vector<1x256xf32>
    %cst_19 = arith.constant 0.00537634408 : f32
    %40 = vector.broadcast %cst_19 : f32 to vector<1x256xf32>
    %41 = arith.mulf %39, %40 : vector<1x256xf32>
    %42 = arith.mulf %36, %36 : vector<1x256xf32>
    %43 = arith.subf %41, %42 : vector<1x256xf32>
    %44 = vector.broadcast %36 : vector<1x256xf32> to vector<186x256xf32>
    %45 = arith.subf %31, %44 : vector<186x256xf32>
    %cst_20 = arith.constant 9.99999974E-6 : f32
    %46 = vector.broadcast %cst_20 : f32 to vector<1x256xf32>
    %47 = arith.addf %43, %46 : vector<1x256xf32>
    %48 = math.rsqrt %47 : vector<1x256xf32>
    %49 = vector.broadcast %48 : vector<1x256xf32> to vector<186x256xf32>
    %50 = arith.mulf %45, %49 : vector<186x256xf32>
    %51 = vector.extract_strided_slice %32 {offsets = [0, 0], sizes = [186, 1], strides = [1, 1]} : vector<186x2xf32> to vector<186x1xf32>
    %52 = vector.broadcast %51 : vector<186x1xf32> to vector<186x256xf32>
    %53 = arith.mulf %50, %52 : vector<186x256xf32>
    %54 = vector.extract_strided_slice %32 {offsets = [0, 1], sizes = [186, 1], strides = [1, 1]} : vector<186x2xf32> to vector<186x1xf32>
    %55 = vector.broadcast %54 : vector<186x1xf32> to vector<186x256xf32>
    %56 = arith.addf %53, %55 : vector<186x256xf32>
    %c0_21 = arith.constant 0 : index
    %c0_22 = arith.constant 0 : index
    %57 = vector.load %arg6[%c0_21, %c0_22] : memref<62x186xbf16, #tpu.memory_space<vmem>>, vector<62x186xbf16>
    %58 = arith.truncf %56 : vector<186x256xf32> to vector<186x256xbf16>
    %cst_23 = arith.constant dense<0.000000e+00> : vector<62x256xf32>
    %59 = tpu.matmul %57, %58, %cst_23 {dimension_numbers = #tpu.dot_dimension_numbers<[1], [0], [0], [1], [0, 0, 1, 1], [], []>} : vector<62x186xbf16>, vector<186x256xbf16>, vector<62x256xf32> -> vector<62x256xf32>
    %c0_24 = arith.constant 0 : index
    %c0_25 = arith.constant 0 : index
    %60 = vector.load %arg7[%c0_24, %c0_25] : memref<62x2xf32, #tpu.memory_space<vmem>>, vector<62x2xf32>
    %cst_26 = arith.constant dense<0.000000e+00> : vector<256xf32>
    %61 = vector.multi_reduction <add>, %59, %cst_26 [0] : vector<62x256xf32> to vector<256xf32>
    %62 = vector.shape_cast %61 : vector<256xf32> to vector<1x256xf32>
    %cst_27 = arith.constant 0.0161290318 : f32
    %63 = vector.broadcast %cst_27 : f32 to vector<1x256xf32>
    %64 = arith.mulf %62, %63 : vector<1x256xf32>
    %65 = arith.mulf %59, %59 : vector<62x256xf32>
    %cst_28 = arith.constant dense<0.000000e+00> : vector<256xf32>
    %66 = vector.multi_reduction <add>, %65, %cst_28 [0] : vector<62x256xf32> to vector<256xf32>
    %67 = vector.shape_cast %66 : vector<256xf32> to vector<1x256xf32>
    %cst_29 = arith.constant 0.0161290318 : f32
    %68 = vector.broadcast %cst_29 : f32 to vector<1x256xf32>
    %69 = arith.mulf %67, %68 : vector<1x256xf32>
    %70 = arith.mulf %64, %64 : vector<1x256xf32>
    %71 = arith.subf %69, %70 : vector<1x256xf32>
    %72 = vector.broadcast %64 : vector<1x256xf32> to vector<62x256xf32>
    %73 = arith.subf %59, %72 : vector<62x256xf32>
    %cst_30 = arith.constant 9.99999974E-6 : f32
    %74 = vector.broadcast %cst_30 : f32 to vector<1x256xf32>
    %75 = arith.addf %71, %74 : vector<1x256xf32>
    %76 = math.rsqrt %75 : vector<1x256xf32>
    %77 = vector.broadcast %76 : vector<1x256xf32> to vector<62x256xf32>
    %78 = arith.mulf %73, %77 : vector<62x256xf32>
    %79 = vector.extract_strided_slice %60 {offsets = [0, 0], sizes = [62, 1], strides = [1, 1]} : vector<62x2xf32> to vector<62x1xf32>
    %80 = vector.broadcast %79 : vector<62x1xf32> to vector<62x256xf32>
    %81 = arith.mulf %78, %80 : vector<62x256xf32>
    %82 = vector.extract_strided_slice %60 {offsets = [0, 1], sizes = [62, 1], strides = [1, 1]} : vector<62x2xf32> to vector<62x1xf32>
    %83 = vector.broadcast %82 : vector<62x1xf32> to vector<62x256xf32>
    %84 = arith.addf %81, %83 : vector<62x256xf32>
    %85 = vector.extract_strided_slice %84 {offsets = [54, 0], sizes = [8, 256], strides = [1, 1]} : vector<62x256xf32> to vector<8x256xf32>
    %c0_31 = arith.constant 0 : index
    %c0_32 = arith.constant 0 : index
    %86 = vector.load %arg8[%c0_31, %c0_32] : memref<64x57xbf16, #tpu.memory_space<vmem>>, vector<64x57xbf16>
    %c0_33 = arith.constant 0 : index
    %c0_34 = arith.constant 0 : index
    %87 = vector.load %arg10[%c0_33, %c0_34] : memref<57x57xbf16, #tpu.memory_space<vmem>>, vector<57x57xbf16>
    %c0_35 = arith.constant 0 : index
    %c0_36 = arith.constant 0 : index
    %88 = vector.load %arg12[%c0_35, %c0_36] : memref<57x19xbf16, #tpu.memory_space<vmem>>, vector<57x19xbf16>
    %c0_37 = arith.constant 0 : index
    %c0_38 = arith.constant 0 : index
    %89 = vector.load %arg9[%c0_37, %c0_38] : memref<2x57xf32, #tpu.memory_space<vmem>>, vector<2x57xf32>
    %c0_39 = arith.constant 0 : index
    %c0_40 = arith.constant 0 : index
    %90 = vector.load %arg11[%c0_39, %c0_40] : memref<2x57xf32, #tpu.memory_space<vmem>>, vector<2x57xf32>
    %c0_41 = arith.constant 0 : index
    %c0_42 = arith.constant 0 : index
    %91 = vector.load %arg13[%c0_41, %c0_42] : memref<2x19xf32, #tpu.memory_space<vmem>>, vector<2x19xf32>
    %c0_43 = arith.constant 0 : index
    %c0_44 = arith.constant 0 : index
    %92 = vector.load %arg15[%c0_43, %c0_44] : memref<1x152xf32, #tpu.memory_space<vmem>>, vector<1x152xf32>
    %93 = vector.extract_strided_slice %85 {offsets = [0, 0], sizes = [8, 64], strides = [1, 1]} : vector<8x256xf32> to vector<8x64xf32>
    %94 = arith.truncf %93 : vector<8x64xf32> to vector<8x64xbf16>
    %cst_45 = arith.constant dense<0.000000e+00> : vector<8x57xf32>
    %95 = tpu.matmul %94, %86, %cst_45 {dimension_numbers = #tpu.dot_dimension_numbers<[1], [0], [0], [1], [0, 0, 1, 1], [], []>} : vector<8x64xbf16>, vector<64x57xbf16>, vector<8x57xf32> -> vector<8x57xf32>
    %cst_46 = arith.constant dense<0.000000e+00> : vector<8xf32>
    %96 = vector.multi_reduction <add>, %95, %cst_46 [1] : vector<8x57xf32> to vector<8xf32>
    %97 = vector.shape_cast %96 : vector<8xf32> to vector<8x1xf32>
    %cst_47 = arith.constant 0.0175438598 : f32
    %98 = vector.broadcast %cst_47 : f32 to vector<8x1xf32>
    %99 = arith.mulf %97, %98 : vector<8x1xf32>
    %100 = arith.mulf %95, %95 : vector<8x57xf32>
    %cst_48 = arith.constant dense<0.000000e+00> : vector<8xf32>
    %101 = vector.multi_reduction <add>, %100, %cst_48 [1] : vector<8x57xf32> to vector<8xf32>
    %102 = vector.shape_cast %101 : vector<8xf32> to vector<8x1xf32>
    %cst_49 = arith.constant 0.0175438598 : f32
    %103 = vector.broadcast %cst_49 : f32 to vector<8x1xf32>
    %104 = arith.mulf %102, %103 : vector<8x1xf32>
    %105 = arith.mulf %99, %99 : vector<8x1xf32>
    %106 = arith.subf %104, %105 : vector<8x1xf32>
    %107 = vector.broadcast %99 : vector<8x1xf32> to vector<8x57xf32>
    %108 = arith.subf %95, %107 : vector<8x57xf32>
    %cst_50 = arith.constant 9.99999974E-6 : f32
    %109 = vector.broadcast %cst_50 : f32 to vector<8x1xf32>
    %110 = arith.addf %106, %109 : vector<8x1xf32>
    %111 = math.rsqrt %110 : vector<8x1xf32>
    %112 = vector.broadcast %111 : vector<8x1xf32> to vector<8x57xf32>
    %113 = arith.mulf %108, %112 : vector<8x57xf32>
    %114 = vector.extract_strided_slice %89 {offsets = [0, 0], sizes = [1, 57], strides = [1, 1]} : vector<2x57xf32> to vector<1x57xf32>
    %115 = vector.broadcast %114 : vector<1x57xf32> to vector<8x57xf32>
    %116 = arith.mulf %113, %115 : vector<8x57xf32>
    %117 = vector.extract_strided_slice %89 {offsets = [1, 0], sizes = [1, 57], strides = [1, 1]} : vector<2x57xf32> to vector<1x57xf32>
    %118 = vector.broadcast %117 : vector<1x57xf32> to vector<8x57xf32>
    %119 = arith.addf %116, %118 : vector<8x57xf32>
    %120 = arith.truncf %119 : vector<8x57xf32> to vector<8x57xbf16>
    %cst_51 = arith.constant dense<0.000000e+00> : vector<8x57xf32>
    %121 = tpu.matmul %120, %87, %cst_51 {dimension_numbers = #tpu.dot_dimension_numbers<[1], [0], [0], [1], [0, 0, 1, 1], [], []>} : vector<8x57xbf16>, vector<57x57xbf16>, vector<8x57xf32> -> vector<8x57xf32>
    %cst_52 = arith.constant dense<0.000000e+00> : vector<8xf32>
    %122 = vector.multi_reduction <add>, %121, %cst_52 [1] : vector<8x57xf32> to vector<8xf32>
    %123 = vector.shape_cast %122 : vector<8xf32> to vector<8x1xf32>
    %cst_53 = arith.constant 0.0175438598 : f32
    %124 = vector.broadcast %cst_53 : f32 to vector<8x1xf32>
    %125 = arith.mulf %123, %124 : vector<8x1xf32>
    %126 = arith.mulf %121, %121 : vector<8x57xf32>
    %cst_54 = arith.constant dense<0.000000e+00> : vector<8xf32>
    %127 = vector.multi_reduction <add>, %126, %cst_54 [1] : vector<8x57xf32> to vector<8xf32>
    %128 = vector.shape_cast %127 : vector<8xf32> to vector<8x1xf32>
    %cst_55 = arith.constant 0.0175438598 : f32
    %129 = vector.broadcast %cst_55 : f32 to vector<8x1xf32>
    %130 = arith.mulf %128, %129 : vector<8x1xf32>
    %131 = arith.mulf %125, %125 : vector<8x1xf32>
    %132 = arith.subf %130, %131 : vector<8x1xf32>
    %133 = vector.broadcast %125 : vector<8x1xf32> to vector<8x57xf32>
    %134 = arith.subf %121, %133 : vector<8x57xf32>
    %cst_56 = arith.constant 9.99999974E-6 : f32
    %135 = vector.broadcast %cst_56 : f32 to vector<8x1xf32>
    %136 = arith.addf %132, %135 : vector<8x1xf32>
    %137 = math.rsqrt %136 : vector<8x1xf32>
    %138 = vector.broadcast %137 : vector<8x1xf32> to vector<8x57xf32>
    %139 = arith.mulf %134, %138 : vector<8x57xf32>
    %140 = vector.extract_strided_slice %90 {offsets = [0, 0], sizes = [1, 57], strides = [1, 1]} : vector<2x57xf32> to vector<1x57xf32>
    %141 = vector.broadcast %140 : vector<1x57xf32> to vector<8x57xf32>
    %142 = arith.mulf %139, %141 : vector<8x57xf32>
    %143 = vector.extract_strided_slice %90 {offsets = [1, 0], sizes = [1, 57], strides = [1, 1]} : vector<2x57xf32> to vector<1x57xf32>
    %144 = vector.broadcast %143 : vector<1x57xf32> to vector<8x57xf32>
    %145 = arith.addf %142, %144 : vector<8x57xf32>
    %146 = arith.truncf %145 : vector<8x57xf32> to vector<8x57xbf16>
    %cst_57 = arith.constant dense<0.000000e+00> : vector<8x19xf32>
    %147 = tpu.matmul %146, %88, %cst_57 {dimension_numbers = #tpu.dot_dimension_numbers<[1], [0], [0], [1], [0, 0, 1, 1], [], []>} : vector<8x57xbf16>, vector<57x19xbf16>, vector<8x19xf32> -> vector<8x19xf32>
    %cst_58 = arith.constant dense<0.000000e+00> : vector<8xf32>
    %148 = vector.multi_reduction <add>, %147, %cst_58 [1] : vector<8x19xf32> to vector<8xf32>
    %149 = vector.shape_cast %148 : vector<8xf32> to vector<8x1xf32>
    %cst_59 = arith.constant 0.0526315793 : f32
    %150 = vector.broadcast %cst_59 : f32 to vector<8x1xf32>
    %151 = arith.mulf %149, %150 : vector<8x1xf32>
    %152 = arith.mulf %147, %147 : vector<8x19xf32>
    %cst_60 = arith.constant dense<0.000000e+00> : vector<8xf32>
    %153 = vector.multi_reduction <add>, %152, %cst_60 [1] : vector<8x19xf32> to vector<8xf32>
    %154 = vector.shape_cast %153 : vector<8xf32> to vector<8x1xf32>
    %cst_61 = arith.constant 0.0526315793 : f32
    %155 = vector.broadcast %cst_61 : f32 to vector<8x1xf32>
    %156 = arith.mulf %154, %155 : vector<8x1xf32>
    %157 = arith.mulf %151, %151 : vector<8x1xf32>
    %158 = arith.subf %156, %157 : vector<8x1xf32>
    %159 = vector.broadcast %151 : vector<8x1xf32> to vector<8x19xf32>
    %160 = arith.subf %147, %159 : vector<8x19xf32>
    %cst_62 = arith.constant 9.99999974E-6 : f32
    %161 = vector.broadcast %cst_62 : f32 to vector<8x1xf32>
    %162 = arith.addf %158, %161 : vector<8x1xf32>
    %163 = math.rsqrt %162 : vector<8x1xf32>
    %164 = vector.broadcast %163 : vector<8x1xf32> to vector<8x19xf32>
    %165 = arith.mulf %160, %164 : vector<8x19xf32>
    %166 = vector.extract_strided_slice %91 {offsets = [0, 0], sizes = [1, 19], strides = [1, 1]} : vector<2x19xf32> to vector<1x19xf32>
    %167 = vector.broadcast %166 : vector<1x19xf32> to vector<8x19xf32>
    %168 = arith.mulf %165, %167 : vector<8x19xf32>
    %169 = vector.extract_strided_slice %91 {offsets = [1, 0], sizes = [1, 19], strides = [1, 1]} : vector<2x19xf32> to vector<1x19xf32>
    %170 = vector.broadcast %169 : vector<1x19xf32> to vector<8x19xf32>
    %171 = arith.addf %168, %170 : vector<8x19xf32>
    %c0_63 = arith.constant 0 : index
    %c0_64 = arith.constant 0 : index
    %c0_65 = arith.constant 0 : index
    %172 = vector.load %arg14[%c0_63, %c0_64, %c0_65] : memref<4x19x152xf32, #tpu.memory_space<vmem>>, vector<1x19x152xf32>
    %173 = vector.shape_cast %172 : vector<1x19x152xf32> to vector<19x152xf32>
    %cst_66 = arith.constant dense<0.000000e+00> : vector<8x152xf32>
    %174 = tpu.matmul %171, %173, %cst_66 {dimension_numbers = #tpu.dot_dimension_numbers<[1], [0], [0], [1], [0, 0, 1, 1], [], []>} : vector<8x19xf32>, vector<19x152xf32>, vector<8x152xf32> -> vector<8x152xf32>
    %175 = vector.broadcast %92 : vector<1x152xf32> to vector<8x152xf32>
    %176 = arith.addf %175, %174 : vector<8x152xf32>
    %177 = vector.extract_strided_slice %85 {offsets = [0, 64], sizes = [8, 64], strides = [1, 1]} : vector<8x256xf32> to vector<8x64xf32>
    %178 = arith.truncf %177 : vector<8x64xf32> to vector<8x64xbf16>
    %cst_67 = arith.constant dense<0.000000e+00> : vector<8x57xf32>
    %179 = tpu.matmul %178, %86, %cst_67 {dimension_numbers = #tpu.dot_dimension_numbers<[1], [0], [0], [1], [0, 0, 1, 1], [], []>} : vector<8x64xbf16>, vector<64x57xbf16>, vector<8x57xf32> -> vector<8x57xf32>
    %cst_68 = arith.constant dense<0.000000e+00> : vector<8xf32>
    %180 = vector.multi_reduction <add>, %179, %cst_68 [1] : vector<8x57xf32> to vector<8xf32>
    %181 = vector.shape_cast %180 : vector<8xf32> to vector<8x1xf32>
    %cst_69 = arith.constant 0.0175438598 : f32
    %182 = vector.broadcast %cst_69 : f32 to vector<8x1xf32>
    %183 = arith.mulf %181, %182 : vector<8x1xf32>
    %184 = arith.mulf %179, %179 : vector<8x57xf32>
    %cst_70 = arith.constant dense<0.000000e+00> : vector<8xf32>
    %185 = vector.multi_reduction <add>, %184, %cst_70 [1] : vector<8x57xf32> to vector<8xf32>
    %186 = vector.shape_cast %185 : vector<8xf32> to vector<8x1xf32>
    %cst_71 = arith.constant 0.0175438598 : f32
    %187 = vector.broadcast %cst_71 : f32 to vector<8x1xf32>
    %188 = arith.mulf %186, %187 : vector<8x1xf32>
    %189 = arith.mulf %183, %183 : vector<8x1xf32>
    %190 = arith.subf %188, %189 : vector<8x1xf32>
    %191 = vector.broadcast %183 : vector<8x1xf32> to vector<8x57xf32>
    %192 = arith.subf %179, %191 : vector<8x57xf32>
    %cst_72 = arith.constant 9.99999974E-6 : f32
    %193 = vector.broadcast %cst_72 : f32 to vector<8x1xf32>
    %194 = arith.addf %190, %193 : vector<8x1xf32>
    %195 = math.rsqrt %194 : vector<8x1xf32>
    %196 = vector.broadcast %195 : vector<8x1xf32> to vector<8x57xf32>
    %197 = arith.mulf %192, %196 : vector<8x57xf32>
    %198 = vector.extract_strided_slice %89 {offsets = [0, 0], sizes = [1, 57], strides = [1, 1]} : vector<2x57xf32> to vector<1x57xf32>
    %199 = vector.broadcast %198 : vector<1x57xf32> to vector<8x57xf32>
    %200 = arith.mulf %197, %199 : vector<8x57xf32>
    %201 = vector.extract_strided_slice %89 {offsets = [1, 0], sizes = [1, 57], strides = [1, 1]} : vector<2x57xf32> to vector<1x57xf32>
    %202 = vector.broadcast %201 : vector<1x57xf32> to vector<8x57xf32>
    %203 = arith.addf %200, %202 : vector<8x57xf32>
    %204 = arith.truncf %203 : vector<8x57xf32> to vector<8x57xbf16>
    %cst_73 = arith.constant dense<0.000000e+00> : vector<8x57xf32>
    %205 = tpu.matmul %204, %87, %cst_73 {dimension_numbers = #tpu.dot_dimension_numbers<[1], [0], [0], [1], [0, 0, 1, 1], [], []>} : vector<8x57xbf16>, vector<57x57xbf16>, vector<8x57xf32> -> vector<8x57xf32>
    %cst_74 = arith.constant dense<0.000000e+00> : vector<8xf32>
    %206 = vector.multi_reduction <add>, %205, %cst_74 [1] : vector<8x57xf32> to vector<8xf32>
    %207 = vector.shape_cast %206 : vector<8xf32> to vector<8x1xf32>
    %cst_75 = arith.constant 0.0175438598 : f32
    %208 = vector.broadcast %cst_75 : f32 to vector<8x1xf32>
    %209 = arith.mulf %207, %208 : vector<8x1xf32>
    %210 = arith.mulf %205, %205 : vector<8x57xf32>
    %cst_76 = arith.constant dense<0.000000e+00> : vector<8xf32>
    %211 = vector.multi_reduction <add>, %210, %cst_76 [1] : vector<8x57xf32> to vector<8xf32>
    %212 = vector.shape_cast %211 : vector<8xf32> to vector<8x1xf32>
    %cst_77 = arith.constant 0.0175438598 : f32
    %213 = vector.broadcast %cst_77 : f32 to vector<8x1xf32>
    %214 = arith.mulf %212, %213 : vector<8x1xf32>
    %215 = arith.mulf %209, %209 : vector<8x1xf32>
    %216 = arith.subf %214, %215 : vector<8x1xf32>
    %217 = vector.broadcast %209 : vector<8x1xf32> to vector<8x57xf32>
    %218 = arith.subf %205, %217 : vector<8x57xf32>
    %cst_78 = arith.constant 9.99999974E-6 : f32
    %219 = vector.broadcast %cst_78 : f32 to vector<8x1xf32>
    %220 = arith.addf %216, %219 : vector<8x1xf32>
    %221 = math.rsqrt %220 : vector<8x1xf32>
    %222 = vector.broadcast %221 : vector<8x1xf32> to vector<8x57xf32>
    %223 = arith.mulf %218, %222 : vector<8x57xf32>
    %224 = vector.extract_strided_slice %90 {offsets = [0, 0], sizes = [1, 57], strides = [1, 1]} : vector<2x57xf32> to vector<1x57xf32>
    %225 = vector.broadcast %224 : vector<1x57xf32> to vector<8x57xf32>
    %226 = arith.mulf %223, %225 : vector<8x57xf32>
    %227 = vector.extract_strided_slice %90 {offsets = [1, 0], sizes = [1, 57], strides = [1, 1]} : vector<2x57xf32> to vector<1x57xf32>
    %228 = vector.broadcast %227 : vector<1x57xf32> to vector<8x57xf32>
    %229 = arith.addf %226, %228 : vector<8x57xf32>
    %230 = arith.truncf %229 : vector<8x57xf32> to vector<8x57xbf16>
    %cst_79 = arith.constant dense<0.000000e+00> : vector<8x19xf32>
    %231 = tpu.matmul %230, %88, %cst_79 {dimension_numbers = #tpu.dot_dimension_numbers<[1], [0], [0], [1], [0, 0, 1, 1], [], []>} : vector<8x57xbf16>, vector<57x19xbf16>, vector<8x19xf32> -> vector<8x19xf32>
    %cst_80 = arith.constant dense<0.000000e+00> : vector<8xf32>
    %232 = vector.multi_reduction <add>, %231, %cst_80 [1] : vector<8x19xf32> to vector<8xf32>
    %233 = vector.shape_cast %232 : vector<8xf32> to vector<8x1xf32>
    %cst_81 = arith.constant 0.0526315793 : f32
    %234 = vector.broadcast %cst_81 : f32 to vector<8x1xf32>
    %235 = arith.mulf %233, %234 : vector<8x1xf32>
    %236 = arith.mulf %231, %231 : vector<8x19xf32>
    %cst_82 = arith.constant dense<0.000000e+00> : vector<8xf32>
    %237 = vector.multi_reduction <add>, %236, %cst_82 [1] : vector<8x19xf32> to vector<8xf32>
    %238 = vector.shape_cast %237 : vector<8xf32> to vector<8x1xf32>
    %cst_83 = arith.constant 0.0526315793 : f32
    %239 = vector.broadcast %cst_83 : f32 to vector<8x1xf32>
    %240 = arith.mulf %238, %239 : vector<8x1xf32>
    %241 = arith.mulf %235, %235 : vector<8x1xf32>
    %242 = arith.subf %240, %241 : vector<8x1xf32>
    %243 = vector.broadcast %235 : vector<8x1xf32> to vector<8x19xf32>
    %244 = arith.subf %231, %243 : vector<8x19xf32>
    %cst_84 = arith.constant 9.99999974E-6 : f32
    %245 = vector.broadcast %cst_84 : f32 to vector<8x1xf32>
    %246 = arith.addf %242, %245 : vector<8x1xf32>
    %247 = math.rsqrt %246 : vector<8x1xf32>
    %248 = vector.broadcast %247 : vector<8x1xf32> to vector<8x19xf32>
    %249 = arith.mulf %244, %248 : vector<8x19xf32>
    %250 = vector.extract_strided_slice %91 {offsets = [0, 0], sizes = [1, 19], strides = [1, 1]} : vector<2x19xf32> to vector<1x19xf32>
    %251 = vector.broadcast %250 : vector<1x19xf32> to vector<8x19xf32>
    %252 = arith.mulf %249, %251 : vector<8x19xf32>
    %253 = vector.extract_strided_slice %91 {offsets = [1, 0], sizes = [1, 19], strides = [1, 1]} : vector<2x19xf32> to vector<1x19xf32>
    %254 = vector.broadcast %253 : vector<1x19xf32> to vector<8x19xf32>
    %255 = arith.addf %252, %254 : vector<8x19xf32>
    %c1 = arith.constant 1 : index
    %c0_85 = arith.constant 0 : index
    %c0_86 = arith.constant 0 : index
    %256 = vector.load %arg14[%c1, %c0_85, %c0_86] : memref<4x19x152xf32, #tpu.memory_space<vmem>>, vector<1x19x152xf32>
    %257 = vector.shape_cast %256 : vector<1x19x152xf32> to vector<19x152xf32>
    %cst_87 = arith.constant dense<0.000000e+00> : vector<8x152xf32>
    %258 = tpu.matmul %255, %257, %cst_87 {dimension_numbers = #tpu.dot_dimension_numbers<[1], [0], [0], [1], [0, 0, 1, 1], [], []>} : vector<8x19xf32>, vector<19x152xf32>, vector<8x152xf32> -> vector<8x152xf32>
    %259 = arith.addf %176, %258 : vector<8x152xf32>
    %260 = vector.extract_strided_slice %85 {offsets = [0, 128], sizes = [8, 64], strides = [1, 1]} : vector<8x256xf32> to vector<8x64xf32>
    %261 = arith.truncf %260 : vector<8x64xf32> to vector<8x64xbf16>
    %cst_88 = arith.constant dense<0.000000e+00> : vector<8x57xf32>
    %262 = tpu.matmul %261, %86, %cst_88 {dimension_numbers = #tpu.dot_dimension_numbers<[1], [0], [0], [1], [0, 0, 1, 1], [], []>} : vector<8x64xbf16>, vector<64x57xbf16>, vector<8x57xf32> -> vector<8x57xf32>
    %cst_89 = arith.constant dense<0.000000e+00> : vector<8xf32>
    %263 = vector.multi_reduction <add>, %262, %cst_89 [1] : vector<8x57xf32> to vector<8xf32>
    %264 = vector.shape_cast %263 : vector<8xf32> to vector<8x1xf32>
    %cst_90 = arith.constant 0.0175438598 : f32
    %265 = vector.broadcast %cst_90 : f32 to vector<8x1xf32>
    %266 = arith.mulf %264, %265 : vector<8x1xf32>
    %267 = arith.mulf %262, %262 : vector<8x57xf32>
    %cst_91 = arith.constant dense<0.000000e+00> : vector<8xf32>
    %268 = vector.multi_reduction <add>, %267, %cst_91 [1] : vector<8x57xf32> to vector<8xf32>
    %269 = vector.shape_cast %268 : vector<8xf32> to vector<8x1xf32>
    %cst_92 = arith.constant 0.0175438598 : f32
    %270 = vector.broadcast %cst_92 : f32 to vector<8x1xf32>
    %271 = arith.mulf %269, %270 : vector<8x1xf32>
    %272 = arith.mulf %266, %266 : vector<8x1xf32>
    %273 = arith.subf %271, %272 : vector<8x1xf32>
    %274 = vector.broadcast %266 : vector<8x1xf32> to vector<8x57xf32>
    %275 = arith.subf %262, %274 : vector<8x57xf32>
    %cst_93 = arith.constant 9.99999974E-6 : f32
    %276 = vector.broadcast %cst_93 : f32 to vector<8x1xf32>
    %277 = arith.addf %273, %276 : vector<8x1xf32>
    %278 = math.rsqrt %277 : vector<8x1xf32>
    %279 = vector.broadcast %278 : vector<8x1xf32> to vector<8x57xf32>
    %280 = arith.mulf %275, %279 : vector<8x57xf32>
    %281 = vector.extract_strided_slice %89 {offsets = [0, 0], sizes = [1, 57], strides = [1, 1]} : vector<2x57xf32> to vector<1x57xf32>
    %282 = vector.broadcast %281 : vector<1x57xf32> to vector<8x57xf32>
    %283 = arith.mulf %280, %282 : vector<8x57xf32>
    %284 = vector.extract_strided_slice %89 {offsets = [1, 0], sizes = [1, 57], strides = [1, 1]} : vector<2x57xf32> to vector<1x57xf32>
    %285 = vector.broadcast %284 : vector<1x57xf32> to vector<8x57xf32>
    %286 = arith.addf %283, %285 : vector<8x57xf32>
    %287 = arith.truncf %286 : vector<8x57xf32> to vector<8x57xbf16>
    %cst_94 = arith.constant dense<0.000000e+00> : vector<8x57xf32>
    %288 = tpu.matmul %287, %87, %cst_94 {dimension_numbers = #tpu.dot_dimension_numbers<[1], [0], [0], [1], [0, 0, 1, 1], [], []>} : vector<8x57xbf16>, vector<57x57xbf16>, vector<8x57xf32> -> vector<8x57xf32>
    %cst_95 = arith.constant dense<0.000000e+00> : vector<8xf32>
    %289 = vector.multi_reduction <add>, %288, %cst_95 [1] : vector<8x57xf32> to vector<8xf32>
    %290 = vector.shape_cast %289 : vector<8xf32> to vector<8x1xf32>
    %cst_96 = arith.constant 0.0175438598 : f32
    %291 = vector.broadcast %cst_96 : f32 to vector<8x1xf32>
    %292 = arith.mulf %290, %291 : vector<8x1xf32>
    %293 = arith.mulf %288, %288 : vector<8x57xf32>
    %cst_97 = arith.constant dense<0.000000e+00> : vector<8xf32>
    %294 = vector.multi_reduction <add>, %293, %cst_97 [1] : vector<8x57xf32> to vector<8xf32>
    %295 = vector.shape_cast %294 : vector<8xf32> to vector<8x1xf32>
    %cst_98 = arith.constant 0.0175438598 : f32
    %296 = vector.broadcast %cst_98 : f32 to vector<8x1xf32>
    %297 = arith.mulf %295, %296 : vector<8x1xf32>
    %298 = arith.mulf %292, %292 : vector<8x1xf32>
    %299 = arith.subf %297, %298 : vector<8x1xf32>
    %300 = vector.broadcast %292 : vector<8x1xf32> to vector<8x57xf32>
    %301 = arith.subf %288, %300 : vector<8x57xf32>
    %cst_99 = arith.constant 9.99999974E-6 : f32
    %302 = vector.broadcast %cst_99 : f32 to vector<8x1xf32>
    %303 = arith.addf %299, %302 : vector<8x1xf32>
    %304 = math.rsqrt %303 : vector<8x1xf32>
    %305 = vector.broadcast %304 : vector<8x1xf32> to vector<8x57xf32>
    %306 = arith.mulf %301, %305 : vector<8x57xf32>
    %307 = vector.extract_strided_slice %90 {offsets = [0, 0], sizes = [1, 57], strides = [1, 1]} : vector<2x57xf32> to vector<1x57xf32>
    %308 = vector.broadcast %307 : vector<1x57xf32> to vector<8x57xf32>
    %309 = arith.mulf %306, %308 : vector<8x57xf32>
    %310 = vector.extract_strided_slice %90 {offsets = [1, 0], sizes = [1, 57], strides = [1, 1]} : vector<2x57xf32> to vector<1x57xf32>
    %311 = vector.broadcast %310 : vector<1x57xf32> to vector<8x57xf32>
    %312 = arith.addf %309, %311 : vector<8x57xf32>
    %313 = arith.truncf %312 : vector<8x57xf32> to vector<8x57xbf16>
    %cst_100 = arith.constant dense<0.000000e+00> : vector<8x19xf32>
    %314 = tpu.matmul %313, %88, %cst_100 {dimension_numbers = #tpu.dot_dimension_numbers<[1], [0], [0], [1], [0, 0, 1, 1], [], []>} : vector<8x57xbf16>, vector<57x19xbf16>, vector<8x19xf32> -> vector<8x19xf32>
    %cst_101 = arith.constant dense<0.000000e+00> : vector<8xf32>
    %315 = vector.multi_reduction <add>, %314, %cst_101 [1] : vector<8x19xf32> to vector<8xf32>
    %316 = vector.shape_cast %315 : vector<8xf32> to vector<8x1xf32>
    %cst_102 = arith.constant 0.0526315793 : f32
    %317 = vector.broadcast %cst_102 : f32 to vector<8x1xf32>
    %318 = arith.mulf %316, %317 : vector<8x1xf32>
    %319 = arith.mulf %314, %314 : vector<8x19xf32>
    %cst_103 = arith.constant dense<0.000000e+00> : vector<8xf32>
    %320 = vector.multi_reduction <add>, %319, %cst_103 [1] : vector<8x19xf32> to vector<8xf32>
    %321 = vector.shape_cast %320 : vector<8xf32> to vector<8x1xf32>
    %cst_104 = arith.constant 0.0526315793 : f32
    %322 = vector.broadcast %cst_104 : f32 to vector<8x1xf32>
    %323 = arith.mulf %321, %322 : vector<8x1xf32>
    %324 = arith.mulf %318, %318 : vector<8x1xf32>
    %325 = arith.subf %323, %324 : vector<8x1xf32>
    %326 = vector.broadcast %318 : vector<8x1xf32> to vector<8x19xf32>
    %327 = arith.subf %314, %326 : vector<8x19xf32>
    %cst_105 = arith.constant 9.99999974E-6 : f32
    %328 = vector.broadcast %cst_105 : f32 to vector<8x1xf32>
    %329 = arith.addf %325, %328 : vector<8x1xf32>
    %330 = math.rsqrt %329 : vector<8x1xf32>
    %331 = vector.broadcast %330 : vector<8x1xf32> to vector<8x19xf32>
    %332 = arith.mulf %327, %331 : vector<8x19xf32>
    %333 = vector.extract_strided_slice %91 {offsets = [0, 0], sizes = [1, 19], strides = [1, 1]} : vector<2x19xf32> to vector<1x19xf32>
    %334 = vector.broadcast %333 : vector<1x19xf32> to vector<8x19xf32>
    %335 = arith.mulf %332, %334 : vector<8x19xf32>
    %336 = vector.extract_strided_slice %91 {offsets = [1, 0], sizes = [1, 19], strides = [1, 1]} : vector<2x19xf32> to vector<1x19xf32>
    %337 = vector.broadcast %336 : vector<1x19xf32> to vector<8x19xf32>
    %338 = arith.addf %335, %337 : vector<8x19xf32>
    %c2 = arith.constant 2 : index
    %c0_106 = arith.constant 0 : index
    %c0_107 = arith.constant 0 : index
    %339 = vector.load %arg14[%c2, %c0_106, %c0_107] : memref<4x19x152xf32, #tpu.memory_space<vmem>>, vector<1x19x152xf32>
    %340 = vector.shape_cast %339 : vector<1x19x152xf32> to vector<19x152xf32>
    %cst_108 = arith.constant dense<0.000000e+00> : vector<8x152xf32>
    %341 = tpu.matmul %338, %340, %cst_108 {dimension_numbers = #tpu.dot_dimension_numbers<[1], [0], [0], [1], [0, 0, 1, 1], [], []>} : vector<8x19xf32>, vector<19x152xf32>, vector<8x152xf32> -> vector<8x152xf32>
    %342 = arith.addf %259, %341 : vector<8x152xf32>
    %343 = vector.extract_strided_slice %85 {offsets = [0, 192], sizes = [8, 64], strides = [1, 1]} : vector<8x256xf32> to vector<8x64xf32>
    %344 = arith.truncf %343 : vector<8x64xf32> to vector<8x64xbf16>
    %cst_109 = arith.constant dense<0.000000e+00> : vector<8x57xf32>
    %345 = tpu.matmul %344, %86, %cst_109 {dimension_numbers = #tpu.dot_dimension_numbers<[1], [0], [0], [1], [0, 0, 1, 1], [], []>} : vector<8x64xbf16>, vector<64x57xbf16>, vector<8x57xf32> -> vector<8x57xf32>
    %cst_110 = arith.constant dense<0.000000e+00> : vector<8xf32>
    %346 = vector.multi_reduction <add>, %345, %cst_110 [1] : vector<8x57xf32> to vector<8xf32>
    %347 = vector.shape_cast %346 : vector<8xf32> to vector<8x1xf32>
    %cst_111 = arith.constant 0.0175438598 : f32
    %348 = vector.broadcast %cst_111 : f32 to vector<8x1xf32>
    %349 = arith.mulf %347, %348 : vector<8x1xf32>
    %350 = arith.mulf %345, %345 : vector<8x57xf32>
    %cst_112 = arith.constant dense<0.000000e+00> : vector<8xf32>
    %351 = vector.multi_reduction <add>, %350, %cst_112 [1] : vector<8x57xf32> to vector<8xf32>
    %352 = vector.shape_cast %351 : vector<8xf32> to vector<8x1xf32>
    %cst_113 = arith.constant 0.0175438598 : f32
    %353 = vector.broadcast %cst_113 : f32 to vector<8x1xf32>
    %354 = arith.mulf %352, %353 : vector<8x1xf32>
    %355 = arith.mulf %349, %349 : vector<8x1xf32>
    %356 = arith.subf %354, %355 : vector<8x1xf32>
    %357 = vector.broadcast %349 : vector<8x1xf32> to vector<8x57xf32>
    %358 = arith.subf %345, %357 : vector<8x57xf32>
    %cst_114 = arith.constant 9.99999974E-6 : f32
    %359 = vector.broadcast %cst_114 : f32 to vector<8x1xf32>
    %360 = arith.addf %356, %359 : vector<8x1xf32>
    %361 = math.rsqrt %360 : vector<8x1xf32>
    %362 = vector.broadcast %361 : vector<8x1xf32> to vector<8x57xf32>
    %363 = arith.mulf %358, %362 : vector<8x57xf32>
    %364 = vector.extract_strided_slice %89 {offsets = [0, 0], sizes = [1, 57], strides = [1, 1]} : vector<2x57xf32> to vector<1x57xf32>
    %365 = vector.broadcast %364 : vector<1x57xf32> to vector<8x57xf32>
    %366 = arith.mulf %363, %365 : vector<8x57xf32>
    %367 = vector.extract_strided_slice %89 {offsets = [1, 0], sizes = [1, 57], strides = [1, 1]} : vector<2x57xf32> to vector<1x57xf32>
    %368 = vector.broadcast %367 : vector<1x57xf32> to vector<8x57xf32>
    %369 = arith.addf %366, %368 : vector<8x57xf32>
    %370 = arith.truncf %369 : vector<8x57xf32> to vector<8x57xbf16>
    %cst_115 = arith.constant dense<0.000000e+00> : vector<8x57xf32>
    %371 = tpu.matmul %370, %87, %cst_115 {dimension_numbers = #tpu.dot_dimension_numbers<[1], [0], [0], [1], [0, 0, 1, 1], [], []>} : vector<8x57xbf16>, vector<57x57xbf16>, vector<8x57xf32> -> vector<8x57xf32>
    %cst_116 = arith.constant dense<0.000000e+00> : vector<8xf32>
    %372 = vector.multi_reduction <add>, %371, %cst_116 [1] : vector<8x57xf32> to vector<8xf32>
    %373 = vector.shape_cast %372 : vector<8xf32> to vector<8x1xf32>
    %cst_117 = arith.constant 0.0175438598 : f32
    %374 = vector.broadcast %cst_117 : f32 to vector<8x1xf32>
    %375 = arith.mulf %373, %374 : vector<8x1xf32>
    %376 = arith.mulf %371, %371 : vector<8x57xf32>
    %cst_118 = arith.constant dense<0.000000e+00> : vector<8xf32>
    %377 = vector.multi_reduction <add>, %376, %cst_118 [1] : vector<8x57xf32> to vector<8xf32>
    %378 = vector.shape_cast %377 : vector<8xf32> to vector<8x1xf32>
    %cst_119 = arith.constant 0.0175438598 : f32
    %379 = vector.broadcast %cst_119 : f32 to vector<8x1xf32>
    %380 = arith.mulf %378, %379 : vector<8x1xf32>
    %381 = arith.mulf %375, %375 : vector<8x1xf32>
    %382 = arith.subf %380, %381 : vector<8x1xf32>
    %383 = vector.broadcast %375 : vector<8x1xf32> to vector<8x57xf32>
    %384 = arith.subf %371, %383 : vector<8x57xf32>
    %cst_120 = arith.constant 9.99999974E-6 : f32
    %385 = vector.broadcast %cst_120 : f32 to vector<8x1xf32>
    %386 = arith.addf %382, %385 : vector<8x1xf32>
    %387 = math.rsqrt %386 : vector<8x1xf32>
    %388 = vector.broadcast %387 : vector<8x1xf32> to vector<8x57xf32>
    %389 = arith.mulf %384, %388 : vector<8x57xf32>
    %390 = vector.extract_strided_slice %90 {offsets = [0, 0], sizes = [1, 57], strides = [1, 1]} : vector<2x57xf32> to vector<1x57xf32>
    %391 = vector.broadcast %390 : vector<1x57xf32> to vector<8x57xf32>
    %392 = arith.mulf %389, %391 : vector<8x57xf32>
    %393 = vector.extract_strided_slice %90 {offsets = [1, 0], sizes = [1, 57], strides = [1, 1]} : vector<2x57xf32> to vector<1x57xf32>
    %394 = vector.broadcast %393 : vector<1x57xf32> to vector<8x57xf32>
    %395 = arith.addf %392, %394 : vector<8x57xf32>
    %396 = arith.truncf %395 : vector<8x57xf32> to vector<8x57xbf16>
    %cst_121 = arith.constant dense<0.000000e+00> : vector<8x19xf32>
    %397 = tpu.matmul %396, %88, %cst_121 {dimension_numbers = #tpu.dot_dimension_numbers<[1], [0], [0], [1], [0, 0, 1, 1], [], []>} : vector<8x57xbf16>, vector<57x19xbf16>, vector<8x19xf32> -> vector<8x19xf32>
    %cst_122 = arith.constant dense<0.000000e+00> : vector<8xf32>
    %398 = vector.multi_reduction <add>, %397, %cst_122 [1] : vector<8x19xf32> to vector<8xf32>
    %399 = vector.shape_cast %398 : vector<8xf32> to vector<8x1xf32>
    %cst_123 = arith.constant 0.0526315793 : f32
    %400 = vector.broadcast %cst_123 : f32 to vector<8x1xf32>
    %401 = arith.mulf %399, %400 : vector<8x1xf32>
    %402 = arith.mulf %397, %397 : vector<8x19xf32>
    %cst_124 = arith.constant dense<0.000000e+00> : vector<8xf32>
    %403 = vector.multi_reduction <add>, %402, %cst_124 [1] : vector<8x19xf32> to vector<8xf32>
    %404 = vector.shape_cast %403 : vector<8xf32> to vector<8x1xf32>
    %cst_125 = arith.constant 0.0526315793 : f32
    %405 = vector.broadcast %cst_125 : f32 to vector<8x1xf32>
    %406 = arith.mulf %404, %405 : vector<8x1xf32>
    %407 = arith.mulf %401, %401 : vector<8x1xf32>
    %408 = arith.subf %406, %407 : vector<8x1xf32>
    %409 = vector.broadcast %401 : vector<8x1xf32> to vector<8x19xf32>
    %410 = arith.subf %397, %409 : vector<8x19xf32>
    %cst_126 = arith.constant 9.99999974E-6 : f32
    %411 = vector.broadcast %cst_126 : f32 to vector<8x1xf32>
    %412 = arith.addf %408, %411 : vector<8x1xf32>
    %413 = math.rsqrt %412 : vector<8x1xf32>
    %414 = vector.broadcast %413 : vector<8x1xf32> to vector<8x19xf32>
    %415 = arith.mulf %410, %414 : vector<8x19xf32>
    %416 = vector.extract_strided_slice %91 {offsets = [0, 0], sizes = [1, 19], strides = [1, 1]} : vector<2x19xf32> to vector<1x19xf32>
    %417 = vector.broadcast %416 : vector<1x19xf32> to vector<8x19xf32>
    %418 = arith.mulf %415, %417 : vector<8x19xf32>
    %419 = vector.extract_strided_slice %91 {offsets = [1, 0], sizes = [1, 19], strides = [1, 1]} : vector<2x19xf32> to vector<1x19xf32>
    %420 = vector.broadcast %419 : vector<1x19xf32> to vector<8x19xf32>
    %421 = arith.addf %418, %420 : vector<8x19xf32>
    %c3 = arith.constant 3 : index
    %c0_127 = arith.constant 0 : index
    %c0_128 = arith.constant 0 : index
    %422 = vector.load %arg14[%c3, %c0_127, %c0_128] : memref<4x19x152xf32, #tpu.memory_space<vmem>>, vector<1x19x152xf32>
    %423 = vector.shape_cast %422 : vector<1x19x152xf32> to vector<19x152xf32>
    %cst_129 = arith.constant dense<0.000000e+00> : vector<8x152xf32>
    %424 = tpu.matmul %421, %423, %cst_129 {dimension_numbers = #tpu.dot_dimension_numbers<[1], [0], [0], [1], [0, 0, 1, 1], [], []>} : vector<8x19xf32>, vector<19x152xf32>, vector<8x152xf32> -> vector<8x152xf32>
    %425 = arith.addf %342, %424 : vector<8x152xf32>
    %cst_130 = arith.constant 0.000000e+00 : f32
    %426 = vector.broadcast %cst_130 : f32 to vector<8x152xf32>
    %427 = arith.maximumf %425, %426 : vector<8x152xf32>
    %c0_131 = arith.constant 0 : index
    %c0_132 = arith.constant 0 : index
    %c0_133 = arith.constant 0 : index
    %428 = vector.load %arg18[%c0_131, %c0_132, %c0_133] : memref<1x8x152xf32, #tpu.memory_space<vmem>>, vector<1x8x152xf32>
    %429 = vector.shape_cast %428 : vector<1x8x152xf32> to vector<8x152xf32>
    %430 = vector.shape_cast %427 : vector<8x152xf32> to vector<1x8x152xf32>
    tpu.vector_store %arg18[%c0_131, %c0_132, %c0_133], %430 {strides = array<i32>} : memref<1x8x152xf32, #tpu.memory_space<vmem>>, vector<1x8x152xf32>,
    %c0_134 = arith.constant 0 : index
    %c0_135 = arith.constant 0 : index
    %431 = vector.load %arg16[%c0_134, %c0_135] : memref<152x304xf32, #tpu.memory_space<vmem>>, vector<152x304xf32>
    %cst_136 = arith.constant dense<0.000000e+00> : vector<8x304xf32>
    %432 = tpu.matmul %427, %431, %cst_136 {dimension_numbers = #tpu.dot_dimension_numbers<[1], [0], [0], [1], [0, 0, 1, 1], [], []>} : vector<8x152xf32>, vector<152x304xf32>, vector<8x304xf32> -> vector<8x304xf32>
    %c0_137 = arith.constant 0 : index
    %c0_138 = arith.constant 0 : index
    %433 = vector.load %arg17[%c0_137, %c0_138] : memref<1x304xf32, #tpu.memory_space<vmem>>, vector<1x304xf32>
    %434 = vector.broadcast %433 : vector<1x304xf32> to vector<8x304xf32>
    %435 = arith.addf %432, %434 : vector<8x304xf32>
    %cst_139 = arith.constant 0.000000e+00 : f32
    %436 = vector.broadcast %cst_139 : f32 to vector<8x304xf32>
    %437 = arith.maximumf %435, %436 : vector<8x304xf32>
    %c0_140 = arith.constant 0 : index
    %c0_141 = arith.constant 0 : index
    %c0_142 = arith.constant 0 : index
    %438 = vector.load %arg19[%c0_140, %c0_141, %c0_142] : memref<1x8x304xf32, #tpu.memory_space<vmem>>, vector<1x8x304xf32>
    %439 = vector.shape_cast %438 : vector<1x8x304xf32> to vector<8x304xf32>
    %440 = vector.shape_cast %437 : vector<8x304xf32> to vector<1x8x304xf32>
    tpu.vector_store %arg19[%c0_140, %c0_141, %c0_142], %440 {strides = array<i32>} : memref<1x8x304xf32, #tpu.memory_space<vmem>>, vector<1x8x304xf32>,
    return
  }
  func.func @transform_0(%arg0: i32) -> (i32, i32, i32) {
    %c0_i32 = arith.constant 0 : i32
    %c0_i32_0 = arith.constant 0 : i32
    %c0_i32_1 = arith.constant 0 : i32
    return %arg0, %c0_i32, %c0_i32_0 : i32, i32, i32
  }
  func.func @transform_1(%arg0: i32) -> (i32, i32) {
    %c0_i32 = arith.constant 0 : i32
    %c0_i32_0 = arith.constant 0 : i32
    %c0_i32_1 = arith.constant 0 : i32
    return %c0_i32, %c0_i32_0 : i32, i32
  }
  func.func @transform_2(%arg0: i32) -> (i32, i32) {
    %c0_i32 = arith.constant 0 : i32
    %c0_i32_0 = arith.constant 0 : i32
    %c0_i32_1 = arith.constant 0 : i32
    return %c0_i32, %c0_i32_0 : i32, i32
  }
  func.func @transform_3(%arg0: i32) -> (i32, i32) {
    %c0_i32 = arith.constant 0 : i32
    %c0_i32_0 = arith.constant 0 : i32
    %c0_i32_1 = arith.constant 0 : i32
    return %c0_i32, %c0_i32_0 : i32, i32
  }
  func.func @transform_4(%arg0: i32) -> (i32, i32) {
    %c0_i32 = arith.constant 0 : i32
    %c0_i32_0 = arith.constant 0 : i32
    %c0_i32_1 = arith.constant 0 : i32
    return %c0_i32, %c0_i32_0 : i32, i32
  }
  func.func @transform_5(%arg0: i32) -> (i32, i32) {
    %c0_i32 = arith.constant 0 : i32
    %c0_i32_0 = arith.constant 0 : i32
    %c0_i32_1 = arith.constant 0 : i32
    return %c0_i32, %c0_i32_0 : i32, i32
  }
  func.func @transform_6(%arg0: i32) -> (i32, i32) {
    %c0_i32 = arith.constant 0 : i32
    %c0_i32_0 = arith.constant 0 : i32
    %c0_i32_1 = arith.constant 0 : i32
    return %c0_i32, %c0_i32_0 : i32, i32
  }
  func.func @transform_7(%arg0: i32) -> (i32, i32) {
    %c0_i32 = arith.constant 0 : i32
    %c0_i32_0 = arith.constant 0 : i32
    %c0_i32_1 = arith.constant 0 : i32
    return %c0_i32, %c0_i32_0 : i32, i32
  }
  func.func @transform_8(%arg0: i32) -> (i32, i32) {
    %c0_i32 = arith.constant 0 : i32
    %c0_i32_0 = arith.constant 0 : i32
    %c0_i32_1 = arith.constant 0 : i32
    return %c0_i32, %c0_i32_0 : i32, i32
  }
  func.func @transform_9(%arg0: i32) -> (i32, i32) {
    %c0_i32 = arith.constant 0 : i32
    %c0_i32_0 = arith.constant 0 : i32
    %c0_i32_1 = arith.constant 0 : i32
    return %c0_i32, %c0_i32_0 : i32, i32
  }
  func.func @transform_10(%arg0: i32) -> (i32, i32) {
    %c0_i32 = arith.constant 0 : i32
    %c0_i32_0 = arith.constant 0 : i32
    %c0_i32_1 = arith.constant 0 : i32
    return %c0_i32, %c0_i32_0 : i32, i32
  }
  func.func @transform_11(%arg0: i32) -> (i32, i32) {
    %c0_i32 = arith.constant 0 : i32
    %c0_i32_0 = arith.constant 0 : i32
    %c0_i32_1 = arith.constant 0 : i32
    return %c0_i32, %c0_i32_0 : i32, i32
  }
  func.func @transform_12(%arg0: i32) -> (i32, i32) {
    %c0_i32 = arith.constant 0 : i32
    %c0_i32_0 = arith.constant 0 : i32
    %c0_i32_1 = arith.constant 0 : i32
    return %c0_i32, %c0_i32_0 : i32, i32
  }
  func.func @transform_13(%arg0: i32) -> (i32, i32, i32) {
    %c0_i32 = arith.constant 0 : i32
    %c0_i32_0 = arith.constant 0 : i32
    %c0_i32_1 = arith.constant 0 : i32
    %c0_i32_2 = arith.constant 0 : i32
    return %c0_i32, %c0_i32_0, %c0_i32_1 : i32, i32, i32
  }
  func.func @transform_14(%arg0: i32) -> (i32, i32) {
    %c0_i32 = arith.constant 0 : i32
    %c0_i32_0 = arith.constant 0 : i32
    %c0_i32_1 = arith.constant 0 : i32
    return %c0_i32, %c0_i32_0 : i32, i32
  }
  func.func @transform_15(%arg0: i32) -> (i32, i32) {
    %c0_i32 = arith.constant 0 : i32
    %c0_i32_0 = arith.constant 0 : i32
    %c0_i32_1 = arith.constant 0 : i32
    return %c0_i32, %c0_i32_0 : i32, i32
  }
  func.func @transform_16(%arg0: i32) -> (i32, i32) {
    %c0_i32 = arith.constant 0 : i32
    %c0_i32_0 = arith.constant 0 : i32
    %c0_i32_1 = arith.constant 0 : i32
    return %c0_i32, %c0_i32_0 : i32, i32
  }
  func.func @transform_17(%arg0: i32) -> (i32, i32, i32) {
    %c0_i32 = arith.constant 0 : i32
    %c0_i32_0 = arith.constant 0 : i32
    %c0_i32_1 = arith.constant 0 : i32
    return %arg0, %c0_i32, %c0_i32_0 : i32, i32, i32
  }
  func.func @transform_18(%arg0: i32) -> (i32, i32, i32) {
    %c0_i32 = arith.constant 0 : i32
    %c0_i32_0 = arith.constant 0 : i32
    %c0_i32_1 = arith.constant 0 : i32
    return %arg0, %c0_i32, %c0_i32_0 : i32, i32, i32
  }
}

</mosaic_0001>

<llo_original>
// kernel: tpu_custom_call.1
$region0: #{tpu_custom_call.1}
  #allocation0 [shape = 'u32[]', space=smem, size = 0x4, offset = 0x4, fixed_abs, tag = 'smem constant byte address 0x4 - core index']
  #allocation1 [shape = 'u32[144,128]{1,0:T(1,128)}', space=vmem, size = 0x12000, scoped, tag = 'internal scratch']
  %s0 = inlined_call_operand.vmem [shape: bf16[2,192,256], index: 0, kind: input, shape index: {}]
  %s1 = inlined_call_operand.hbm [shape: bf16[186,192], index: 1, kind: input, shape index: {}]
  %s2 = inlined_call_operand.vmem [shape: f32[186,2], index: 2, kind: input, shape index: {}]
  %s3 = inlined_call_operand.hbm [shape: bf16[186,186], index: 3, kind: input, shape index: {}]
  %s4 = inlined_call_operand.vmem [shape: f32[186,2], index: 4, kind: input, shape index: {}]
  %s5 = inlined_call_operand.hbm [shape: bf16[62,186], index: 5, kind: input, shape index: {}]
  %s6 = inlined_call_operand.vmem [shape: f32[62,2], index: 6, kind: input, shape index: {}]
  %s7 = inlined_call_operand.vmem [shape: bf16[64,57], index: 7, kind: input, shape index: {}]
  %s8 = inlined_call_operand.vmem [shape: f32[2,57], index: 8, kind: input, shape index: {}]
  %s9 = inlined_call_operand.hbm [shape: bf16[57,57], index: 9, kind: input, shape index: {}]
  %s10 = inlined_call_operand.vmem [shape: f32[2,57], index: 10, kind: input, shape index: {}]
  %s11 = inlined_call_operand.vmem [shape: bf16[57,19], index: 11, kind: input, shape index: {}]
  %s12 = inlined_call_operand.vmem [shape: f32[2,19], index: 12, kind: input, shape index: {}]
  %s13 = inlined_call_operand.vmem [shape: f32[4,19,152], index: 13, kind: input, shape index: {}]
  %s14 = inlined_call_operand.vmem [shape: f32[1,152], index: 14, kind: input, shape index: {}]
  %s15 = inlined_call_operand.vmem [shape: f32[152,304], index: 15, kind: input, shape index: {}]
  %s16 = inlined_call_operand.vmem [shape: f32[1,304], index: 16, kind: input, shape index: {}]
  %s17 = inlined_call_operand.hbm [shape: f32[2,8,152], index: 17, kind: output, shape index: {0}]
  %s18 = inlined_call_operand.hbm [shape: f32[2,8,304], index: 18, kind: output, shape index: {1}]
  %19 = xla_tuple %s17, %s18
  %s20 = sld [smem:[#allocation0]]
  $region125: #{tpu_custom_call.1} parent=0
    _
  %s22 = ssub.s32 1, %s20
  %s23 = scalar_select 0, %s22, %s20
  $region1: #{tpu_custom_call.1} parent=0
    #allocation2 [shape = 'u8[98304]{0}', space=vmem, size = 0x18000, scoped, tag = 'input window, operand 1, single buffered']
    #allocation3 [shape = 's32[2]{0}', space=sflag, size = 0x8, scoped, tag = 'scoped memory for tpu_custom_call.1']
    #allocation4 [shape = 's32[2]{0}', space=sflag, size = 0x8, scoped, tag = 'scoped memory for tpu_custom_call.1']
    #allocation5 [shape = 'u8[98304]{0}', space=vmem, size = 0x18000, scoped, tag = 'input window, operand 3, single buffered']
    #allocation6 [shape = 's32[1]{0}', space=sflag, size = 0x4, scoped, tag = 'scoped memory for tpu_custom_call.1']
    #allocation7 [shape = 'u8[32768]{0}', space=vmem, size = 0x8000, scoped, tag = 'input window, operand 5, single buffered']
    #allocation8 [shape = 'u8[16384]{0}', space=vmem, size = 0x4000, scoped, tag = 'input window, operand 9, single buffered']
    #allocation9 [shape = 's32[1]{0}', space=sflag, size = 0x4, scoped, tag = 'scoped memory for tpu_custom_call.1']
    #allocation10 [shape = 'u8[16384]{0}', space=vmem, size = 0x4000, scoped, tag = 'output window, operand 0']
    #allocation11 [shape = 'u8[24576]{0}', space=vmem, size = 0x6000, scoped, tag = 'output window, operand 1']
    #allocation12 [shape = 's32[2]{0}', space=sflag, size = 0x8, scoped, tag = 'scoped memory for tpu_custom_call.1']
    %24 = vsyncpa [#allocation3], 0
    %25 = vsyncpa [#allocation6], 0
    %26 = vsyncpa [#allocation9], 0
    %27 = vsyncpa [#allocation4], 0
    %s28 = scalar_lea.sflag [#allocation4], 1
    %29 = vsyncpa %s28, 0
    %30 = vsyncpa [#allocation12], 0
    %s31 = scalar_lea.sflag [#allocation12], 1
    %32 = vsyncpa %s31, 0
    loop: start=0, step=1, limit=4
    $region2: #{tpu_custom_call.1} parent=1 // loop_pre_header
      _
    $region3: #{tpu_custom_call.1} parent=1 // loop_header
      %s34 = sphi 0, %s38
      %p35 = scmp.ge.s32.totalorder %s34, 4
      %s44 = sphi 0, %s46
      %s47 = sphi 0, %s44
      %s48 = sphi 0, %s47
      %s64 = sphi 0, %s48
      %s68 = sphi 0, %s68
      %s70 = sphi 0, %s68
      %s71 = sphi 0, %s70
      %s85 = sphi 0, %s71
      %s89 = sphi 0, %s89
      %s91 = sphi 0, %s89
      %s92 = sphi 0, %s91
      %s106 = sphi 0, %s92
      %s110 = sphi 0, %s110
      %s112 = sphi 0, %s110
      %s113 = sphi 0, %s112
      %s127 = sphi 0, %s113
      %s131 = sphi 0, %s131
      %s133 = sphi 0, %s131
      %s134 = sphi 0, %s133
      %s148 = sphi 0, %s134
      %s152 = sphi 0, %s152
      %s154 = sphi 0, %s152
      %s155 = sphi 0, %s154
      %s169 = sphi 0, %s155
      %s173 = sphi 0, %s173
      %s175 = sphi 0, %s173
      %s176 = sphi 0, %s175
      %s190 = sphi 0, %s176
      %s194 = sphi 0, %s194
      %s196 = sphi 0, %s194
      %s197 = sphi 0, %s196
      %s211 = sphi 0, %s197
      %s215 = sphi 0, %s215
      %s217 = sphi 0, %s215
      %s218 = sphi 0, %s217
      %s232 = sphi 0, %s218
      %s236 = sphi 0, %s236
      %s238 = sphi 0, %s236
      %s239 = sphi 0, %s238
      %s253 = sphi 0, %s239
      %s257 = sphi 0, %s257
      %s259 = sphi 0, %s257
      %s260 = sphi 0, %s259
      %s274 = sphi 0, %s260
      %s278 = sphi 0, %s278
      %s280 = sphi 0, %s278
      %s281 = sphi 0, %s280
      %s295 = sphi 0, %s281
      %s299 = sphi 0, %s299
      %s301 = sphi 0, %s299
      %s302 = sphi 0, %s301
      %s316 = sphi 0, %s302
      %s320 = sphi 0, %s320
      %s322 = sphi 0, %s320
      %s323 = sphi 0, %s322
      %s337 = sphi 0, %s323
      %s341 = sphi 0, %s341
      %s343 = sphi 0, %s341
      %s344 = sphi 0, %s343
      %s358 = sphi 0, %s344
      %s362 = sphi 0, %s362
      %s364 = sphi 0, %s362
      %s365 = sphi 0, %s364
      %s379 = sphi 0, %s365
      %s383 = sphi 0, %s383
      %s385 = sphi 0, %s383
      %s386 = sphi 0, %s385
      %s400 = sphi 0, %s386
      %s406 = sphi 0, %s408
      %s409 = sphi 0, %s406
      %s410 = sphi 0, %s409
      %s426 = sphi 0, %s410
      %s432 = sphi 0, %s434
      %s435 = sphi 0, %s432
      %s436 = sphi 0, %s435
      %s452 = sphi 0, %s436
    $region4: #{tpu_custom_call.1} parent=1 // loop_header_branch
      %37 = sbr.rel (%p35) target = $region8
    $region5: #{tpu_custom_call.1} parent=1 // loop_body
      %s39 = ssub.s32 %s34, 1
      %s40 = ssub.s32 %s34, 2
      %s41 = sadd.s32 %s34, 1
      %s42 = ssub.s32 %s34, %s41
      %p43 = scmp.eq.s32.totalorder %s42, 0
      %s45 = sadd.s32 %s44, 1
      %s46 = scalar_select %p43, %s44, %s45
      %p49 = pneg %p43
      %p50 = scmp.eq.s32.totalorder %s34, 1
      %p51 = por %p49, %p50
      %p52 = scmp.ne.s32.totalorder %s44, %s47
      %p53 = scmp.eq.s32.totalorder %s34, 0
      %p54 = por %p52, %p53
      %p55 = scmp.ne.s32.totalorder %s44, %s47
      %p56 = scmp.eq.s32.totalorder %s39, 1
      %p57 = por %p55, %p56
      %p58 = scmp.ne.s32.totalorder %s47, %s48
      %p59 = scmp.eq.s32.totalorder %s39, 0
      %p60 = por %p58, %p59
      %p61 = scmp.ne.s32.totalorder %s47, %s48
      %p62 = scmp.eq.s32.totalorder %s40, 1
      %p63 = por %p61, %p62
      %p65 = scmp.ne.s32.totalorder %s48, %s64
      %p66 = scmp.eq.s32.totalorder %s40, 0
      %p67 = por %p65, %p66
      %s69 = sadd.s32 %s68, 1
      %p72 = scmp.eq.s32.totalorder %s34, 1
      %p73 = scmp.ne.s32.totalorder %s68, %s70
      %p74 = scmp.eq.s32.totalorder %s34, 0
      %p75 = por %p73, %p74
      %p76 = scmp.ne.s32.totalorder %s68, %s70
      %p77 = scmp.eq.s32.totalorder %s39, 1
      %p78 = por %p76, %p77
      %p79 = scmp.ne.s32.totalorder %s70, %s71
      %p80 = scmp.eq.s32.totalorder %s39, 0
      %p81 = por %p79, %p80
      %p82 = scmp.ne.s32.totalorder %s70, %s71
      %p83 = scmp.eq.s32.totalorder %s40, 1
      %p84 = por %p82, %p83
      %p86 = scmp.ne.s32.totalorder %s71, %s85
      %p87 = scmp.eq.s32.totalorder %s40, 0
      %p88 = por %p86, %p87
      %s90 = sadd.s32 %s89, 1
      %p93 = scmp.eq.s32.totalorder %s34, 1
      %p94 = scmp.ne.s32.totalorder %s89, %s91
      %p95 = scmp.eq.s32.totalorder %s34, 0
      %p96 = por %p94, %p95
      %p97 = scmp.ne.s32.totalorder %s89, %s91
      %p98 = scmp.eq.s32.totalorder %s39, 1
      %p99 = por %p97, %p98
      %p100 = scmp.ne.s32.totalorder %s91, %s92
      %p101 = scmp.eq.s32.totalorder %s39, 0
      %p102 = por %p100, %p101
      %p103 = scmp.ne.s32.totalorder %s91, %s92
      %p104 = scmp.eq.s32.totalorder %s40, 1
      %p105 = por %p103, %p104
      %p107 = scmp.ne.s32.totalorder %s92, %s106
      %p108 = scmp.eq.s32.totalorder %s40, 0
      %p109 = por %p107, %p108
      %s111 = sadd.s32 %s110, 1
      %p114 = scmp.eq.s32.totalorder %s34, 1
      %p115 = scmp.ne.s32.totalorder %s110, %s112
      %p116 = scmp.eq.s32.totalorder %s34, 0
      %p117 = por %p115, %p116
      %p118 = scmp.ne.s32.totalorder %s110, %s112
      %p119 = scmp.eq.s32.totalorder %s39, 1
      %p120 = por %p118, %p119
      %p121 = scmp.ne.s32.totalorder %s112, %s113
      %p122 = scmp.eq.s32.totalorder %s39, 0
      %p123 = por %p121, %p122
      %p124 = scmp.ne.s32.totalorder %s112, %s113
      %p125 = scmp.eq.s32.totalorder %s40, 1
      %p126 = por %p124, %p125
      %p128 = scmp.ne.s32.totalorder %s113, %s127
      %p129 = scmp.eq.s32.totalorder %s40, 0
      %p130 = por %p128, %p129
      %s132 = sadd.s32 %s131, 1
      %p135 = scmp.eq.s32.totalorder %s34, 1
      %p136 = scmp.ne.s32.totalorder %s131, %s133
      %p137 = scmp.eq.s32.totalorder %s34, 0
      %p138 = por %p136, %p137
      %p139 = scmp.ne.s32.totalorder %s131, %s133
      %p140 = scmp.eq.s32.totalorder %s39, 1
      %p141 = por %p139, %p140
      %p142 = scmp.ne.s32.totalorder %s133, %s134
      %p143 = scmp.eq.s32.totalorder %s39, 0
      %p144 = por %p142, %p143
      %p145 = scmp.ne.s32.totalorder %s133, %s134
      %p146 = scmp.eq.s32.totalorder %s40, 1
      %p147 = por %p145, %p146
      %p149 = scmp.ne.s32.totalorder %s134, %s148
      %p150 = scmp.eq.s32.totalorder %s40, 0
      %p151 = por %p149, %p150
      %s153 = sadd.s32 %s152, 1
      %p156 = scmp.eq.s32.totalorder %s34, 1
      %p157 = scmp.ne.s32.totalorder %s152, %s154
      %p158 = scmp.eq.s32.totalorder %s34, 0
      %p159 = por %p157, %p158
      %p160 = scmp.ne.s32.totalorder %s152, %s154
      %p161 = scmp.eq.s32.totalorder %s39, 1
      %p162 = por %p160, %p161
      %p163 = scmp.ne.s32.totalorder %s154, %s155
      %p164 = scmp.eq.s32.totalorder %s39, 0
      %p165 = por %p163, %p164
      %p166 = scmp.ne.s32.totalorder %s154, %s155
      %p167 = scmp.eq.s32.totalorder %s40, 1
      %p168 = por %p166, %p167
      %p170 = scmp.ne.s32.totalorder %s155, %s169
      %p171 = scmp.eq.s32.totalorder %s40, 0
      %p172 = por %p170, %p171
      %s174 = sadd.s32 %s173, 1
      %p177 = scmp.eq.s32.totalorder %s34, 1
      %p178 = scmp.ne.s32.totalorder %s173, %s175
      %p179 = scmp.eq.s32.totalorder %s34, 0
      %p180 = por %p178, %p179
      %p181 = scmp.ne.s32.totalorder %s173, %s175
      %p182 = scmp.eq.s32.totalorder %s39, 1
      %p183 = por %p181, %p182
      %p184 = scmp.ne.s32.totalorder %s175, %s176
      %p185 = scmp.eq.s32.totalorder %s39, 0
      %p186 = por %p184, %p185
      %p187 = scmp.ne.s32.totalorder %s175, %s176
      %p188 = scmp.eq.s32.totalorder %s40, 1
      %p189 = por %p187, %p188
      %p191 = scmp.ne.s32.totalorder %s176, %s190
      %p192 = scmp.eq.s32.totalorder %s40, 0
      %p193 = por %p191, %p192
      %s195 = sadd.s32 %s194, 1
      %p198 = scmp.eq.s32.totalorder %s34, 1
      %p199 = scmp.ne.s32.totalorder %s194, %s196
      %p200 = scmp.eq.s32.totalorder %s34, 0
      %p201 = por %p199, %p200
      %p202 = scmp.ne.s32.totalorder %s194, %s196
      %p203 = scmp.eq.s32.totalorder %s39, 1
      %p204 = por %p202, %p203
      %p205 = scmp.ne.s32.totalorder %s196, %s197
      %p206 = scmp.eq.s32.totalorder %s39, 0
      %p207 = por %p205, %p206
      %p208 = scmp.ne.s32.totalorder %s196, %s197
      %p209 = scmp.eq.s32.totalorder %s40, 1
      %p210 = por %p208, %p209
      %p212 = scmp.ne.s32.totalorder %s197, %s211
      %p213 = scmp.eq.s32.totalorder %s40, 0
      %p214 = por %p212, %p213
      %s216 = sadd.s32 %s215, 1
      %p219 = scmp.eq.s32.totalorder %s34, 1
      %p220 = scmp.ne.s32.totalorder %s215, %s217
      %p221 = scmp.eq.s32.totalorder %s34, 0
      %p222 = por %p220, %p221
      %p223 = scmp.ne.s32.totalorder %s215, %s217
      %p224 = scmp.eq.s32.totalorder %s39, 1
      %p225 = por %p223, %p224
      %p226 = scmp.ne.s32.totalorder %s217, %s218
      %p227 = scmp.eq.s32.totalorder %s39, 0
      %p228 = por %p226, %p227
      %p229 = scmp.ne.s32.totalorder %s217, %s218
      %p230 = scmp.eq.s32.totalorder %s40, 1
      %p231 = por %p229, %p230
      %p233 = scmp.ne.s32.totalorder %s218, %s232
      %p234 = scmp.eq.s32.totalorder %s40, 0
      %p235 = por %p233, %p234
      %s237 = sadd.s32 %s236, 1
      %p240 = scmp.eq.s32.totalorder %s34, 1
      %p241 = scmp.ne.s32.totalorder %s236, %s238
      %p242 = scmp.eq.s32.totalorder %s34, 0
      %p243 = por %p241, %p242
      %p244 = scmp.ne.s32.totalorder %s236, %s238
      %p245 = scmp.eq.s32.totalorder %s39, 1
      %p246 = por %p244, %p245
      %p247 = scmp.ne.s32.totalorder %s238, %s239
      %p248 = scmp.eq.s32.totalorder %s39, 0
      %p249 = por %p247, %p248
      %p250 = scmp.ne.s32.totalorder %s238, %s239
      %p251 = scmp.eq.s32.totalorder %s40, 1
      %p252 = por %p250, %p251
      %p254 = scmp.ne.s32.totalorder %s239, %s253
      %p255 = scmp.eq.s32.totalorder %s40, 0
      %p256 = por %p254, %p255
      %s258 = sadd.s32 %s257, 1
      %p261 = scmp.eq.s32.totalorder %s34, 1
      %p262 = scmp.ne.s32.totalorder %s257, %s259
      %p263 = scmp.eq.s32.totalorder %s34, 0
      %p264 = por %p262, %p263
      %p265 = scmp.ne.s32.totalorder %s257, %s259
      %p266 = scmp.eq.s32.totalorder %s39, 1
      %p267 = por %p265, %p266
      %p268 = scmp.ne.s32.totalorder %s259, %s260
      %p269 = scmp.eq.s32.totalorder %s39, 0
      %p270 = por %p268, %p269
      %p271 = scmp.ne.s32.totalorder %s259, %s260
      %p272 = scmp.eq.s32.totalorder %s40, 1
      %p273 = por %p271, %p272
      %p275 = scmp.ne.s32.totalorder %s260, %s274
      %p276 = scmp.eq.s32.totalorder %s40, 0
      %p277 = por %p275, %p276
      %s279 = sadd.s32 %s278, 1
      %p282 = scmp.eq.s32.totalorder %s34, 1
      %p283 = scmp.ne.s32.totalorder %s278, %s280
      %p284 = scmp.eq.s32.totalorder %s34, 0
      %p285 = por %p283, %p284
      %p286 = scmp.ne.s32.totalorder %s278, %s280
      %p287 = scmp.eq.s32.totalorder %s39, 1
      %p288 = por %p286, %p287
      %p289 = scmp.ne.s32.totalorder %s280, %s281
      %p290 = scmp.eq.s32.totalorder %s39, 0
      %p291 = por %p289, %p290
      %p292 = scmp.ne.s32.totalorder %s280, %s281
      %p293 = scmp.eq.s32.totalorder %s40, 1
      %p294 = por %p292, %p293
      %p296 = scmp.ne.s32.totalorder %s281, %s295
      %p297 = scmp.eq.s32.totalorder %s40, 0
      %p298 = por %p296, %p297
      %s300 = sadd.s32 %s299, 1
      %p303 = scmp.eq.s32.totalorder %s34, 1
      %p304 = scmp.ne.s32.totalorder %s299, %s301
      %p305 = scmp.eq.s32.totalorder %s34, 0
      %p306 = por %p304, %p305
      %p307 = scmp.ne.s32.totalorder %s299, %s301
      %p308 = scmp.eq.s32.totalorder %s39, 1
      %p309 = por %p307, %p308
      %p310 = scmp.ne.s32.totalorder %s301, %s302
      %p311 = scmp.eq.s32.totalorder %s39, 0
      %p312 = por %p310, %p311
      %p313 = scmp.ne.s32.totalorder %s301, %s302
      %p314 = scmp.eq.s32.totalorder %s40, 1
      %p315 = por %p313, %p314
      %p317 = scmp.ne.s32.totalorder %s302, %s316
      %p318 = scmp.eq.s32.totalorder %s40, 0
      %p319 = por %p317, %p318
      %s321 = sadd.s32 %s320, 1
      %p324 = scmp.eq.s32.totalorder %s34, 1
      %p325 = scmp.ne.s32.totalorder %s320, %s322
      %p326 = scmp.eq.s32.totalorder %s34, 0
      %p327 = por %p325, %p326
      %p328 = scmp.ne.s32.totalorder %s320, %s322
      %p329 = scmp.eq.s32.totalorder %s39, 1
      %p330 = por %p328, %p329
      %p331 = scmp.ne.s32.totalorder %s322, %s323
      %p332 = scmp.eq.s32.totalorder %s39, 0
      %p333 = por %p331, %p332
      %p334 = scmp.ne.s32.totalorder %s322, %s323
      %p335 = scmp.eq.s32.totalorder %s40, 1
      %p336 = por %p334, %p335
      %p338 = scmp.ne.s32.totalorder %s323, %s337
      %p339 = scmp.eq.s32.totalorder %s40, 0
      %p340 = por %p338, %p339
      %s342 = sadd.s32 %s341, 1
      %p345 = scmp.eq.s32.totalorder %s34, 1
      %p346 = scmp.ne.s32.totalorder %s341, %s343
      %p347 = scmp.eq.s32.totalorder %s34, 0
      %p348 = por %p346, %p347
      %p349 = scmp.ne.s32.totalorder %s341, %s343
      %p350 = scmp.eq.s32.totalorder %s39, 1
      %p351 = por %p349, %p350
      %p352 = scmp.ne.s32.totalorder %s343, %s344
      %p353 = scmp.eq.s32.totalorder %s39, 0
      %p354 = por %p352, %p353
      %p355 = scmp.ne.s32.totalorder %s343, %s344
      %p356 = scmp.eq.s32.totalorder %s40, 1
      %p357 = por %p355, %p356
      %p359 = scmp.ne.s32.totalorder %s344, %s358
      %p360 = scmp.eq.s32.totalorder %s40, 0
      %p361 = por %p359, %p360
      %s363 = sadd.s32 %s362, 1
      %p366 = scmp.eq.s32.totalorder %s34, 1
      %p367 = scmp.ne.s32.totalorder %s362, %s364
      %p368 = scmp.eq.s32.totalorder %s34, 0
      %p369 = por %p367, %p368
      %p370 = scmp.ne.s32.totalorder %s362, %s364
      %p371 = scmp.eq.s32.totalorder %s39, 1
      %p372 = por %p370, %p371
      %p373 = scmp.ne.s32.totalorder %s364, %s365
      %p374 = scmp.eq.s32.totalorder %s39, 0
      %p375 = por %p373, %p374
      %p376 = scmp.ne.s32.totalorder %s364, %s365
      %p377 = scmp.eq.s32.totalorder %s40, 1
      %p378 = por %p376, %p377
      %p380 = scmp.ne.s32.totalorder %s365, %s379
      %p381 = scmp.eq.s32.totalorder %s40, 0
      %p382 = por %p380, %p381
      %s384 = sadd.s32 %s383, 1
      %p387 = scmp.eq.s32.totalorder %s34, 1
      %p388 = scmp.ne.s32.totalorder %s383, %s385
      %p389 = scmp.eq.s32.totalorder %s34, 0
      %p390 = por %p388, %p389
      %p391 = scmp.ne.s32.totalorder %s383, %s385
      %p392 = scmp.eq.s32.totalorder %s39, 1
      %p393 = por %p391, %p392
      %p394 = scmp.ne.s32.totalorder %s385, %s386
      %p395 = scmp.eq.s32.totalorder %s39, 0
      %p396 = por %p394, %p395
      %p397 = scmp.ne.s32.totalorder %s385, %s386
      %p398 = scmp.eq.s32.totalorder %s40, 1
      %p399 = por %p397, %p398
      %p401 = scmp.ne.s32.totalorder %s386, %s400
      %p402 = scmp.eq.s32.totalorder %s40, 0
      %p403 = por %p401, %p402
      %s404 = ssub.s32 %s34, %s41
      %p405 = scmp.eq.s32.totalorder %s404, 0
      %s407 = sadd.s32 %s406, 1
      %s408 = scalar_select %p405, %s406, %s407
      %p411 = pneg %p405
      %p412 = scmp.eq.s32.totalorder %s34, 1
      %p413 = por %p411, %p412
      %p414 = scmp.ne.s32.totalorder %s406, %s409
      %p415 = scmp.eq.s32.totalorder %s34, 0
      %p416 = por %p414, %p415
      %p417 = scmp.ne.s32.totalorder %s406, %s409
      %p418 = scmp.eq.s32.totalorder %s39, 1
      %p419 = por %p417, %p418
      %p420 = scmp.ne.s32.totalorder %s409, %s410
      %p421 = scmp.eq.s32.totalorder %s39, 0
      %p422 = por %p420, %p421
      %p423 = scmp.ne.s32.totalorder %s409, %s410
      %p424 = scmp.eq.s32.totalorder %s40, 1
      %p425 = por %p423, %p424
      %p427 = scmp.ne.s32.totalorder %s410, %s426
      %p428 = scmp.eq.s32.totalorder %s40, 0
      %p429 = por %p427, %p428
      %s430 = ssub.s32 %s34, %s41
      %p431 = scmp.eq.s32.totalorder %s430, 0
      %s433 = sadd.s32 %s432, 1
      %s434 = scalar_select %p431, %s432, %s433
      %p437 = pneg %p431
      %p438 = scmp.eq.s32.totalorder %s34, 1
      %p439 = por %p437, %p438
      %p440 = scmp.ne.s32.totalorder %s432, %s435
      %p441 = scmp.eq.s32.totalorder %s34, 0
      %p442 = por %p440, %p441
      %p443 = scmp.ne.s32.totalorder %s432, %s435
      %p444 = scmp.eq.s32.totalorder %s39, 1
      %p445 = por %p443, %p444
      %p446 = scmp.ne.s32.totalorder %s435, %s436
      %p447 = scmp.eq.s32.totalorder %s39, 0
      %p448 = por %p446, %p447
      %p449 = scmp.ne.s32.totalorder %s435, %s436
      %p450 = scmp.eq.s32.totalorder %s40, 1
      %p451 = por %p449, %p450
      %p453 = scmp.ne.s32.totalorder %s436, %s452
      %p454 = scmp.eq.s32.totalorder %s40, 0
      %p455 = por %p453, %p454
      %p456 = scmp.le.s32.totalorder 1, %s34
      %p457 = scmp.lt.s32.totalorder %s34, 3
      %p458 = pnand %p456, %p457
      %p459 = pneg %p458
      // Predicated region
      $region9: #{tpu_custom_call.1} parent=5 // pred_check
        _
      $region10: #{tpu_custom_call.1} parent=5 // pred_check_branch
        %461 = sbr.rel (%p458) target = $region12
      $region11: #{tpu_custom_call.1} parent=5 // pred_region
        %s462 = ssub.s32 %s34, 1
        // Predicated region
        $region13: #{tpu_custom_call.1} parent=11 // pred_check
          %p463 = pneg %p81
        $region14: #{tpu_custom_call.1} parent=11 // pred_check_branch
          %465 = sbr.rel (%p463) target = $region16
        $region15: #{tpu_custom_call.1} parent=11 // pred_region
          %s467 = ssub.s32 3072, 3072
          %468 = vsyncadd [#allocation3], %s467
          %s469 = sshll.u32 [#allocation2], 4
          %s470 = int_to_ptr.vmem [resolvable:$true] %s469
          %475 = dma.hbm_to_vmem [thread:$0]  %s1, 3072, %s470, [#allocation3], 128, 128, 8
        $region16: #{tpu_custom_call.1} parent=11 // pred_fallthru
          _
        // Predicated region
        $region17: #{tpu_custom_call.1} parent=11 // pred_check
          %p476 = pneg %p102
        $region18: #{tpu_custom_call.1} parent=11 // pred_check_branch
          %478 = sbr.rel (%p476) target = $region20
        $region19: #{tpu_custom_call.1} parent=11 // pred_region
          _
        $region20: #{tpu_custom_call.1} parent=11 // pred_fallthru
          _
        // Predicated region
        $region21: #{tpu_custom_call.1} parent=11 // pred_check
          %p479 = pneg %p123
        $region22: #{tpu_custom_call.1} parent=11 // pred_check_branch
          %481 = sbr.rel (%p479) target = $region24
        $region23: #{tpu_custom_call.1} parent=11 // pred_region
          %s483 = ssub.s32 3072, 3072
          %484 = vsyncadd [#allocation6], %s483
          %s485 = sshll.u32 [#allocation5], 4
          %s486 = int_to_ptr.vmem [resolvable:$true] %s485
          %491 = dma.hbm_to_vmem [thread:$0]  %s3, 3072, %s486, [#allocation6], 128, 128, 8
        $region24: #{tpu_custom_call.1} parent=11 // pred_fallthru
          _
        // Predicated region
        $region25: #{tpu_custom_call.1} parent=11 // pred_check
          %p492 = pneg %p144
        $region26: #{tpu_custom_call.1} parent=11 // pred_check_branch
          %494 = sbr.rel (%p492) target = $region28
        $region27: #{tpu_custom_call.1} parent=11 // pred_region
          _
        $region28: #{tpu_custom_call.1} parent=11 // pred_fallthru
          _
        // Predicated region
        $region29: #{tpu_custom_call.1} parent=11 // pred_check
          %p495 = pneg %p165
        $region30: #{tpu_custom_call.1} parent=11 // pred_check_branch
          %497 = sbr.rel (%p495) target = $region32
        $region31: #{tpu_custom_call.1} parent=11 // pred_region
          %s499 = ssub.s32 1024, 1024
          %500 = vsyncadd [#allocation6], %s499
          %s501 = sshll.u32 [#allocation7], 4
          %s502 = int_to_ptr.vmem [resolvable:$true] %s501
          %507 = dma.hbm_to_vmem [thread:$0]  %s5, 1024, %s502, [#allocation6], 128, 128, 8
        $region32: #{tpu_custom_call.1} parent=11 // pred_fallthru
          _
        // Predicated region
        $region33: #{tpu_custom_call.1} parent=11 // pred_check
          %p508 = pneg %p186
        $region34: #{tpu_custom_call.1} parent=11 // pred_check_branch
          %510 = sbr.rel (%p508) target = $region36
        $region35: #{tpu_custom_call.1} parent=11 // pred_region
          _
        $region36: #{tpu_custom_call.1} parent=11 // pred_fallthru
          _
        // Predicated region
        $region37: #{tpu_custom_call.1} parent=11 // pred_check
          %p511 = pneg %p207
        $region38: #{tpu_custom_call.1} parent=11 // pred_check_branch
          %513 = sbr.rel (%p511) target = $region40
        $region39: #{tpu_custom_call.1} parent=11 // pred_region
          _
        $region40: #{tpu_custom_call.1} parent=11 // pred_fallthru
          _
        // Predicated region
        $region41: #{tpu_custom_call.1} parent=11 // pred_check
          %p514 = pneg %p228
        $region42: #{tpu_custom_call.1} parent=11 // pred_check_branch
          %516 = sbr.rel (%p514) target = $region44
        $region43: #{tpu_custom_call.1} parent=11 // pred_region
          _
        $region44: #{tpu_custom_call.1} parent=11 // pred_fallthru
          _
        // Predicated region
        $region45: #{tpu_custom_call.1} parent=11 // pred_check
          %p517 = pneg %p249
        $region46: #{tpu_custom_call.1} parent=11 // pred_check_branch
          %519 = sbr.rel (%p517) target = $region48
        $region47: #{tpu_custom_call.1} parent=11 // pred_region
          %s521 = ssub.s32 512, 512
          %522 = vsyncadd [#allocation9], %s521
          %s523 = sshll.u32 [#allocation8], 4
          %s524 = int_to_ptr.vmem [resolvable:$true] %s523
          %529 = dma.hbm_to_vmem [thread:$0]  %s9, 512, %s524, [#allocation9], 64, 64, 4
        $region48: #{tpu_custom_call.1} parent=11 // pred_fallthru
          _
        // Predicated region
        $region49: #{tpu_custom_call.1} parent=11 // pred_check
          %p530 = pneg %p270
        $region50: #{tpu_custom_call.1} parent=11 // pred_check_branch
          %532 = sbr.rel (%p530) target = $region52
        $region51: #{tpu_custom_call.1} parent=11 // pred_region
          _
        $region52: #{tpu_custom_call.1} parent=11 // pred_fallthru
          _
        // Predicated region
        $region53: #{tpu_custom_call.1} parent=11 // pred_check
          %p533 = pneg %p291
        $region54: #{tpu_custom_call.1} parent=11 // pred_check_branch
          %535 = sbr.rel (%p533) target = $region56
        $region55: #{tpu_custom_call.1} parent=11 // pred_region
          _
        $region56: #{tpu_custom_call.1} parent=11 // pred_fallthru
          _
        // Predicated region
        $region57: #{tpu_custom_call.1} parent=11 // pred_check
          %p536 = pneg %p312
        $region58: #{tpu_custom_call.1} parent=11 // pred_check_branch
          %538 = sbr.rel (%p536) target = $region60
        $region59: #{tpu_custom_call.1} parent=11 // pred_region
          _
        $region60: #{tpu_custom_call.1} parent=11 // pred_fallthru
          _
        // Predicated region
        $region61: #{tpu_custom_call.1} parent=11 // pred_check
          %p539 = pneg %p333
        $region62: #{tpu_custom_call.1} parent=11 // pred_check_branch
          %541 = sbr.rel (%p539) target = $region64
        $region63: #{tpu_custom_call.1} parent=11 // pred_region
          _
        $region64: #{tpu_custom_call.1} parent=11 // pred_fallthru
          _
        // Predicated region
        $region65: #{tpu_custom_call.1} parent=11 // pred_check
          %p542 = pneg %p354
        $region66: #{tpu_custom_call.1} parent=11 // pred_check_branch
          %544 = sbr.rel (%p542) target = $region68
        $region67: #{tpu_custom_call.1} parent=11 // pred_region
          _
        $region68: #{tpu_custom_call.1} parent=11 // pred_fallthru
          _
        // Predicated region
        $region69: #{tpu_custom_call.1} parent=11 // pred_check
          %p545 = pneg %p375
        $region70: #{tpu_custom_call.1} parent=11 // pred_check_branch
          %547 = sbr.rel (%p545) target = $region72
        $region71: #{tpu_custom_call.1} parent=11 // pred_region
          _
        $region72: #{tpu_custom_call.1} parent=11 // pred_fallthru
          _
        // Predicated region
        $region73: #{tpu_custom_call.1} parent=11 // pred_check
          %p548 = pneg %p396
        $region74: #{tpu_custom_call.1} parent=11 // pred_check_branch
          %550 = sbr.rel (%p548) target = $region76
        $region75: #{tpu_custom_call.1} parent=11 // pred_region
          _
        $region76: #{tpu_custom_call.1} parent=11 // pred_fallthru
          _
      $region12: #{tpu_custom_call.1} parent=5 // pred_fallthru
        _
      %p551 = scmp.lt.s32.totalorder %s34, 2
      // Predicated region
      $region77: #{tpu_custom_call.1} parent=5 // pred_check
        %p552 = pneg %p551
      $region78: #{tpu_custom_call.1} parent=5 // pred_check_branch
        %554 = sbr.rel (%p552) target = $region80
      $region79: #{tpu_custom_call.1} parent=5 // pred_region
        // Predicated region
        $region81: #{tpu_custom_call.1} parent=79 // pred_check
          %p555 = pneg %p54
        $region82: #{tpu_custom_call.1} parent=79 // pred_check_branch
          %557 = sbr.rel (%p555) target = $region84
        $region83: #{tpu_custom_call.1} parent=79 // pred_region
          %p558 = scmp.lt.s32.totalorder %s34, 1
          %s559 = scalar_select %p558, %s34, 1
          %s560 = smul.addr %s559, 48
          %s561 = smul.addr %s560, 4
          %s562 = scalar_lea.vmem %s0, %s561
        $region84: #{tpu_custom_call.1} parent=79 // pred_fallthru
          _
      $region80: #{tpu_custom_call.1} parent=5 // pred_fallthru
        _
      %p563 = scmp.le.s32.totalorder 1, %s34
      %p564 = scmp.lt.s32.totalorder %s34, 3
      %p565 = pnand %p563, %p564
      %p566 = pneg %p565
      // Predicated region
      $region85: #{tpu_custom_call.1} parent=5 // pred_check
        _
      $region86: #{tpu_custom_call.1} parent=5 // pred_check_branch
        %568 = sbr.rel (%p565) target = $region88
      $region87: #{tpu_custom_call.1} parent=5 // pred_region
        %s569 = ssub.s32 %s34, 1
        // Predicated region
        $region89: #{tpu_custom_call.1} parent=87 // pred_check
          %p570 = pneg %p81
        $region90: #{tpu_custom_call.1} parent=87 // pred_check_branch
          %572 = sbr.rel (%p570) target = $region92
        $region91: #{tpu_custom_call.1} parent=87 // pred_region
          %573 = dma.done [#allocation3], 3072
        $region92: #{tpu_custom_call.1} parent=87 // pred_fallthru
          _
        // Predicated region
        $region93: #{tpu_custom_call.1} parent=87 // pred_check
          %p574 = pneg %p123
        $region94: #{tpu_custom_call.1} parent=87 // pred_check_branch
          %576 = sbr.rel (%p574) target = $region96
        $region95: #{tpu_custom_call.1} parent=87 // pred_region
          %577 = dma.done [#allocation6], 3072
        $region96: #{tpu_custom_call.1} parent=87 // pred_fallthru
          _
        // Predicated region
        $region97: #{tpu_custom_call.1} parent=87 // pred_check
          %p578 = pneg %p165
        $region98: #{tpu_custom_call.1} parent=87 // pred_check_branch
          %580 = sbr.rel (%p578) target = $region100
        $region99: #{tpu_custom_call.1} parent=87 // pred_region
          %581 = dma.done [#allocation6], 1024
        $region100: #{tpu_custom_call.1} parent=87 // pred_fallthru
          _
        // Predicated region
        $region101: #{tpu_custom_call.1} parent=87 // pred_check
          %p582 = pneg %p249
        $region102: #{tpu_custom_call.1} parent=87 // pred_check_branch
          %584 = sbr.rel (%p582) target = $region104
        $region103: #{tpu_custom_call.1} parent=87 // pred_region
          %585 = dma.done [#allocation9], 512
        $region104: #{tpu_custom_call.1} parent=87 // pred_fallthru
          _
        %p586 = scmp.lt.s32.totalorder %s39, 1
        %s587 = scalar_select %p586, %s39, 1
        %s588 = smul.addr %s587, 48
        %s589 = smul.addr %s588, 4
        %s590 = scalar_lea.vmem %s0, %s589
        %p591 = pneg %p60
        %p592 = pneg %p57
        %p593 = pneg %p81
        %p594 = pneg %p78
        %p595 = pneg %p102
        %p596 = pneg %p99
        %p597 = pneg %p123
        %p598 = pneg %p120
        %p599 = pneg %p144
        %p600 = pneg %p141
        %p601 = pneg %p165
        %p602 = pneg %p162
        %p603 = pneg %p186
        %p604 = pneg %p183
        %p605 = pneg %p207
        %p606 = pneg %p204
        %p607 = pneg %p228
        %p608 = pneg %p225
        %p609 = pneg %p249
        %p610 = pneg %p246
        %p611 = pneg %p270
        %p612 = pneg %p267
        %p613 = pneg %p291
        %p614 = pneg %p288
        %p615 = pneg %p312
        %p616 = pneg %p309
        %p617 = pneg %p333
        %p618 = pneg %p330
        %p619 = pneg %p354
        %p620 = pneg %p351
        %p621 = pneg %p375
        %p622 = pneg %p372
        %p623 = pneg %p396
        %p624 = pneg %p393
        %p625 = pneg %p422
        %p626 = pneg %p419
        %s627 = sand.u32 %s409, 1
        %s628 = scalar_lea.sflag [#allocation4], %s627
        %s629 = sand.u32 %s409, 1
        %s630 = smul.addr %s629, 16
        %s631 = scalar_lea.vmem [#allocation10], %s630
        %p632 = pneg %p448
        %p633 = pneg %p445
        %s634 = sand.u32 %s435, 1
        %s635 = scalar_lea.sflag [#allocation12], %s634
        %s636 = sand.u32 %s435, 1
        %s637 = smul.addr %s636, 24
        %s638 = scalar_lea.vmem [#allocation11], %s637
        %p639 = scmp.lt.s32.totalorder %s39, 1
        %s640 = scalar_select %p639, %s39, 1
        %s641 = smul.addr %s640, 48
        %s642 = smul.addr %s641, 4
        %s643 = scalar_lea.vmem %s0, %s642
        %v645 = vld [vmem:[%s643] sm:$0xff]
        %v646 = vld [vmem:[%s643 + $0x8] sm:$0xff]
        %v647 = vld [vmem:[%s643 + $0x10] sm:$0xff]
        %v648 = vld [vmem:[%s643 + $0x18] sm:$0xff]
        %v649 = vld [vmem:[%s643 + $0x20] sm:$0xff]
        %v650 = vld [vmem:[%s643 + $0x28] sm:$0xff]
        %v651 = vld [vmem:[%s643 + $0x30] sm:$0xff]
        %v652 = vld [vmem:[%s643 + $0x38] sm:$0xff]
        %v653 = vld [vmem:[%s643 + $0x40] sm:$0xff]
        %v654 = vld [vmem:[%s643 + $0x48] sm:$0xff]
        %v655 = vld [vmem:[%s643 + $0x50] sm:$0xff]
        %v656 = vld [vmem:[%s643 + $0x58] sm:$0xff]
        %v657 = vld [vmem:[%s643 + $0x60] sm:$0xff]
        %v658 = vld [vmem:[%s643 + $0x68] sm:$0xff]
        %v659 = vld [vmem:[%s643 + $0x70] sm:$0xff]
        %v660 = vld [vmem:[%s643 + $0x78] sm:$0xff]
        %v661 = vld [vmem:[%s643 + $0x80] sm:$0xff]
        %v662 = vld [vmem:[%s643 + $0x88] sm:$0xff]
        %v663 = vld [vmem:[%s643 + $0x90] sm:$0xff]
        %v664 = vld [vmem:[%s643 + $0x98] sm:$0xff]
        %v665 = vld [vmem:[%s643 + $0xa0] sm:$0xff]
        %v666 = vld [vmem:[%s643 + $0xa8] sm:$0xff]
        %v667 = vld [vmem:[%s643 + $0xb0] sm:$0xff]
        %v668 = vld [vmem:[%s643 + $0xb8] sm:$0xff]
        %v669 = vld [vmem:[#allocation2] sm:$0xff]
        %v670 = vld [vmem:[#allocation2 + $0x8] sm:$0xff]
        %v671 = vld [vmem:[#allocation2 + $0x10] sm:$0xff]
        %v672 = vld [vmem:[#allocation2 + $0x18] sm:$0xff]
        %v673 = vld [vmem:[#allocation2 + $0x20] sm:$0xff]
        %v674 = vld [vmem:[#allocation2 + $0x28] sm:$0xff]
        %v675 = vld [vmem:[#allocation2 + $0x30] sm:$0xff]
        %v676 = vld [vmem:[#allocation2 + $0x38] sm:$0xff]
        %v677 = vld [vmem:[#allocation2 + $0x40] sm:$0xff]
        %v678 = vld [vmem:[#allocation2 + $0x48] sm:$0xff]
        %v679 = vld [vmem:[#allocation2 + $0x50] sm:$0xff]
        %v680 = vld [vmem:[#allocation2 + $0x58] sm:$0xff]
        %v681 = vld [vmem:[#allocation2 + $0x60] sm:$0xff]
        %v682 = vld [vmem:[#allocation2 + $0x68] sm:$0xff]
        %v683 = vld [vmem:[#allocation2 + $0x70] sm:$0xff]
        %v684 = vld [vmem:[#allocation2 + $0x78] sm:$0xff]
        %v685 = vld [vmem:[#allocation2 + $0x80] sm:$0xff]
        %v686 = vld [vmem:[#allocation2 + $0x88] sm:$0xff]
        %v687 = vld [vmem:[#allocation2 + $0x90] sm:$0xff]
        %v688 = vld [vmem:[#allocation2 + $0x98] sm:$0xff]
        %v689 = vld [vmem:[#allocation2 + $0xa0] sm:$0xff]
        %v690 = vld [vmem:[#allocation2 + $0xa8] sm:$0xff]
        %v691 = vld [vmem:[#allocation2 + $0xb0] sm:$0xff]
        %v692 = vld [vmem:[#allocation2 + $0xb8] sm:$0x11]
        %v717 = vunpack.c.l.b16 %v669
        %v718 = vunpack.c.h.b16 %v669
        %v719 = vunpack.c.l.b16 %v670
        %v720 = vunpack.c.h.b16 %v670
        %v721 = vunpack.c.l.b16 %v671
        %v722 = vunpack.c.h.b16 %v671
        %v723 = vunpack.c.l.b16 %v672
        %v724 = vunpack.c.h.b16 %v672
        %v725 = vunpack.c.l.b16 %v673
        %v726 = vunpack.c.h.b16 %v673
        %v727 = vunpack.c.l.b16 %v674
        %v728 = vunpack.c.h.b16 %v674
        %v729 = vunpack.c.l.b16 %v675
        %v730 = vunpack.c.h.b16 %v675
        %v731 = vunpack.c.l.b16 %v676
        %v732 = vunpack.c.h.b16 %v676
        %v733 = vunpack.c.l.b16 %v677
        %v734 = vunpack.c.h.b16 %v677
        %v735 = vunpack.c.l.b16 %v678
        %v736 = vunpack.c.h.b16 %v678
        %v737 = vunpack.c.l.b16 %v679
        %v738 = vunpack.c.h.b16 %v679
        %v739 = vunpack.c.l.b16 %v680
        %v740 = vunpack.c.h.b16 %v680
        %v741 = vunpack.c.l.b16 %v681
        %v742 = vunpack.c.h.b16 %v681
        %v743 = vunpack.c.l.b16 %v682
        %v744 = vunpack.c.h.b16 %v682
        %v745 = vunpack.c.l.b16 %v683
        %v746 = vunpack.c.h.b16 %v683
        %v747 = vunpack.c.l.b16 %v684
        %v748 = vunpack.c.h.b16 %v684
        %v749 = vunpack.c.l.b16 %v685
        %v750 = vunpack.c.h.b16 %v685
        %v751 = vunpack.c.l.b16 %v686
        %v752 = vunpack.c.h.b16 %v686
        %v753 = vunpack.c.l.b16 %v687
        %v754 = vunpack.c.h.b16 %v687
        %v755 = vunpack.c.l.b16 %v688
        %v756 = vunpack.c.h.b16 %v688
        %v757 = vunpack.c.l.b16 %v689
        %v758 = vunpack.c.h.b16 %v689
        %v759 = vunpack.c.l.b16 %v690
        %v760 = vunpack.c.h.b16 %v690
        %v761 = vunpack.c.l.b16 %v691
        %v762 = vunpack.c.h.b16 %v691
        %v763 = vunpack.c.l.b16 %v692
        %v764 = vunpack.c.h.b16 %v692
        %v765 = vpack.c.b16 %v719, %v717
        %v766 = vpack.c.b16 %v720, %v718
        %v767 = vpack.c.b16 %v723, %v721
        %v768 = vpack.c.b16 %v724, %v722
        %v769 = vpack.c.b16 %v727, %v725
        %v770 = vpack.c.b16 %v728, %v726
        %v771 = vpack.c.b16 %v731, %v729
        %v772 = vpack.c.b16 %v732, %v730
        %v773 = vpack.c.b16 %v735, %v733
        %v774 = vpack.c.b16 %v736, %v734
        %v775 = vpack.c.b16 %v739, %v737
        %v776 = vpack.c.b16 %v740, %v738
        %v777 = vpack.c.b16 %v743, %v741
        %v778 = vpack.c.b16 %v744, %v742
        %v779 = vpack.c.b16 %v747, %v745
        %v780 = vpack.c.b16 %v748, %v746
        %v781 = vpack.c.b16 %v751, %v749
        %v782 = vpack.c.b16 %v752, %v750
        %v783 = vpack.c.b16 %v755, %v753
        %v784 = vpack.c.b16 %v756, %v754
        %v785 = vpack.c.b16 %v759, %v757
        %v786 = vpack.c.b16 %v760, %v758
        %v787 = vpack.c.b16 %v763, %v761
        %v788 = vpack.c.b16 %v764, %v762
        %v825 = vunpack.c.l.b16 %v645
        %v826 = vunpack.c.h.b16 %v645
        %v827 = vunpack.c.l.b16 %v646
        %v828 = vunpack.c.h.b16 %v646
        %v829 = vunpack.c.l.b16 %v647
        %v830 = vunpack.c.h.b16 %v647
        %v831 = vunpack.c.l.b16 %v648
        %v832 = vunpack.c.h.b16 %v648
        %v833 = vunpack.c.l.b16 %v649
        %v834 = vunpack.c.h.b16 %v649
        %v835 = vunpack.c.l.b16 %v650
        %v836 = vunpack.c.h.b16 %v650
        %v837 = vunpack.c.l.b16 %v651
        %v838 = vunpack.c.h.b16 %v651
        %v839 = vunpack.c.l.b16 %v652
        %v840 = vunpack.c.h.b16 %v652
        %v841 = vunpack.c.l.b16 %v653
        %v842 = vunpack.c.h.b16 %v653
        %v843 = vunpack.c.l.b16 %v654
        %v844 = vunpack.c.h.b16 %v654
        %v845 = vunpack.c.l.b16 %v655
        %v846 = vunpack.c.h.b16 %v655
        %v847 = vunpack.c.l.b16 %v656
        %v848 = vunpack.c.h.b16 %v656
        %v849 = vunpack.c.l.b16 %v657
        %v850 = vunpack.c.h.b16 %v657
        %v851 = vunpack.c.l.b16 %v658
        %v852 = vunpack.c.h.b16 %v658
        %v853 = vunpack.c.l.b16 %v659
        %v854 = vunpack.c.h.b16 %v659
        %v855 = vunpack.c.l.b16 %v660
        %v856 = vunpack.c.h.b16 %v660
        %v857 = vunpack.c.l.b16 %v661
        %v858 = vunpack.c.h.b16 %v661
        %v859 = vunpack.c.l.b16 %v662
        %v860 = vunpack.c.h.b16 %v662
        %v861 = vunpack.c.l.b16 %v663
        %v862 = vunpack.c.h.b16 %v663
        %v863 = vunpack.c.l.b16 %v664
        %v864 = vunpack.c.h.b16 %v664
        %v865 = vunpack.c.l.b16 %v665
        %v866 = vunpack.c.h.b16 %v665
        %v867 = vunpack.c.l.b16 %v666
        %v868 = vunpack.c.h.b16 %v666
        %v869 = vunpack.c.l.b16 %v667
        %v870 = vunpack.c.h.b16 %v667
        %v871 = vunpack.c.l.b16 %v668
        %v872 = vunpack.c.h.b16 %v668
        %v873 = vpack.c.b16 %v827, %v825
        %v874 = vpack.c.b16 %v828, %v826
        %v875 = vpack.c.b16 %v831, %v829
        %v876 = vpack.c.b16 %v832, %v830
        %v877 = vpack.c.b16 %v835, %v833
        %v878 = vpack.c.b16 %v836, %v834
        %v879 = vpack.c.b16 %v839, %v837
        %v880 = vpack.c.b16 %v840, %v838
        %v881 = vpack.c.b16 %v843, %v841
        %v882 = vpack.c.b16 %v844, %v842
        %v883 = vpack.c.b16 %v847, %v845
        %v884 = vpack.c.b16 %v848, %v846
        %v885 = vpack.c.b16 %v851, %v849
        %v886 = vpack.c.b16 %v852, %v850
        %v887 = vpack.c.b16 %v855, %v853
        %v888 = vpack.c.b16 %v856, %v854
        %v889 = vpack.c.b16 %v859, %v857
        %v890 = vpack.c.b16 %v860, %v858
        %v891 = vpack.c.b16 %v863, %v861
        %v892 = vpack.c.b16 %v864, %v862
        %v893 = vpack.c.b16 %v867, %v865
        %v894 = vpack.c.b16 %v868, %v866
        %v895 = vpack.c.b16 %v871, %v869
        %v896 = vpack.c.b16 %v872, %v870
        %vm921 = vcmask 523264
        %v923 = vsel %vm921, %v766, 0
        %v926 = vsel %vm921, %v768, 0
        %v929 = vsel %vm921, %v770, 0
        %v932 = vsel %vm921, %v772, 0
        %v935 = vsel %vm921, %v774, 0
        %v938 = vsel %vm921, %v776, 0
        %v941 = vsel %vm921, %v778, 0
        %v944 = vsel %vm921, %v780, 0
        %v947 = vsel %vm921, %v782, 0
        %v950 = vsel %vm921, %v784, 0
        %v953 = vsel %vm921, %v786, 0
        %v956 = vsel %vm921, %v788, 0
        %958 = vmatprep.subr.bf16.mxu0 %v874
        %959 = vmatpush1.bf16.msra.mxu0 %v873
        %960 = vmatprep.subr.bf16.mxu0 %v876
        %961 = vmatpush1.bf16.msra.mxu0 %v875
        %962 = vmatprep.subr.bf16.mxu0 %v878
        %963 = vmatpush1.bf16.msra.mxu0 %v877
        %964 = vmatprep.subr.bf16.mxu0 %v880
        %965 = vmatpush1.bf16.msra.mxu0 %v879
        %966 = vmatprep.subr.bf16.mxu0 %v882
        %967 = vmatpush1.bf16.msra.mxu0 %v881
        %968 = vmatprep.subr.bf16.mxu0 %v884
        %969 = vmatpush1.bf16.msra.mxu0 %v883
        %970 = vmatprep.subr.bf16.mxu0 %v886
        %971 = vmatpush1.bf16.msra.mxu0 %v885
        %972 = vmatprep.subr.bf16.mxu0 %v888
        %973 = vmatpush1.bf16.msra.mxu0 %v887
        %974 = vmatprep.subr.bf16.mxu0 %v890
        %975 = vmatpush1.bf16.msra.mxu0 %v889
        %976 = vmatprep.subr.bf16.mxu0 %v892
        %977 = vmatpush1.bf16.msra.mxu0 %v891
        %978 = vmatprep.subr.bf16.mxu0 %v894
        %979 = vmatpush1.bf16.msra.mxu0 %v893
        %980 = vmatprep.subr.bf16.mxu0 %v896
        %981 = vmatpush1.bf16.msra.mxu0 %v895
        %982 = vmatprep.subr.bf16.mxu0 0
        %983 = vmatpush1.bf16.msra.mxu0 0
        %984 = vmatprep.subr.bf16.mxu0 0
        %985 = vmatpush1.bf16.msra.mxu0 0
        %986 = vmatprep.subr.bf16.mxu0 0
        %987 = vmatpush1.bf16.msra.mxu0 0
        %988 = vmatprep.subr.bf16.mxu0 0
        %989 = vmatpush1.bf16.msra.mxu0 0
        %990 = vmatprep.mubr.bf16.mxu0 %v923
        %991 = vmatmul.mubr.bf16.gmra.mrb[0].mxu0 %v765
        %v992 = vpop.f32.mrb[0].mxu0
        %v993 = vadd.f32 0.0, %v992
        %v994 = vpop.f32.mrb[0].mxu0
        %v995 = vadd.f32 0.0, %v994
        %v996 = vpop.f32.mrb[0].mxu0
        %v997 = vadd.f32 0.0, %v996
        %v998 = vpop.f32.mrb[0].mxu0
        %v999 = vadd.f32 0.0, %v998
        %1000 = vmatprep.mubr.bf16.mxu0 %v926
        %1001 = vmatmul.mubr.bf16.gmra.mrb[0].mxu0 %v767
        %v1002 = vpop.f32.mrb[0].mxu0
        %v1003 = vadd.f32 0.0, %v1002
        %v1004 = vpop.f32.mrb[0].mxu0
        %v1005 = vadd.f32 0.0, %v1004
        %v1006 = vpop.f32.mrb[0].mxu0
        %v1007 = vadd.f32 0.0, %v1006
        %v1008 = vpop.f32.mrb[0].mxu0
        %v1009 = vadd.f32 0.0, %v1008
        %1010 = vmatprep.mubr.bf16.mxu0 %v929
        %1011 = vmatmul.mubr.bf16.gmra.mrb[0].mxu0 %v769
        %v1012 = vpop.f32.mrb[0].mxu0
        %v1013 = vadd.f32 0.0, %v1012
        %v1014 = vpop.f32.mrb[0].mxu0
        %v1015 = vadd.f32 0.0, %v1014
        %v1016 = vpop.f32.mrb[0].mxu0
        %v1017 = vadd.f32 0.0, %v1016
        %v1018 = vpop.f32.mrb[0].mxu0
        %v1019 = vadd.f32 0.0, %v1018
        %1020 = vmatprep.mubr.bf16.mxu0 %v932
        %1021 = vmatmul.mubr.bf16.gmra.mrb[0].mxu0 %v771
        %v1022 = vpop.f32.mrb[0].mxu0
        %v1023 = vadd.f32 0.0, %v1022
        %v1024 = vpop.f32.mrb[0].mxu0
        %v1025 = vadd.f32 0.0, %v1024
        %v1026 = vpop.f32.mrb[0].mxu0
        %v1027 = vadd.f32 0.0, %v1026
        %v1028 = vpop.f32.mrb[0].mxu0
        %v1029 = vadd.f32 0.0, %v1028
        %1030 = vmatprep.mubr.bf16.mxu0 %v935
        %1031 = vmatmul.mubr.bf16.gmra.mrb[0].mxu0 %v773
        %v1032 = vpop.f32.mrb[0].mxu0
        %v1033 = vadd.f32 0.0, %v1032
        %v1034 = vpop.f32.mrb[0].mxu0
        %v1035 = vadd.f32 0.0, %v1034
        %v1036 = vpop.f32.mrb[0].mxu0
        %v1037 = vadd.f32 0.0, %v1036
        %v1038 = vpop.f32.mrb[0].mxu0
        %v1039 = vadd.f32 0.0, %v1038
        %1040 = vmatprep.mubr.bf16.mxu0 %v938
        %1041 = vmatmul.mubr.bf16.gmra.mrb[0].mxu0 %v775
        %v1042 = vpop.f32.mrb[0].mxu0
        %v1043 = vadd.f32 0.0, %v1042
        %v1044 = vpop.f32.mrb[0].mxu0
        %v1045 = vadd.f32 0.0, %v1044
        %v1046 = vpop.f32.mrb[0].mxu0
        %v1047 = vadd.f32 0.0, %v1046
        %v1048 = vpop.f32.mrb[0].mxu0
        %v1049 = vadd.f32 0.0, %v1048
        %1050 = vmatprep.mubr.bf16.mxu0 %v941
        %1051 = vmatmul.mubr.bf16.gmra.mrb[0].mxu0 %v777
        %v1052 = vpop.f32.mrb[0].mxu0
        %v1053 = vadd.f32 0.0, %v1052
        %v1054 = vpop.f32.mrb[0].mxu0
        %v1055 = vadd.f32 0.0, %v1054
        %v1056 = vpop.f32.mrb[0].mxu0
        %v1057 = vadd.f32 0.0, %v1056
        %v1058 = vpop.f32.mrb[0].mxu0
        %v1059 = vadd.f32 0.0, %v1058
        %1060 = vmatprep.mubr.bf16.mxu0 %v944
        %1061 = vmatmul.mubr.bf16.gmra.mrb[0].mxu0 %v779
        %v1062 = vpop.f32.mrb[0].mxu0
        %v1063 = vadd.f32 0.0, %v1062
        %v1064 = vpop.f32.mrb[0].mxu0
        %v1065 = vadd.f32 0.0, %v1064
        %v1066 = vpop.f32.mrb[0].mxu0
        %v1067 = vadd.f32 0.0, %v1066
        %v1068 = vpop.f32.mrb[0].mxu0
        %v1069 = vadd.f32 0.0, %v1068
        %1070 = vmatprep.mubr.bf16.mxu0 %v947
        %1071 = vmatmul.mubr.bf16.gmra.mrb[0].mxu0 %v781
        %v1072 = vpop.f32.mrb[0].mxu0
        %v1073 = vadd.f32 0.0, %v1072
        %v1074 = vpop.f32.mrb[0].mxu0
        %v1075 = vadd.f32 0.0, %v1074
        %v1076 = vpop.f32.mrb[0].mxu0
        %v1077 = vadd.f32 0.0, %v1076
        %v1078 = vpop.f32.mrb[0].mxu0
        %v1079 = vadd.f32 0.0, %v1078
        %1080 = vmatprep.mubr.bf16.mxu0 %v950
        %1081 = vmatmul.mubr.bf16.gmra.mrb[0].mxu0 %v783
        %v1082 = vpop.f32.mrb[0].mxu0
        %v1083 = vadd.f32 0.0, %v1082
        %v1084 = vpop.f32.mrb[0].mxu0
        %v1085 = vadd.f32 0.0, %v1084
        %v1086 = vpop.f32.mrb[0].mxu0
        %v1087 = vadd.f32 0.0, %v1086
        %v1088 = vpop.f32.mrb[0].mxu0
        %v1089 = vadd.f32 0.0, %v1088
        %1090 = vmatprep.mubr.bf16.mxu0 %v953
        %1091 = vmatmul.mubr.bf16.gmra.mrb[0].mxu0 %v785
        %v1092 = vpop.f32.mrb[0].mxu0
        %v1093 = vadd.f32 0.0, %v1092
        %v1094 = vpop.f32.mrb[0].mxu0
        %v1095 = vadd.f32 0.0, %v1094
        %v1096 = vpop.f32.mrb[0].mxu0
        %v1097 = vadd.f32 0.0, %v1096
        %v1098 = vpop.f32.mrb[0].mxu0
        %v1099 = vadd.f32 0.0, %v1098
        %1100 = vmatprep.mubr.bf16.mxu0 %v956
        %1101 = vmatmul.mubr.bf16.gmra.mrb[0].mxu0 %v787
        %v1102 = vpop.f32.mrb[0].mxu0
        %v1103 = vadd.f32 0.0, %v1102
        %v1104 = vpop.f32.mrb[0].mxu0
        %v1105 = vadd.f32 0.0, %v1104
        %v1106 = vpop.f32.mrb[0].mxu0
        %v1107 = vadd.f32 0.0, %v1106
        %v1108 = vpop.f32.mrb[0].mxu0
        %v1109 = vadd.f32 0.0, %v1108
        %1110 = vdwg.mxu0
        %v1111 = vld [vmem:[%s2] sm:$0xff]
        %v1112 = vld [vmem:[%s2 + $0x8] sm:$0xff]
        %v1113 = vld [vmem:[%s2 + $0x10] sm:$0xff]
        %v1114 = vld [vmem:[%s2 + $0x18] sm:$0xff]
        %v1115 = vld [vmem:[%s2 + $0x20] sm:$0xff]
        %v1116 = vld [vmem:[%s2 + $0x28] sm:$0xff]
        %v1117 = vld [vmem:[%s2 + $0x30] sm:$0xff]
        %v1118 = vld [vmem:[%s2 + $0x38] sm:$0xff]
        %v1119 = vld [vmem:[%s2 + $0x40] sm:$0xff]
        %v1120 = vld [vmem:[%s2 + $0x48] sm:$0xff]
        %v1121 = vld [vmem:[%s2 + $0x50] sm:$0xff]
        %v1122 = vld [vmem:[%s2 + $0x58] sm:$0xff]
        %v1123 = vld [vmem:[%s2 + $0x60] sm:$0xff]
        %v1124 = vld [vmem:[%s2 + $0x68] sm:$0xff]
        %v1125 = vld [vmem:[%s2 + $0x70] sm:$0xff]
        %v1126 = vld [vmem:[%s2 + $0x78] sm:$0xff]
        %v1127 = vld [vmem:[%s2 + $0x80] sm:$0xff]
        %v1128 = vld [vmem:[%s2 + $0x88] sm:$0xff]
        %v1129 = vld [vmem:[%s2 + $0x90] sm:$0xff]
        %v1130 = vld [vmem:[%s2 + $0x98] sm:$0xff]
        %v1131 = vld [vmem:[%s2 + $0xa0] sm:$0xff]
        %v1132 = vld [vmem:[%s2 + $0xa8] sm:$0xff]
        %v1133 = vld [vmem:[%s2 + $0xb0] sm:$0xff]
        %v1134 = vld [vmem:[%s2 + $0xb8] sm:$0x3]
        %v1135 = vadd.f32 %v993, %v997
        %v1136 = vadd.f32 %v1135, %v1003
        %v1137 = vadd.f32 %v1136, %v1007
        %v1138 = vadd.f32 %v1137, %v1013
        %v1139 = vadd.f32 %v1138, %v1017
        %v1140 = vadd.f32 %v1139, %v1023
        %v1141 = vadd.f32 %v1140, %v1027
        %v1142 = vadd.f32 %v1141, %v1033
        %v1143 = vadd.f32 %v1142, %v1037
        %v1144 = vadd.f32 %v1143, %v1043
        %v1145 = vadd.f32 %v1144, %v1047
        %v1146 = vadd.f32 %v1145, %v1053
        %v1147 = vadd.f32 %v1146, %v1057
        %v1148 = vadd.f32 %v1147, %v1063
        %v1149 = vadd.f32 %v1148, %v1067
        %v1150 = vadd.f32 %v1149, %v1073
        %v1151 = vadd.f32 %v1150, %v1077
        %v1152 = vadd.f32 %v1151, %v1083
        %v1153 = vadd.f32 %v1152, %v1087
        %v1154 = vadd.f32 %v1153, %v1093
        %v1155 = vadd.f32 %v1154, %v1097
        %v1156 = vadd.f32 %v1155, %v1103
        %vm1157 = vcmask 1041408
        %v1158 = vsel %vm1157, %v1107, 0.0
        %v1159 = vadd.f32 %v1156, %v1158
        %v1160 = vrot.slane %v1159, 4
        %v1161 = vadd.f32 %v1159, %v1160
        %v1162 = vrot.slane %v1161, 2
        %v1163 = vadd.f32 %v1161, %v1162
        %v1164 = vrot.slane %v1163, 1
        %v1165 = vadd.f32 %v1163, %v1164
        %v1166 = vadd.f32 %v995, %v999
        %v1167 = vadd.f32 %v1166, %v1005
        %v1168 = vadd.f32 %v1167, %v1009
        %v1169 = vadd.f32 %v1168, %v1015
        %v1170 = vadd.f32 %v1169, %v1019
        %v1171 = vadd.f32 %v1170, %v1025
        %v1172 = vadd.f32 %v1171, %v1029
        %v1173 = vadd.f32 %v1172, %v1035
        %v1174 = vadd.f32 %v1173, %v1039
        %v1175 = vadd.f32 %v1174, %v1045
        %v1176 = vadd.f32 %v1175, %v1049
        %v1177 = vadd.f32 %v1176, %v1055
        %v1178 = vadd.f32 %v1177, %v1059
        %v1179 = vadd.f32 %v1178, %v1065
        %v1180 = vadd.f32 %v1179, %v1069
        %v1181 = vadd.f32 %v1180, %v1075
        %v1182 = vadd.f32 %v1181, %v1079
        %v1183 = vadd.f32 %v1182, %v1085
        %v1184 = vadd.f32 %v1183, %v1089
        %v1185 = vadd.f32 %v1184, %v1095
        %v1186 = vadd.f32 %v1185, %v1099
        %v1187 = vadd.f32 %v1186, %v1105
        %v1188 = vsel %vm1157, %v1109, 0.0
        %v1189 = vadd.f32 %v1187, %v1188
        %v1190 = vrot.slane %v1189, 4
        %v1191 = vadd.f32 %v1189, %v1190
        %v1192 = vrot.slane %v1191, 2
        %v1193 = vadd.f32 %v1191, %v1192
        %v1194 = vrot.slane %v1193, 1
        %v1195 = vadd.f32 %v1193, %v1194
        %v1196 = vmul.f32 %v1165, 0.005376344
        %v1197 = vmul.f32 %v1195, 0.005376344
        %v1198 = vmul.f32 %v993, %v993
        %v1199 = vmul.f32 %v995, %v995
        %v1200 = vmul.f32 %v997, %v997
        %v1201 = vmul.f32 %v999, %v999
        %v1202 = vmul.f32 %v1003, %v1003
        %v1203 = vmul.f32 %v1005, %v1005
        %v1204 = vmul.f32 %v1007, %v1007
        %v1205 = vmul.f32 %v1009, %v1009
        %v1206 = vmul.f32 %v1013, %v1013
        %v1207 = vmul.f32 %v1015, %v1015
        %v1208 = vmul.f32 %v1017, %v1017
        %v1209 = vmul.f32 %v1019, %v1019
        %v1210 = vmul.f32 %v1023, %v1023
        %v1211 = vmul.f32 %v1025, %v1025
        %v1212 = vmul.f32 %v1027, %v1027
        %v1213 = vmul.f32 %v1029, %v1029
        %v1214 = vmul.f32 %v1033, %v1033
        %v1215 = vmul.f32 %v1035, %v1035
        %v1216 = vmul.f32 %v1037, %v1037
        %v1217 = vmul.f32 %v1039, %v1039
        %v1218 = vmul.f32 %v1043, %v1043
        %v1219 = vmul.f32 %v1045, %v1045
        %v1220 = vmul.f32 %v1047, %v1047
        %v1221 = vmul.f32 %v1049, %v1049
        %v1222 = vmul.f32 %v1053, %v1053
        %v1223 = vmul.f32 %v1055, %v1055
        %v1224 = vmul.f32 %v1057, %v1057
        %v1225 = vmul.f32 %v1059, %v1059
        %v1226 = vmul.f32 %v1063, %v1063
        %v1227 = vmul.f32 %v1065, %v1065
        %v1228 = vmul.f32 %v1067, %v1067
        %v1229 = vmul.f32 %v1069, %v1069
        %v1230 = vmul.f32 %v1073, %v1073
        %v1231 = vmul.f32 %v1075, %v1075
        %v1232 = vmul.f32 %v1077, %v1077
        %v1233 = vmul.f32 %v1079, %v1079
        %v1234 = vmul.f32 %v1083, %v1083
        %v1235 = vmul.f32 %v1085, %v1085
        %v1236 = vmul.f32 %v1087, %v1087
        %v1237 = vmul.f32 %v1089, %v1089
        %v1238 = vmul.f32 %v1093, %v1093
        %v1239 = vmul.f32 %v1095, %v1095
        %v1240 = vmul.f32 %v1097, %v1097
        %v1241 = vmul.f32 %v1099, %v1099
        %v1242 = vmul.f32 %v1103, %v1103
        %v1243 = vmul.f32 %v1105, %v1105
        %v1244 = vmul.f32 %v1107, %v1107
        %v1245 = vmul.f32 %v1109, %v1109
        %v1246 = vadd.f32 %v1198, %v1200
        %v1247 = vadd.f32 %v1246, %v1202
        %v1248 = vadd.f32 %v1247, %v1204
        %v1249 = vadd.f32 %v1248, %v1206
        %v1250 = vadd.f32 %v1249, %v1208
        %v1251 = vadd.f32 %v1250, %v1210
        %v1252 = vadd.f32 %v1251, %v1212
        %v1253 = vadd.f32 %v1252, %v1214
        %v1254 = vadd.f32 %v1253, %v1216
        %v1255 = vadd.f32 %v1254, %v1218
        %v1256 = vadd.f32 %v1255, %v1220
        %v1257 = vadd.f32 %v1256, %v1222
        %v1258 = vadd.f32 %v1257, %v1224
        %v1259 = vadd.f32 %v1258, %v1226
        %v1260 = vadd.f32 %v1259, %v1228
        %v1261 = vadd.f32 %v1260, %v1230
        %v1262 = vadd.f32 %v1261, %v1232
        %v1263 = vadd.f32 %v1262, %v1234
        %v1264 = vadd.f32 %v1263, %v1236
        %v1265 = vadd.f32 %v1264, %v1238
        %v1266 = vadd.f32 %v1265, %v1240
        %v1267 = vadd.f32 %v1266, %v1242
        %v1268 = vsel %vm1157, %v1244, 0.0
        %v1269 = vadd.f32 %v1267, %v1268
        %v1270 = vrot.slane %v1269, 4
        %v1271 = vadd.f32 %v1269, %v1270
        %v1272 = vrot.slane %v1271, 2
        %v1273 = vadd.f32 %v1271, %v1272
        %v1274 = vrot.slane %v1273, 1
        %v1275 = vadd.f32 %v1273, %v1274
        %v1276 = vadd.f32 %v1199, %v1201
        %v1277 = vadd.f32 %v1276, %v1203
        %v1278 = vadd.f32 %v1277, %v1205
        %v1279 = vadd.f32 %v1278, %v1207
        %v1280 = vadd.f32 %v1279, %v1209
        %v1281 = vadd.f32 %v1280, %v1211
        %v1282 = vadd.f32 %v1281, %v1213
        %v1283 = vadd.f32 %v1282, %v1215
        %v1284 = vadd.f32 %v1283, %v1217
        %v1285 = vadd.f32 %v1284, %v1219
        %v1286 = vadd.f32 %v1285, %v1221
        %v1287 = vadd.f32 %v1286, %v1223
        %v1288 = vadd.f32 %v1287, %v1225
        %v1289 = vadd.f32 %v1288, %v1227
        %v1290 = vadd.f32 %v1289, %v1229
        %v1291 = vadd.f32 %v1290, %v1231
        %v1292 = vadd.f32 %v1291, %v1233
        %v1293 = vadd.f32 %v1292, %v1235
        %v1294 = vadd.f32 %v1293, %v1237
        %v1295 = vadd.f32 %v1294, %v1239
        %v1296 = vadd.f32 %v1295, %v1241
        %v1297 = vadd.f32 %v1296, %v1243
        %v1298 = vsel %vm1157, %v1245, 0.0
        %v1299 = vadd.f32 %v1297, %v1298
        %v1300 = vrot.slane %v1299, 4
        %v1301 = vadd.f32 %v1299, %v1300
        %v1302 = vrot.slane %v1301, 2
        %v1303 = vadd.f32 %v1301, %v1302
        %v1304 = vrot.slane %v1303, 1
        %v1305 = vadd.f32 %v1303, %v1304
        %v1306 = vmul.f32 %v1275, 0.005376344
        %v1307 = vmul.f32 %v1305, 0.005376344
        %v1308 = vmul.f32 %v1196, %v1196
        %v1309 = vmul.f32 %v1197, %v1197
        %v1310 = vsub.f32 %v1306, %v1308
        %v1311 = vsub.f32 %v1307, %v1309
        %v1312 = vsub.f32 %v993, %v1196
        %v1313 = vsub.f32 %v995, %v1197
        %v1314 = vsub.f32 %v997, %v1196
        %v1315 = vsub.f32 %v999, %v1197
        %v1316 = vsub.f32 %v1003, %v1196
        %v1317 = vsub.f32 %v1005, %v1197
        %v1318 = vsub.f32 %v1007, %v1196
        %v1319 = vsub.f32 %v1009, %v1197
        %v1320 = vsub.f32 %v1013, %v1196
        %v1321 = vsub.f32 %v1015, %v1197
        %v1322 = vsub.f32 %v1017, %v1196
        %v1323 = vsub.f32 %v1019, %v1197
        %v1324 = vsub.f32 %v1023, %v1196
        %v1325 = vsub.f32 %v1025, %v1197
        %v1326 = vsub.f32 %v1027, %v1196
        %v1327 = vsub.f32 %v1029, %v1197
        %v1328 = vsub.f32 %v1033, %v1196
        %v1329 = vsub.f32 %v1035, %v1197
        %v1330 = vsub.f32 %v1037, %v1196
        %v1331 = vsub.f32 %v1039, %v1197
        %v1332 = vsub.f32 %v1043, %v1196
        %v1333 = vsub.f32 %v1045, %v1197
        %v1334 = vsub.f32 %v1047, %v1196
        %v1335 = vsub.f32 %v1049, %v1197
        %v1336 = vsub.f32 %v1053, %v1196
        %v1337 = vsub.f32 %v1055, %v1197
        %v1338 = vsub.f32 %v1057, %v1196
        %v1339 = vsub.f32 %v1059, %v1197
        %v1340 = vsub.f32 %v1063, %v1196
        %v1341 = vsub.f32 %v1065, %v1197
        %v1342 = vsub.f32 %v1067, %v1196
        %v1343 = vsub.f32 %v1069, %v1197
        %v1344 = vsub.f32 %v1073, %v1196
        %v1345 = vsub.f32 %v1075, %v1197
        %v1346 = vsub.f32 %v1077, %v1196
        %v1347 = vsub.f32 %v1079, %v1197
        %v1348 = vsub.f32 %v1083, %v1196
        %v1349 = vsub.f32 %v1085, %v1197
        %v1350 = vsub.f32 %v1087, %v1196
        %v1351 = vsub.f32 %v1089, %v1197
        %v1352 = vsub.f32 %v1093, %v1196
        %v1353 = vsub.f32 %v1095, %v1197
        %v1354 = vsub.f32 %v1097, %v1196
        %v1355 = vsub.f32 %v1099, %v1197
        %v1356 = vsub.f32 %v1103, %v1196
        %v1357 = vsub.f32 %v1105, %v1197
        %v1358 = vsub.f32 %v1107, %v1196
        %v1359 = vsub.f32 %v1109, %v1197
        %v1360 = vadd.f32 %v1310, 1e-05
        %v1361 = vadd.f32 %v1311, 1e-05
        %v1362 = vrsqrt.pop %v1360
        %v1363 = vrsqrt.pop %v1361
        %v1364 = vmul.f32 %v1312, %v1362
        %v1365 = vmul.f32 %v1313, %v1363
        %v1366 = vmul.f32 %v1314, %v1362
        %v1367 = vmul.f32 %v1315, %v1363
        %v1368 = vmul.f32 %v1316, %v1362
        %v1369 = vmul.f32 %v1317, %v1363
        %v1370 = vmul.f32 %v1318, %v1362
        %v1371 = vmul.f32 %v1319, %v1363
        %v1372 = vmul.f32 %v1320, %v1362
        %v1373 = vmul.f32 %v1321, %v1363
        %v1374 = vmul.f32 %v1322, %v1362
        %v1375 = vmul.f32 %v1323, %v1363
        %v1376 = vmul.f32 %v1324, %v1362
        %v1377 = vmul.f32 %v1325, %v1363
        %v1378 = vmul.f32 %v1326, %v1362
        %v1379 = vmul.f32 %v1327, %v1363
        %v1380 = vmul.f32 %v1328, %v1362
        %v1381 = vmul.f32 %v1329, %v1363
        %v1382 = vmul.f32 %v1330, %v1362
        %v1383 = vmul.f32 %v1331, %v1363
        %v1384 = vmul.f32 %v1332, %v1362
        %v1385 = vmul.f32 %v1333, %v1363
        %v1386 = vmul.f32 %v1334, %v1362
        %v1387 = vmul.f32 %v1335, %v1363
        %v1388 = vmul.f32 %v1336, %v1362
        %v1389 = vmul.f32 %v1337, %v1363
        %v1390 = vmul.f32 %v1338, %v1362
        %v1391 = vmul.f32 %v1339, %v1363
        %v1392 = vmul.f32 %v1340, %v1362
        %v1393 = vmul.f32 %v1341, %v1363
        %v1394 = vmul.f32 %v1342, %v1362
        %v1395 = vmul.f32 %v1343, %v1363
        %v1396 = vmul.f32 %v1344, %v1362
        %v1397 = vmul.f32 %v1345, %v1363
        %v1398 = vmul.f32 %v1346, %v1362
        %v1399 = vmul.f32 %v1347, %v1363
        %v1400 = vmul.f32 %v1348, %v1362
        %v1401 = vmul.f32 %v1349, %v1363
        %v1402 = vmul.f32 %v1350, %v1362
        %v1403 = vmul.f32 %v1351, %v1363
        %v1404 = vmul.f32 %v1352, %v1362
        %v1405 = vmul.f32 %v1353, %v1363
        %v1406 = vmul.f32 %v1354, %v1362
        %v1407 = vmul.f32 %v1355, %v1363
        %v1408 = vmul.f32 %v1356, %v1362
        %v1409 = vmul.f32 %v1357, %v1363
        %v1410 = vmul.f32 %v1358, %v1362
        %v1411 = vmul.f32 %v1359, %v1363
        %1413 = vset.pattern.permute.xlu0 0
        %1414 = vperm.xlu0 %1413, %v1111
        %v1415 = vpop.permute.xlu0 %1414
        %1418 = vset.pattern.permute.xlu0 0
        %1419 = vperm.xlu0 %1418, %v1112
        %v1420 = vpop.permute.xlu0 %1419
        %1423 = vset.pattern.permute.xlu0 0
        %1424 = vperm.xlu0 %1423, %v1113
        %v1425 = vpop.permute.xlu0 %1424
        %1428 = vset.pattern.permute.xlu0 0
        %1429 = vperm.xlu0 %1428, %v1114
        %v1430 = vpop.permute.xlu0 %1429
        %1433 = vset.pattern.permute.xlu0 0
        %1434 = vperm.xlu0 %1433, %v1115
        %v1435 = vpop.permute.xlu0 %1434
        %1438 = vset.pattern.permute.xlu0 0
        %1439 = vperm.xlu0 %1438, %v1116
        %v1440 = vpop.permute.xlu0 %1439
        %1443 = vset.pattern.permute.xlu0 0
        %1444 = vperm.xlu0 %1443, %v1117
        %v1445 = vpop.permute.xlu0 %1444
        %1448 = vset.pattern.permute.xlu0 0
        %1449 = vperm.xlu0 %1448, %v1118
        %v1450 = vpop.permute.xlu0 %1449
        %1453 = vset.pattern.permute.xlu0 0
        %1454 = vperm.xlu0 %1453, %v1119
        %v1455 = vpop.permute.xlu0 %1454
        %1458 = vset.pattern.permute.xlu0 0
        %1459 = vperm.xlu0 %1458, %v1120
        %v1460 = vpop.permute.xlu0 %1459
        %1463 = vset.pattern.permute.xlu0 0
        %1464 = vperm.xlu0 %1463, %v1121
        %v1465 = vpop.permute.xlu0 %1464
        %1468 = vset.pattern.permute.xlu0 0
        %1469 = vperm.xlu0 %1468, %v1122
        %v1470 = vpop.permute.xlu0 %1469
        %1473 = vset.pattern.permute.xlu0 0
        %1474 = vperm.xlu0 %1473, %v1123
        %v1475 = vpop.permute.xlu0 %1474
        %1478 = vset.pattern.permute.xlu0 0
        %1479 = vperm.xlu0 %1478, %v1124
        %v1480 = vpop.permute.xlu0 %1479
        %1483 = vset.pattern.permute.xlu0 0
        %1484 = vperm.xlu0 %1483, %v1125
        %v1485 = vpop.permute.xlu0 %1484
        %1488 = vset.pattern.permute.xlu0 0
        %1489 = vperm.xlu0 %1488, %v1126
        %v1490 = vpop.permute.xlu0 %1489
        %1493 = vset.pattern.permute.xlu0 0
        %1494 = vperm.xlu0 %1493, %v1127
        %v1495 = vpop.permute.xlu0 %1494
        %1498 = vset.pattern.permute.xlu0 0
        %1499 = vperm.xlu0 %1498, %v1128
        %v1500 = vpop.permute.xlu0 %1499
        %1503 = vset.pattern.permute.xlu0 0
        %1504 = vperm.xlu0 %1503, %v1129
        %v1505 = vpop.permute.xlu0 %1504
        %1508 = vset.pattern.permute.xlu0 0
        %1509 = vperm.xlu0 %1508, %v1130
        %v1510 = vpop.permute.xlu0 %1509
        %1513 = vset.pattern.permute.xlu0 0
        %1514 = vperm.xlu0 %1513, %v1131
        %v1515 = vpop.permute.xlu0 %1514
        %1518 = vset.pattern.permute.xlu0 0
        %1519 = vperm.xlu0 %1518, %v1132
        %v1520 = vpop.permute.xlu0 %1519
        %1523 = vset.pattern.permute.xlu0 0
        %1524 = vperm.xlu0 %1523, %v1133
        %v1525 = vpop.permute.xlu0 %1524
        %1528 = vset.pattern.permute.xlu0 0
        %1529 = vperm.xlu0 %1528, %v1134
        %v1530 = vpop.permute.xlu0 %1529
        %v1532 = vmul.f32 %v1364, %v1415
        %v1533 = vmul.f32 %v1365, %v1415
        %v1534 = vmul.f32 %v1366, %v1420
        %v1535 = vmul.f32 %v1367, %v1420
        %v1536 = vmul.f32 %v1368, %v1425
        %v1537 = vmul.f32 %v1369, %v1425
        %v1538 = vmul.f32 %v1370, %v1430
        %v1539 = vmul.f32 %v1371, %v1430
        %v1540 = vmul.f32 %v1372, %v1435
        %v1541 = vmul.f32 %v1373, %v1435
        %v1542 = vmul.f32 %v1374, %v1440
        %v1543 = vmul.f32 %v1375, %v1440
        %v1544 = vmul.f32 %v1376, %v1445
        %v1545 = vmul.f32 %v1377, %v1445
        %v1546 = vmul.f32 %v1378, %v1450
        %v1547 = vmul.f32 %v1379, %v1450
        %v1548 = vmul.f32 %v1380, %v1455
        %v1549 = vmul.f32 %v1381, %v1455
        %v1550 = vmul.f32 %v1382, %v1460
        %v1551 = vmul.f32 %v1383, %v1460
        %v1552 = vmul.f32 %v1384, %v1465
        %v1553 = vmul.f32 %v1385, %v1465
        %v1554 = vmul.f32 %v1386, %v1470
        %v1555 = vmul.f32 %v1387, %v1470
        %v1556 = vmul.f32 %v1388, %v1475
        %v1557 = vmul.f32 %v1389, %v1475
        %v1558 = vmul.f32 %v1390, %v1480
        %v1559 = vmul.f32 %v1391, %v1480
        %v1560 = vmul.f32 %v1392, %v1485
        %v1561 = vmul.f32 %v1393, %v1485
        %v1562 = vmul.f32 %v1394, %v1490
        %v1563 = vmul.f32 %v1395, %v1490
        %v1564 = vmul.f32 %v1396, %v1495
        %v1565 = vmul.f32 %v1397, %v1495
        %v1566 = vmul.f32 %v1398, %v1500
        %v1567 = vmul.f32 %v1399, %v1500
        %v1568 = vmul.f32 %v1400, %v1505
        %v1569 = vmul.f32 %v1401, %v1505
        %v1570 = vmul.f32 %v1402, %v1510
        %v1571 = vmul.f32 %v1403, %v1510
        %v1572 = vmul.f32 %v1404, %v1515
        %v1573 = vmul.f32 %v1405, %v1515
        %v1574 = vmul.f32 %v1406, %v1520
        %v1575 = vmul.f32 %v1407, %v1520
        %v1576 = vmul.f32 %v1408, %v1525
        %v1577 = vmul.f32 %v1409, %v1525
        %v1578 = vmul.f32 %v1410, %v1530
        %v1579 = vmul.f32 %v1411, %v1530
        %1580 = vset.pattern.permute.xlu0 1
        %1581 = vperm.xlu0 %1580, %v1111
        %v1582 = vpop.permute.xlu0 %1581
        %1584 = vset.pattern.permute.xlu0 1
        %1585 = vperm.xlu0 %1584, %v1112
        %v1586 = vpop.permute.xlu0 %1585
        %1588 = vset.pattern.permute.xlu0 1
        %1589 = vperm.xlu0 %1588, %v1113
        %v1590 = vpop.permute.xlu0 %1589
        %1592 = vset.pattern.permute.xlu0 1
        %1593 = vperm.xlu0 %1592, %v1114
        %v1594 = vpop.permute.xlu0 %1593
        %1596 = vset.pattern.permute.xlu0 1
        %1597 = vperm.xlu0 %1596, %v1115
        %v1598 = vpop.permute.xlu0 %1597
        %1600 = vset.pattern.permute.xlu0 1
        %1601 = vperm.xlu0 %1600, %v1116
        %v1602 = vpop.permute.xlu0 %1601
        %1604 = vset.pattern.permute.xlu0 1
        %1605 = vperm.xlu0 %1604, %v1117
        %v1606 = vpop.permute.xlu0 %1605
        %1608 = vset.pattern.permute.xlu0 1
        %1609 = vperm.xlu0 %1608, %v1118
        %v1610 = vpop.permute.xlu0 %1609
        %1612 = vset.pattern.permute.xlu0 1
        %1613 = vperm.xlu0 %1612, %v1119
        %v1614 = vpop.permute.xlu0 %1613
        %1616 = vset.pattern.permute.xlu0 1
        %1617 = vperm.xlu0 %1616, %v1120
        %v1618 = vpop.permute.xlu0 %1617
        %1620 = vset.pattern.permute.xlu0 1
        %1621 = vperm.xlu0 %1620, %v1121
        %v1622 = vpop.permute.xlu0 %1621
        %1624 = vset.pattern.permute.xlu0 1
        %1625 = vperm.xlu0 %1624, %v1122
        %v1626 = vpop.permute.xlu0 %1625
        %1628 = vset.pattern.permute.xlu0 1
        %1629 = vperm.xlu0 %1628, %v1123
        %v1630 = vpop.permute.xlu0 %1629
        %1632 = vset.pattern.permute.xlu0 1
        %1633 = vperm.xlu0 %1632, %v1124
        %v1634 = vpop.permute.xlu0 %1633
        %1636 = vset.pattern.permute.xlu0 1
        %1637 = vperm.xlu0 %1636, %v1125
        %v1638 = vpop.permute.xlu0 %1637
        %1640 = vset.pattern.permute.xlu0 1
        %1641 = vperm.xlu0 %1640, %v1126
        %v1642 = vpop.permute.xlu0 %1641
        %1644 = vset.pattern.permute.xlu0 1
        %1645 = vperm.xlu0 %1644, %v1127
        %v1646 = vpop.permute.xlu0 %1645
        %1648 = vset.pattern.permute.xlu0 1
        %1649 = vperm.xlu0 %1648, %v1128
        %v1650 = vpop.permute.xlu0 %1649
        %1652 = vset.pattern.permute.xlu0 1
        %1653 = vperm.xlu0 %1652, %v1129
        %v1654 = vpop.permute.xlu0 %1653
        %1656 = vset.pattern.permute.xlu0 1
        %1657 = vperm.xlu0 %1656, %v1130
        %v1658 = vpop.permute.xlu0 %1657
        %1660 = vset.pattern.permute.xlu0 1
        %1661 = vperm.xlu0 %1660, %v1131
        %v1662 = vpop.permute.xlu0 %1661
        %1664 = vset.pattern.permute.xlu0 1
        %1665 = vperm.xlu0 %1664, %v1132
        %v1666 = vpop.permute.xlu0 %1665
        %1668 = vset.pattern.permute.xlu0 1
        %1669 = vperm.xlu0 %1668, %v1133
        %v1670 = vpop.permute.xlu0 %1669
        %1672 = vset.pattern.permute.xlu0 1
        %1673 = vperm.xlu0 %1672, %v1134
        %v1674 = vpop.permute.xlu0 %1673
        %v1676 = vadd.f32 %v1532, %v1582
        %v1677 = vadd.f32 %v1533, %v1582
        %v1678 = vadd.f32 %v1534, %v1586
        %v1679 = vadd.f32 %v1535, %v1586
        %v1680 = vadd.f32 %v1536, %v1590
        %v1681 = vadd.f32 %v1537, %v1590
        %v1682 = vadd.f32 %v1538, %v1594
        %v1683 = vadd.f32 %v1539, %v1594
        %v1684 = vadd.f32 %v1540, %v1598
        %v1685 = vadd.f32 %v1541, %v1598
        %v1686 = vadd.f32 %v1542, %v1602
        %v1687 = vadd.f32 %v1543, %v1602
        %v1688 = vadd.f32 %v1544, %v1606
        %v1689 = vadd.f32 %v1545, %v1606
        %v1690 = vadd.f32 %v1546, %v1610
        %v1691 = vadd.f32 %v1547, %v1610
        %v1692 = vadd.f32 %v1548, %v1614
        %v1693 = vadd.f32 %v1549, %v1614
        %v1694 = vadd.f32 %v1550, %v1618
        %v1695 = vadd.f32 %v1551, %v1618
        %v1696 = vadd.f32 %v1552, %v1622
        %v1697 = vadd.f32 %v1553, %v1622
        %v1698 = vadd.f32 %v1554, %v1626
        %v1699 = vadd.f32 %v1555, %v1626
        %v1700 = vadd.f32 %v1556, %v1630
        %v1701 = vadd.f32 %v1557, %v1630
        %v1702 = vadd.f32 %v1558, %v1634
        %v1703 = vadd.f32 %v1559, %v1634
        %v1704 = vadd.f32 %v1560, %v1638
        %v1705 = vadd.f32 %v1561, %v1638
        %v1706 = vadd.f32 %v1562, %v1642
        %v1707 = vadd.f32 %v1563, %v1642
        %v1708 = vadd.f32 %v1564, %v1646
        %v1709 = vadd.f32 %v1565, %v1646
        %v1710 = vadd.f32 %v1566, %v1650
        %v1711 = vadd.f32 %v1567, %v1650
        %v1712 = vadd.f32 %v1568, %v1654
        %v1713 = vadd.f32 %v1569, %v1654
        %v1714 = vadd.f32 %v1570, %v1658
        %v1715 = vadd.f32 %v1571, %v1658
        %v1716 = vadd.f32 %v1572, %v1662
        %v1717 = vadd.f32 %v1573, %v1662
        %v1718 = vadd.f32 %v1574, %v1666
        %v1719 = vadd.f32 %v1575, %v1666
        %v1720 = vadd.f32 %v1576, %v1670
        %v1721 = vadd.f32 %v1577, %v1670
        %v1722 = vadd.f32 %v1578, %v1674
        %v1723 = vadd.f32 %v1579, %v1674
        %v1724 = vld [vmem:[#allocation5] sm:$0xff]
        %v1725 = vld [vmem:[#allocation5 + $0x8] sm:$0xff]
        %v1726 = vld [vmem:[#allocation5 + $0x10] sm:$0xff]
        %v1727 = vld [vmem:[#allocation5 + $0x18] sm:$0xff]
        %v1728 = vld [vmem:[#allocation5 + $0x20] sm:$0xff]
        %v1729 = vld [vmem:[#allocation5 + $0x28] sm:$0xff]
        %v1730 = vld [vmem:[#allocation5 + $0x30] sm:$0xff]
        %v1731 = vld [vmem:[#allocation5 + $0x38] sm:$0xff]
        %v1732 = vld [vmem:[#allocation5 + $0x40] sm:$0xff]
        %v1733 = vld [vmem:[#allocation5 + $0x48] sm:$0xff]
        %v1734 = vld [vmem:[#allocation5 + $0x50] sm:$0xff]
        %v1735 = vld [vmem:[#allocation5 + $0x58] sm:$0xff]
        %v1736 = vld [vmem:[#allocation5 + $0x60] sm:$0xff]
        %v1737 = vld [vmem:[#allocation5 + $0x68] sm:$0xff]
        %v1738 = vld [vmem:[#allocation5 + $0x70] sm:$0xff]
        %v1739 = vld [vmem:[#allocation5 + $0x78] sm:$0xff]
        %v1740 = vld [vmem:[#allocation5 + $0x80] sm:$0xff]
        %v1741 = vld [vmem:[#allocation5 + $0x88] sm:$0xff]
        %v1742 = vld [vmem:[#allocation5 + $0x90] sm:$0xff]
        %v1743 = vld [vmem:[#allocation5 + $0x98] sm:$0xff]
        %v1744 = vld [vmem:[#allocation5 + $0xa0] sm:$0xff]
        %v1745 = vld [vmem:[#allocation5 + $0xa8] sm:$0xff]
        %v1746 = vld [vmem:[#allocation5 + $0xb0] sm:$0xff]
        %v1747 = vld [vmem:[#allocation5 + $0xb8] sm:$0x11]
        %v1748 = vpack.c.bf16 %v1678, %v1676
        %v1749 = vpack.c.bf16 %v1679, %v1677
        %v1750 = vpack.c.bf16 %v1682, %v1680
        %v1751 = vpack.c.bf16 %v1683, %v1681
        %v1752 = vpack.c.bf16 %v1686, %v1684
        %v1753 = vpack.c.bf16 %v1687, %v1685
        %v1754 = vpack.c.bf16 %v1690, %v1688
        %v1755 = vpack.c.bf16 %v1691, %v1689
        %v1756 = vpack.c.bf16 %v1694, %v1692
        %v1757 = vpack.c.bf16 %v1695, %v1693
        %v1758 = vpack.c.bf16 %v1698, %v1696
        %v1759 = vpack.c.bf16 %v1699, %v1697
        %v1760 = vpack.c.bf16 %v1702, %v1700
        %v1761 = vpack.c.bf16 %v1703, %v1701
        %v1762 = vpack.c.bf16 %v1706, %v1704
        %v1763 = vpack.c.bf16 %v1707, %v1705
        %v1764 = vpack.c.bf16 %v1710, %v1708
        %v1765 = vpack.c.bf16 %v1711, %v1709
        %v1766 = vpack.c.bf16 %v1714, %v1712
        %v1767 = vpack.c.bf16 %v1715, %v1713
        %v1768 = vpack.c.bf16 %v1718, %v1716
        %v1769 = vpack.c.bf16 %v1719, %v1717
        %v1770 = vpack.c.bf16 %v1722, %v1720
        %v1771 = vpack.c.bf16 %v1723, %v1721
        %v1796 = vunpack.c.l.b16 %v1724
        %v1797 = vunpack.c.h.b16 %v1724
        %v1798 = vunpack.c.l.b16 %v1725
        %v1799 = vunpack.c.h.b16 %v1725
        %v1800 = vunpack.c.l.b16 %v1726
        %v1801 = vunpack.c.h.b16 %v1726
        %v1802 = vunpack.c.l.b16 %v1727
        %v1803 = vunpack.c.h.b16 %v1727
        %v1804 = vunpack.c.l.b16 %v1728
        %v1805 = vunpack.c.h.b16 %v1728
        %v1806 = vunpack.c.l.b16 %v1729
        %v1807 = vunpack.c.h.b16 %v1729
        %v1808 = vunpack.c.l.b16 %v1730
        %v1809 = vunpack.c.h.b16 %v1730
        %v1810 = vunpack.c.l.b16 %v1731
        %v1811 = vunpack.c.h.b16 %v1731
        %v1812 = vunpack.c.l.b16 %v1732
        %v1813 = vunpack.c.h.b16 %v1732
        %v1814 = vunpack.c.l.b16 %v1733
        %v1815 = vunpack.c.h.b16 %v1733
        %v1816 = vunpack.c.l.b16 %v1734
        %v1817 = vunpack.c.h.b16 %v1734
        %v1818 = vunpack.c.l.b16 %v1735
        %v1819 = vunpack.c.h.b16 %v1735
        %v1820 = vunpack.c.l.b16 %v1736
        %v1821 = vunpack.c.h.b16 %v1736
        %v1822 = vunpack.c.l.b16 %v1737
        %v1823 = vunpack.c.h.b16 %v1737
        %v1824 = vunpack.c.l.b16 %v1738
        %v1825 = vunpack.c.h.b16 %v1738
        %v1826 = vunpack.c.l.b16 %v1739
        %v1827 = vunpack.c.h.b16 %v1739
        %v1828 = vunpack.c.l.b16 %v1740
        %v1829 = vunpack.c.h.b16 %v1740
        %v1830 = vunpack.c.l.b16 %v1741
        %v1831 = vunpack.c.h.b16 %v1741
        %v1832 = vunpack.c.l.b16 %v1742
        %v1833 = vunpack.c.h.b16 %v1742
        %v1834 = vunpack.c.l.b16 %v1743
        %v1835 = vunpack.c.h.b16 %v1743
        %v1836 = vunpack.c.l.b16 %v1744
        %v1837 = vunpack.c.h.b16 %v1744
        %v1838 = vunpack.c.l.b16 %v1745
        %v1839 = vunpack.c.h.b16 %v1745
        %v1840 = vunpack.c.l.b16 %v1746
        %v1841 = vunpack.c.h.b16 %v1746
        %v1842 = vunpack.c.l.b16 %v1747
        %v1843 = vunpack.c.h.b16 %v1747
        %v1844 = vpack.c.b16 %v1798, %v1796
        %v1845 = vpack.c.b16 %v1799, %v1797
        %v1846 = vpack.c.b16 %v1802, %v1800
        %v1847 = vpack.c.b16 %v1803, %v1801
        %v1848 = vpack.c.b16 %v1806, %v1804
        %v1849 = vpack.c.b16 %v1807, %v1805
        %v1850 = vpack.c.b16 %v1810, %v1808
        %v1851 = vpack.c.b16 %v1811, %v1809
        %v1852 = vpack.c.b16 %v1814, %v1812
        %v1853 = vpack.c.b16 %v1815, %v1813
        %v1854 = vpack.c.b16 %v1818, %v1816
        %v1855 = vpack.c.b16 %v1819, %v1817
        %v1856 = vpack.c.b16 %v1822, %v1820
        %v1857 = vpack.c.b16 %v1823, %v1821
        %v1858 = vpack.c.b16 %v1826, %v1824
        %v1859 = vpack.c.b16 %v1827, %v1825
        %v1860 = vpack.c.b16 %v1830, %v1828
        %v1861 = vpack.c.b16 %v1831, %v1829
        %v1862 = vpack.c.b16 %v1834, %v1832
        %v1863 = vpack.c.b16 %v1835, %v1833
        %v1864 = vpack.c.b16 %v1838, %v1836
        %v1865 = vpack.c.b16 %v1839, %v1837
        %v1866 = vpack.c.b16 %v1842, %v1840
        %v1867 = vpack.c.b16 %v1843, %v1841
        %vm1880 = vcmask 474112
        %v1882 = vsel %vm1880, %v1845, 0
        %v1885 = vsel %vm1880, %v1847, 0
        %v1888 = vsel %vm1880, %v1849, 0
        %v1891 = vsel %vm1880, %v1851, 0
        %v1894 = vsel %vm1880, %v1853, 0
        %v1897 = vsel %vm1880, %v1855, 0
        %v1900 = vsel %vm1880, %v1857, 0
        %v1903 = vsel %vm1880, %v1859, 0
        %v1906 = vsel %vm1880, %v1861, 0
        %v1909 = vsel %vm1880, %v1863, 0
        %v1912 = vsel %vm1880, %v1865, 0
        %v1915 = vsel %vm1880, %v1867, 0
        %vm1917 = vcmask 1044480
        %v1919 = vsel %vm1917, %v1770, 0
        %v1922 = vsel %vm1917, %v1771, 0
        %1924 = vmatprep.subr.bf16.mxu0 %v1749
        %1925 = vmatpush1.bf16.msra.mxu0 %v1748
        %1926 = vmatprep.subr.bf16.mxu0 %v1751
        %1927 = vmatpush1.bf16.msra.mxu0 %v1750
        %1928 = vmatprep.subr.bf16.mxu0 %v1753
        %1929 = vmatpush1.bf16.msra.mxu0 %v1752
        %1930 = vmatprep.subr.bf16.mxu0 %v1755
        %1931 = vmatpush1.bf16.msra.mxu0 %v1754
        %1932 = vmatprep.subr.bf16.mxu0 %v1757
        %1933 = vmatpush1.bf16.msra.mxu0 %v1756
        %1934 = vmatprep.subr.bf16.mxu0 %v1759
        %1935 = vmatpush1.bf16.msra.mxu0 %v1758
        %1936 = vmatprep.subr.bf16.mxu0 %v1761
        %1937 = vmatpush1.bf16.msra.mxu0 %v1760
        %1938 = vmatprep.subr.bf16.mxu0 %v1763
        %1939 = vmatpush1.bf16.msra.mxu0 %v1762
        %1940 = vmatprep.subr.bf16.mxu0 %v1765
        %1941 = vmatpush1.bf16.msra.mxu0 %v1764
        %1942 = vmatprep.subr.bf16.mxu0 %v1767
        %1943 = vmatpush1.bf16.msra.mxu0 %v1766
        %1944 = vmatprep.subr.bf16.mxu0 %v1769
        %1945 = vmatpush1.bf16.msra.mxu0 %v1768
        %1946 = vmatprep.subr.bf16.mxu0 %v1922
        %1947 = vmatpush1.bf16.msra.mxu0 %v1919
        %1948 = vmatprep.subr.bf16.mxu0 0
        %1949 = vmatpush1.bf16.msra.mxu0 0
        %1950 = vmatprep.subr.bf16.mxu0 0
        %1951 = vmatpush1.bf16.msra.mxu0 0
        %1952 = vmatprep.subr.bf16.mxu0 0
        %1953 = vmatpush1.bf16.msra.mxu0 0
        %1954 = vmatprep.subr.bf16.mxu0 0
        %1955 = vmatpush1.bf16.msra.mxu0 0
        %1956 = vmatprep.mubr.bf16.mxu0 %v1882
        %1957 = vmatmul.mubr.bf16.gmra.mrb[0].mxu0 %v1844
        %v1958 = vpop.f32.mrb[0].mxu0
        %v1959 = vadd.f32 0.0, %v1958
        %v1960 = vpop.f32.mrb[0].mxu0
        %v1961 = vadd.f32 0.0, %v1960
        %v1962 = vpop.f32.mrb[0].mxu0
        %v1963 = vadd.f32 0.0, %v1962
        %v1964 = vpop.f32.mrb[0].mxu0
        %v1965 = vadd.f32 0.0, %v1964
        %1966 = vmatprep.mubr.bf16.mxu0 %v1885
        %1967 = vmatmul.mubr.bf16.gmra.mrb[0].mxu0 %v1846
        %v1968 = vpop.f32.mrb[0].mxu0
        %v1969 = vadd.f32 0.0, %v1968
        %v1970 = vpop.f32.mrb[0].mxu0
        %v1971 = vadd.f32 0.0, %v1970
        %v1972 = vpop.f32.mrb[0].mxu0
        %v1973 = vadd.f32 0.0, %v1972
        %v1974 = vpop.f32.mrb[0].mxu0
        %v1975 = vadd.f32 0.0, %v1974
        %1976 = vmatprep.mubr.bf16.mxu0 %v1888
        %1977 = vmatmul.mubr.bf16.gmra.mrb[0].mxu0 %v1848
        %v1978 = vpop.f32.mrb[0].mxu0
        %v1979 = vadd.f32 0.0, %v1978
        %v1980 = vpop.f32.mrb[0].mxu0
        %v1981 = vadd.f32 0.0, %v1980
        %v1982 = vpop.f32.mrb[0].mxu0
        %v1983 = vadd.f32 0.0, %v1982
        %v1984 = vpop.f32.mrb[0].mxu0
        %v1985 = vadd.f32 0.0, %v1984
        %1986 = vmatprep.mubr.bf16.mxu0 %v1891
        %1987 = vmatmul.mubr.bf16.gmra.mrb[0].mxu0 %v1850
        %v1988 = vpop.f32.mrb[0].mxu0
        %v1989 = vadd.f32 0.0, %v1988
        %v1990 = vpop.f32.mrb[0].mxu0
        %v1991 = vadd.f32 0.0, %v1990
        %v1992 = vpop.f32.mrb[0].mxu0
        %v1993 = vadd.f32 0.0, %v1992
        %v1994 = vpop.f32.mrb[0].mxu0
        %v1995 = vadd.f32 0.0, %v1994
        %1996 = vmatprep.mubr.bf16.mxu0 %v1894
        %1997 = vmatmul.mubr.bf16.gmra.mrb[0].mxu0 %v1852
        %v1998 = vpop.f32.mrb[0].mxu0
        %v1999 = vadd.f32 0.0, %v1998
        %v2000 = vpop.f32.mrb[0].mxu0
        %v2001 = vadd.f32 0.0, %v2000
        %v2002 = vpop.f32.mrb[0].mxu0
        %v2003 = vadd.f32 0.0, %v2002
        %v2004 = vpop.f32.mrb[0].mxu0
        %v2005 = vadd.f32 0.0, %v2004
        %2006 = vmatprep.mubr.bf16.mxu0 %v1897
        %2007 = vmatmul.mubr.bf16.gmra.mrb[0].mxu0 %v1854
        %v2008 = vpop.f32.mrb[0].mxu0
        %v2009 = vadd.f32 0.0, %v2008
        %v2010 = vpop.f32.mrb[0].mxu0
        %v2011 = vadd.f32 0.0, %v2010
        %v2012 = vpop.f32.mrb[0].mxu0
        %v2013 = vadd.f32 0.0, %v2012
        %v2014 = vpop.f32.mrb[0].mxu0
        %v2015 = vadd.f32 0.0, %v2014
        %2016 = vmatprep.mubr.bf16.mxu0 %v1900
        %2017 = vmatmul.mubr.bf16.gmra.mrb[0].mxu0 %v1856
        %v2018 = vpop.f32.mrb[0].mxu0
        %v2019 = vadd.f32 0.0, %v2018
        %v2020 = vpop.f32.mrb[0].mxu0
        %v2021 = vadd.f32 0.0, %v2020
        %v2022 = vpop.f32.mrb[0].mxu0
        %v2023 = vadd.f32 0.0, %v2022
        %v2024 = vpop.f32.mrb[0].mxu0
        %v2025 = vadd.f32 0.0, %v2024
        %2026 = vmatprep.mubr.bf16.mxu0 %v1903
        %2027 = vmatmul.mubr.bf16.gmra.mrb[0].mxu0 %v1858
        %v2028 = vpop.f32.mrb[0].mxu0
        %v2029 = vadd.f32 0.0, %v2028
        %v2030 = vpop.f32.mrb[0].mxu0
        %v2031 = vadd.f32 0.0, %v2030
        %v2032 = vpop.f32.mrb[0].mxu0
        %v2033 = vadd.f32 0.0, %v2032
        %v2034 = vpop.f32.mrb[0].mxu0
        %v2035 = vadd.f32 0.0, %v2034
        %2036 = vmatprep.mubr.bf16.mxu0 %v1906
        %2037 = vmatmul.mubr.bf16.gmra.mrb[0].mxu0 %v1860
        %v2038 = vpop.f32.mrb[0].mxu0
        %v2039 = vadd.f32 0.0, %v2038
        %v2040 = vpop.f32.mrb[0].mxu0
        %v2041 = vadd.f32 0.0, %v2040
        %v2042 = vpop.f32.mrb[0].mxu0
        %v2043 = vadd.f32 0.0, %v2042
        %v2044 = vpop.f32.mrb[0].mxu0
        %v2045 = vadd.f32 0.0, %v2044
        %2046 = vmatprep.mubr.bf16.mxu0 %v1909
        %2047 = vmatmul.mubr.bf16.gmra.mrb[0].mxu0 %v1862
        %v2048 = vpop.f32.mrb[0].mxu0
        %v2049 = vadd.f32 0.0, %v2048
        %v2050 = vpop.f32.mrb[0].mxu0
        %v2051 = vadd.f32 0.0, %v2050
        %v2052 = vpop.f32.mrb[0].mxu0
        %v2053 = vadd.f32 0.0, %v2052
        %v2054 = vpop.f32.mrb[0].mxu0
        %v2055 = vadd.f32 0.0, %v2054
        %2056 = vmatprep.mubr.bf16.mxu0 %v1912
        %2057 = vmatmul.mubr.bf16.gmra.mrb[0].mxu0 %v1864
        %v2058 = vpop.f32.mrb[0].mxu0
        %v2059 = vadd.f32 0.0, %v2058
        %v2060 = vpop.f32.mrb[0].mxu0
        %v2061 = vadd.f32 0.0, %v2060
        %v2062 = vpop.f32.mrb[0].mxu0
        %v2063 = vadd.f32 0.0, %v2062
        %v2064 = vpop.f32.mrb[0].mxu0
        %v2065 = vadd.f32 0.0, %v2064
        %2066 = vmatprep.mubr.bf16.mxu0 %v1915
        %2067 = vmatmul.mubr.bf16.gmra.mrb[0].mxu0 %v1866
        %v2068 = vpop.f32.mrb[0].mxu0
        %v2069 = vadd.f32 0.0, %v2068
        %v2070 = vpop.f32.mrb[0].mxu0
        %v2071 = vadd.f32 0.0, %v2070
        %v2072 = vpop.f32.mrb[0].mxu0
        %v2073 = vadd.f32 0.0, %v2072
        %v2074 = vpop.f32.mrb[0].mxu0
        %v2075 = vadd.f32 0.0, %v2074
        %2076 = vdwg.mxu0
        %v2077 = vld [vmem:[%s4] sm:$0xff]
        %v2078 = vld [vmem:[%s4 + $0x8] sm:$0xff]
        %v2079 = vld [vmem:[%s4 + $0x10] sm:$0xff]
        %v2080 = vld [vmem:[%s4 + $0x18] sm:$0xff]
        %v2081 = vld [vmem:[%s4 + $0x20] sm:$0xff]
        %v2082 = vld [vmem:[%s4 + $0x28] sm:$0xff]
        %v2083 = vld [vmem:[%s4 + $0x30] sm:$0xff]
        %v2084 = vld [vmem:[%s4 + $0x38] sm:$0xff]
        %v2085 = vld [vmem:[%s4 + $0x40] sm:$0xff]
        %v2086 = vld [vmem:[%s4 + $0x48] sm:$0xff]
        %v2087 = vld [vmem:[%s4 + $0x50] sm:$0xff]
        %v2088 = vld [vmem:[%s4 + $0x58] sm:$0xff]
        %v2089 = vld [vmem:[%s4 + $0x60] sm:$0xff]
        %v2090 = vld [vmem:[%s4 + $0x68] sm:$0xff]
        %v2091 = vld [vmem:[%s4 + $0x70] sm:$0xff]
        %v2092 = vld [vmem:[%s4 + $0x78] sm:$0xff]
        %v2093 = vld [vmem:[%s4 + $0x80] sm:$0xff]
        %v2094 = vld [vmem:[%s4 + $0x88] sm:$0xff]
        %v2095 = vld [vmem:[%s4 + $0x90] sm:$0xff]
        %v2096 = vld [vmem:[%s4 + $0x98] sm:$0xff]
        %v2097 = vld [vmem:[%s4 + $0xa0] sm:$0xff]
        %v2098 = vld [vmem:[%s4 + $0xa8] sm:$0xff]
        %v2099 = vld [vmem:[%s4 + $0xb0] sm:$0xff]
        %v2100 = vld [vmem:[%s4 + $0xb8] sm:$0x3]
        %v2101 = vadd.f32 %v1959, %v1963
        %v2102 = vadd.f32 %v2101, %v1969
        %v2103 = vadd.f32 %v2102, %v1973
        %v2104 = vadd.f32 %v2103, %v1979
        %v2105 = vadd.f32 %v2104, %v1983
        %v2106 = vadd.f32 %v2105, %v1989
        %v2107 = vadd.f32 %v2106, %v1993
        %v2108 = vadd.f32 %v2107, %v1999
        %v2109 = vadd.f32 %v2108, %v2003
        %v2110 = vadd.f32 %v2109, %v2009
        %v2111 = vadd.f32 %v2110, %v2013
        %v2112 = vadd.f32 %v2111, %v2019
        %v2113 = vadd.f32 %v2112, %v2023
        %v2114 = vadd.f32 %v2113, %v2029
        %v2115 = vadd.f32 %v2114, %v2033
        %v2116 = vadd.f32 %v2115, %v2039
        %v2117 = vadd.f32 %v2116, %v2043
        %v2118 = vadd.f32 %v2117, %v2049
        %v2119 = vadd.f32 %v2118, %v2053
        %v2120 = vadd.f32 %v2119, %v2059
        %v2121 = vadd.f32 %v2120, %v2063
        %v2122 = vadd.f32 %v2121, %v2069
        %v2123 = vsel %vm1157, %v2073, 0.0
        %v2124 = vadd.f32 %v2122, %v2123
        %v2125 = vrot.slane %v2124, 4
        %v2126 = vadd.f32 %v2124, %v2125
        %v2127 = vrot.slane %v2126, 2
        %v2128 = vadd.f32 %v2126, %v2127
        %v2129 = vrot.slane %v2128, 1
        %v2130 = vadd.f32 %v2128, %v2129
        %v2131 = vadd.f32 %v1961, %v1965
        %v2132 = vadd.f32 %v2131, %v1971
        %v2133 = vadd.f32 %v2132, %v1975
        %v2134 = vadd.f32 %v2133, %v1981
        %v2135 = vadd.f32 %v2134, %v1985
        %v2136 = vadd.f32 %v2135, %v1991
        %v2137 = vadd.f32 %v2136, %v1995
        %v2138 = vadd.f32 %v2137, %v2001
        %v2139 = vadd.f32 %v2138, %v2005
        %v2140 = vadd.f32 %v2139, %v2011
        %v2141 = vadd.f32 %v2140, %v2015
        %v2142 = vadd.f32 %v2141, %v2021
        %v2143 = vadd.f32 %v2142, %v2025
        %v2144 = vadd.f32 %v2143, %v2031
        %v2145 = vadd.f32 %v2144, %v2035
        %v2146 = vadd.f32 %v2145, %v2041
        %v2147 = vadd.f32 %v2146, %v2045
        %v2148 = vadd.f32 %v2147, %v2051
        %v2149 = vadd.f32 %v2148, %v2055
        %v2150 = vadd.f32 %v2149, %v2061
        %v2151 = vadd.f32 %v2150, %v2065
        %v2152 = vadd.f32 %v2151, %v2071
        %v2153 = vsel %vm1157, %v2075, 0.0
        %v2154 = vadd.f32 %v2152, %v2153
        %v2155 = vrot.slane %v2154, 4
        %v2156 = vadd.f32 %v2154, %v2155
        %v2157 = vrot.slane %v2156, 2
        %v2158 = vadd.f32 %v2156, %v2157
        %v2159 = vrot.slane %v2158, 1
        %v2160 = vadd.f32 %v2158, %v2159
        %v2161 = vmul.f32 %v2130, 0.005376344
        %v2162 = vmul.f32 %v2160, 0.005376344
        %v2163 = vmul.f32 %v1959, %v1959
        %v2164 = vmul.f32 %v1961, %v1961
        %v2165 = vmul.f32 %v1963, %v1963
        %v2166 = vmul.f32 %v1965, %v1965
        %v2167 = vmul.f32 %v1969, %v1969
        %v2168 = vmul.f32 %v1971, %v1971
        %v2169 = vmul.f32 %v1973, %v1973
        %v2170 = vmul.f32 %v1975, %v1975
        %v2171 = vmul.f32 %v1979, %v1979
        %v2172 = vmul.f32 %v1981, %v1981
        %v2173 = vmul.f32 %v1983, %v1983
        %v2174 = vmul.f32 %v1985, %v1985
        %v2175 = vmul.f32 %v1989, %v1989
        %v2176 = vmul.f32 %v1991, %v1991
        %v2177 = vmul.f32 %v1993, %v1993
        %v2178 = vmul.f32 %v1995, %v1995
        %v2179 = vmul.f32 %v1999, %v1999
        %v2180 = vmul.f32 %v2001, %v2001
        %v2181 = vmul.f32 %v2003, %v2003
        %v2182 = vmul.f32 %v2005, %v2005
        %v2183 = vmul.f32 %v2009, %v2009
        %v2184 = vmul.f32 %v2011, %v2011
        %v2185 = vmul.f32 %v2013, %v2013
        %v2186 = vmul.f32 %v2015, %v2015
        %v2187 = vmul.f32 %v2019, %v2019
        %v2188 = vmul.f32 %v2021, %v2021
        %v2189 = vmul.f32 %v2023, %v2023
        %v2190 = vmul.f32 %v2025, %v2025
        %v2191 = vmul.f32 %v2029, %v2029
        %v2192 = vmul.f32 %v2031, %v2031
        %v2193 = vmul.f32 %v2033, %v2033
        %v2194 = vmul.f32 %v2035, %v2035
        %v2195 = vmul.f32 %v2039, %v2039
        %v2196 = vmul.f32 %v2041, %v2041
        %v2197 = vmul.f32 %v2043, %v2043
        %v2198 = vmul.f32 %v2045, %v2045
        %v2199 = vmul.f32 %v2049, %v2049
        %v2200 = vmul.f32 %v2051, %v2051
        %v2201 = vmul.f32 %v2053, %v2053
        %v2202 = vmul.f32 %v2055, %v2055
        %v2203 = vmul.f32 %v2059, %v2059
        %v2204 = vmul.f32 %v2061, %v2061
        %v2205 = vmul.f32 %v2063, %v2063
        %v2206 = vmul.f32 %v2065, %v2065
        %v2207 = vmul.f32 %v2069, %v2069
        %v2208 = vmul.f32 %v2071, %v2071
        %v2209 = vmul.f32 %v2073, %v2073
        %v2210 = vmul.f32 %v2075, %v2075
        %v2211 = vadd.f32 %v2163, %v2165
        %v2212 = vadd.f32 %v2211, %v2167
        %v2213 = vadd.f32 %v2212, %v2169
        %v2214 = vadd.f32 %v2213, %v2171
        %v2215 = vadd.f32 %v2214, %v2173
        %v2216 = vadd.f32 %v2215, %v2175
        %v2217 = vadd.f32 %v2216, %v2177
        %v2218 = vadd.f32 %v2217, %v2179
        %v2219 = vadd.f32 %v2218, %v2181
        %v2220 = vadd.f32 %v2219, %v2183
        %v2221 = vadd.f32 %v2220, %v2185
        %v2222 = vadd.f32 %v2221, %v2187
        %v2223 = vadd.f32 %v2222, %v2189
        %v2224 = vadd.f32 %v2223, %v2191
        %v2225 = vadd.f32 %v2224, %v2193
        %v2226 = vadd.f32 %v2225, %v2195
        %v2227 = vadd.f32 %v2226, %v2197
        %v2228 = vadd.f32 %v2227, %v2199
        %v2229 = vadd.f32 %v2228, %v2201
        %v2230 = vadd.f32 %v2229, %v2203
        %v2231 = vadd.f32 %v2230, %v2205
        %v2232 = vadd.f32 %v2231, %v2207
        %v2233 = vsel %vm1157, %v2209, 0.0
        %v2234 = vadd.f32 %v2232, %v2233
        %v2235 = vrot.slane %v2234, 4
        %v2236 = vadd.f32 %v2234, %v2235
        %v2237 = vrot.slane %v2236, 2
        %v2238 = vadd.f32 %v2236, %v2237
        %v2239 = vrot.slane %v2238, 1
        %v2240 = vadd.f32 %v2238, %v2239
        %v2241 = vadd.f32 %v2164, %v2166
        %v2242 = vadd.f32 %v2241, %v2168
        %v2243 = vadd.f32 %v2242, %v2170
        %v2244 = vadd.f32 %v2243, %v2172
        %v2245 = vadd.f32 %v2244, %v2174
        %v2246 = vadd.f32 %v2245, %v2176
        %v2247 = vadd.f32 %v2246, %v2178
        %v2248 = vadd.f32 %v2247, %v2180
        %v2249 = vadd.f32 %v2248, %v2182
        %v2250 = vadd.f32 %v2249, %v2184
        %v2251 = vadd.f32 %v2250, %v2186
        %v2252 = vadd.f32 %v2251, %v2188
        %v2253 = vadd.f32 %v2252, %v2190
        %v2254 = vadd.f32 %v2253, %v2192
        %v2255 = vadd.f32 %v2254, %v2194
        %v2256 = vadd.f32 %v2255, %v2196
        %v2257 = vadd.f32 %v2256, %v2198
        %v2258 = vadd.f32 %v2257, %v2200
        %v2259 = vadd.f32 %v2258, %v2202
        %v2260 = vadd.f32 %v2259, %v2204
        %v2261 = vadd.f32 %v2260, %v2206
        %v2262 = vadd.f32 %v2261, %v2208
        %v2263 = vsel %vm1157, %v2210, 0.0
        %v2264 = vadd.f32 %v2262, %v2263
        %v2265 = vrot.slane %v2264, 4
        %v2266 = vadd.f32 %v2264, %v2265
        %v2267 = vrot.slane %v2266, 2
        %v2268 = vadd.f32 %v2266, %v2267
        %v2269 = vrot.slane %v2268, 1
        %v2270 = vadd.f32 %v2268, %v2269
        %v2271 = vmul.f32 %v2240, 0.005376344
        %v2272 = vmul.f32 %v2270, 0.005376344
        %v2273 = vmul.f32 %v2161, %v2161
        %v2274 = vmul.f32 %v2162, %v2162
        %v2275 = vsub.f32 %v2271, %v2273
        %v2276 = vsub.f32 %v2272, %v2274
        %v2277 = vsub.f32 %v1959, %v2161
        %v2278 = vsub.f32 %v1961, %v2162
        %v2279 = vsub.f32 %v1963, %v2161
        %v2280 = vsub.f32 %v1965, %v2162
        %v2281 = vsub.f32 %v1969, %v2161
        %v2282 = vsub.f32 %v1971, %v2162
        %v2283 = vsub.f32 %v1973, %v2161
        %v2284 = vsub.f32 %v1975, %v2162
        %v2285 = vsub.f32 %v1979, %v2161
        %v2286 = vsub.f32 %v1981, %v2162
        %v2287 = vsub.f32 %v1983, %v2161
        %v2288 = vsub.f32 %v1985, %v2162
        %v2289 = vsub.f32 %v1989, %v2161
        %v2290 = vsub.f32 %v1991, %v2162
        %v2291 = vsub.f32 %v1993, %v2161
        %v2292 = vsub.f32 %v1995, %v2162
        %v2293 = vsub.f32 %v1999, %v2161
        %v2294 = vsub.f32 %v2001, %v2162
        %v2295 = vsub.f32 %v2003, %v2161
        %v2296 = vsub.f32 %v2005, %v2162
        %v2297 = vsub.f32 %v2009, %v2161
        %v2298 = vsub.f32 %v2011, %v2162
        %v2299 = vsub.f32 %v2013, %v2161
        %v2300 = vsub.f32 %v2015, %v2162
        %v2301 = vsub.f32 %v2019, %v2161
        %v2302 = vsub.f32 %v2021, %v2162
        %v2303 = vsub.f32 %v2023, %v2161
        %v2304 = vsub.f32 %v2025, %v2162
        %v2305 = vsub.f32 %v2029, %v2161
        %v2306 = vsub.f32 %v2031, %v2162
        %v2307 = vsub.f32 %v2033, %v2161
        %v2308 = vsub.f32 %v2035, %v2162
        %v2309 = vsub.f32 %v2039, %v2161
        %v2310 = vsub.f32 %v2041, %v2162
        %v2311 = vsub.f32 %v2043, %v2161
        %v2312 = vsub.f32 %v2045, %v2162
        %v2313 = vsub.f32 %v2049, %v2161
        %v2314 = vsub.f32 %v2051, %v2162
        %v2315 = vsub.f32 %v2053, %v2161
        %v2316 = vsub.f32 %v2055, %v2162
        %v2317 = vsub.f32 %v2059, %v2161
        %v2318 = vsub.f32 %v2061, %v2162
        %v2319 = vsub.f32 %v2063, %v2161
        %v2320 = vsub.f32 %v2065, %v2162
        %v2321 = vsub.f32 %v2069, %v2161
        %v2322 = vsub.f32 %v2071, %v2162
        %v2323 = vsub.f32 %v2073, %v2161
        %v2324 = vsub.f32 %v2075, %v2162
        %v2325 = vadd.f32 %v2275, 1e-05
        %v2326 = vadd.f32 %v2276, 1e-05
        %v2327 = vrsqrt.pop %v2325
        %v2328 = vrsqrt.pop %v2326
        %v2329 = vmul.f32 %v2277, %v2327
        %v2330 = vmul.f32 %v2278, %v2328
        %v2331 = vmul.f32 %v2279, %v2327
        %v2332 = vmul.f32 %v2280, %v2328
        %v2333 = vmul.f32 %v2281, %v2327
        %v2334 = vmul.f32 %v2282, %v2328
        %v2335 = vmul.f32 %v2283, %v2327
        %v2336 = vmul.f32 %v2284, %v2328
        %v2337 = vmul.f32 %v2285, %v2327
        %v2338 = vmul.f32 %v2286, %v2328
        %v2339 = vmul.f32 %v2287, %v2327
        %v2340 = vmul.f32 %v2288, %v2328
        %v2341 = vmul.f32 %v2289, %v2327
        %v2342 = vmul.f32 %v2290, %v2328
        %v2343 = vmul.f32 %v2291, %v2327
        %v2344 = vmul.f32 %v2292, %v2328
        %v2345 = vmul.f32 %v2293, %v2327
        %v2346 = vmul.f32 %v2294, %v2328
        %v2347 = vmul.f32 %v2295, %v2327
        %v2348 = vmul.f32 %v2296, %v2328
        %v2349 = vmul.f32 %v2297, %v2327
        %v2350 = vmul.f32 %v2298, %v2328
        %v2351 = vmul.f32 %v2299, %v2327
        %v2352 = vmul.f32 %v2300, %v2328
        %v2353 = vmul.f32 %v2301, %v2327
        %v2354 = vmul.f32 %v2302, %v2328
        %v2355 = vmul.f32 %v2303, %v2327
        %v2356 = vmul.f32 %v2304, %v2328
        %v2357 = vmul.f32 %v2305, %v2327
        %v2358 = vmul.f32 %v2306, %v2328
        %v2359 = vmul.f32 %v2307, %v2327
        %v2360 = vmul.f32 %v2308, %v2328
        %v2361 = vmul.f32 %v2309, %v2327
        %v2362 = vmul.f32 %v2310, %v2328
        %v2363 = vmul.f32 %v2311, %v2327
        %v2364 = vmul.f32 %v2312, %v2328
        %v2365 = vmul.f32 %v2313, %v2327
        %v2366 = vmul.f32 %v2314, %v2328
        %v2367 = vmul.f32 %v2315, %v2327
        %v2368 = vmul.f32 %v2316, %v2328
        %v2369 = vmul.f32 %v2317, %v2327
        %v2370 = vmul.f32 %v2318, %v2328
        %v2371 = vmul.f32 %v2319, %v2327
        %v2372 = vmul.f32 %v2320, %v2328
        %v2373 = vmul.f32 %v2321, %v2327
        %v2374 = vmul.f32 %v2322, %v2328
        %v2375 = vmul.f32 %v2323, %v2327
        %v2376 = vmul.f32 %v2324, %v2328
        %2378 = vset.pattern.permute.xlu0 0
        %2379 = vperm.xlu0 %2378, %v2077
        %v2380 = vpop.permute.xlu0 %2379
        %2383 = vset.pattern.permute.xlu0 0
        %2384 = vperm.xlu0 %2383, %v2078
        %v2385 = vpop.permute.xlu0 %2384
        %2388 = vset.pattern.permute.xlu0 0
        %2389 = vperm.xlu0 %2388, %v2079
        %v2390 = vpop.permute.xlu0 %2389
        %2393 = vset.pattern.permute.xlu0 0
        %2394 = vperm.xlu0 %2393, %v2080
        %v2395 = vpop.permute.xlu0 %2394
        %2398 = vset.pattern.permute.xlu0 0
        %2399 = vperm.xlu0 %2398, %v2081
        %v2400 = vpop.permute.xlu0 %2399
        %2403 = vset.pattern.permute.xlu0 0
        %2404 = vperm.xlu0 %2403, %v2082
        %v2405 = vpop.permute.xlu0 %2404
        %2408 = vset.pattern.permute.xlu0 0
        %2409 = vperm.xlu0 %2408, %v2083
        %v2410 = vpop.permute.xlu0 %2409
        %2413 = vset.pattern.permute.xlu0 0
        %2414 = vperm.xlu0 %2413, %v2084
        %v2415 = vpop.permute.xlu0 %2414
        %2418 = vset.pattern.permute.xlu0 0
        %2419 = vperm.xlu0 %2418, %v2085
        %v2420 = vpop.permute.xlu0 %2419
        %2423 = vset.pattern.permute.xlu0 0
        %2424 = vperm.xlu0 %2423, %v2086
        %v2425 = vpop.permute.xlu0 %2424
        %2428 = vset.pattern.permute.xlu0 0
        %2429 = vperm.xlu0 %2428, %v2087
        %v2430 = vpop.permute.xlu0 %2429
        %2433 = vset.pattern.permute.xlu0 0
        %2434 = vperm.xlu0 %2433, %v2088
        %v2435 = vpop.permute.xlu0 %2434
        %2438 = vset.pattern.permute.xlu0 0
        %2439 = vperm.xlu0 %2438, %v2089
        %v2440 = vpop.permute.xlu0 %2439
        %2443 = vset.pattern.permute.xlu0 0
        %2444 = vperm.xlu0 %2443, %v2090
        %v2445 = vpop.permute.xlu0 %2444
        %2448 = vset.pattern.permute.xlu0 0
        %2449 = vperm.xlu0 %2448, %v2091
        %v2450 = vpop.permute.xlu0 %2449
        %2453 = vset.pattern.permute.xlu0 0
        %2454 = vperm.xlu0 %2453, %v2092
        %v2455 = vpop.permute.xlu0 %2454
        %2458 = vset.pattern.permute.xlu0 0
        %2459 = vperm.xlu0 %2458, %v2093
        %v2460 = vpop.permute.xlu0 %2459
        %2463 = vset.pattern.permute.xlu0 0
        %2464 = vperm.xlu0 %2463, %v2094
        %v2465 = vpop.permute.xlu0 %2464
        %2468 = vset.pattern.permute.xlu0 0
        %2469 = vperm.xlu0 %2468, %v2095
        %v2470 = vpop.permute.xlu0 %2469
        %2473 = vset.pattern.permute.xlu0 0
        %2474 = vperm.xlu0 %2473, %v2096
        %v2475 = vpop.permute.xlu0 %2474
        %2478 = vset.pattern.permute.xlu0 0
        %2479 = vperm.xlu0 %2478, %v2097
        %v2480 = vpop.permute.xlu0 %2479
        %2483 = vset.pattern.permute.xlu0 0
        %2484 = vperm.xlu0 %2483, %v2098
        %v2485 = vpop.permute.xlu0 %2484
        %2488 = vset.pattern.permute.xlu0 0
        %2489 = vperm.xlu0 %2488, %v2099
        %v2490 = vpop.permute.xlu0 %2489
        %2493 = vset.pattern.permute.xlu0 0
        %2494 = vperm.xlu0 %2493, %v2100
        %v2495 = vpop.permute.xlu0 %2494
        %v2497 = vmul.f32 %v2329, %v2380
        %v2498 = vmul.f32 %v2330, %v2380
        %v2499 = vmul.f32 %v2331, %v2385
        %v2500 = vmul.f32 %v2332, %v2385
        %v2501 = vmul.f32 %v2333, %v2390
        %v2502 = vmul.f32 %v2334, %v2390
        %v2503 = vmul.f32 %v2335, %v2395
        %v2504 = vmul.f32 %v2336, %v2395
        %v2505 = vmul.f32 %v2337, %v2400
        %v2506 = vmul.f32 %v2338, %v2400
        %v2507 = vmul.f32 %v2339, %v2405
        %v2508 = vmul.f32 %v2340, %v2405
        %v2509 = vmul.f32 %v2341, %v2410
        %v2510 = vmul.f32 %v2342, %v2410
        %v2511 = vmul.f32 %v2343, %v2415
        %v2512 = vmul.f32 %v2344, %v2415
        %v2513 = vmul.f32 %v2345, %v2420
        %v2514 = vmul.f32 %v2346, %v2420
        %v2515 = vmul.f32 %v2347, %v2425
        %v2516 = vmul.f32 %v2348, %v2425
        %v2517 = vmul.f32 %v2349, %v2430
        %v2518 = vmul.f32 %v2350, %v2430
        %v2519 = vmul.f32 %v2351, %v2435
        %v2520 = vmul.f32 %v2352, %v2435
        %v2521 = vmul.f32 %v2353, %v2440
        %v2522 = vmul.f32 %v2354, %v2440
        %v2523 = vmul.f32 %v2355, %v2445
        %v2524 = vmul.f32 %v2356, %v2445
        %v2525 = vmul.f32 %v2357, %v2450
        %v2526 = vmul.f32 %v2358, %v2450
        %v2527 = vmul.f32 %v2359, %v2455
        %v2528 = vmul.f32 %v2360, %v2455
        %v2529 = vmul.f32 %v2361, %v2460
        %v2530 = vmul.f32 %v2362, %v2460
        %v2531 = vmul.f32 %v2363, %v2465
        %v2532 = vmul.f32 %v2364, %v2465
        %v2533 = vmul.f32 %v2365, %v2470
        %v2534 = vmul.f32 %v2366, %v2470
        %v2535 = vmul.f32 %v2367, %v2475
        %v2536 = vmul.f32 %v2368, %v2475
        %v2537 = vmul.f32 %v2369, %v2480
        %v2538 = vmul.f32 %v2370, %v2480
        %v2539 = vmul.f32 %v2371, %v2485
        %v2540 = vmul.f32 %v2372, %v2485
        %v2541 = vmul.f32 %v2373, %v2490
        %v2542 = vmul.f32 %v2374, %v2490
        %v2543 = vmul.f32 %v2375, %v2495
        %v2544 = vmul.f32 %v2376, %v2495
        %2545 = vset.pattern.permute.xlu0 1
        %2546 = vperm.xlu0 %2545, %v2077
        %v2547 = vpop.permute.xlu0 %2546
        %2549 = vset.pattern.permute.xlu0 1
        %2550 = vperm.xlu0 %2549, %v2078
        %v2551 = vpop.permute.xlu0 %2550
        %2553 = vset.pattern.permute.xlu0 1
        %2554 = vperm.xlu0 %2553, %v2079
        %v2555 = vpop.permute.xlu0 %2554
        %2557 = vset.pattern.permute.xlu0 1
        %2558 = vperm.xlu0 %2557, %v2080
        %v2559 = vpop.permute.xlu0 %2558
        %2561 = vset.pattern.permute.xlu0 1
        %2562 = vperm.xlu0 %2561, %v2081
        %v2563 = vpop.permute.xlu0 %2562
        %2565 = vset.pattern.permute.xlu0 1
        %2566 = vperm.xlu0 %2565, %v2082
        %v2567 = vpop.permute.xlu0 %2566
        %2569 = vset.pattern.permute.xlu0 1
        %2570 = vperm.xlu0 %2569, %v2083
        %v2571 = vpop.permute.xlu0 %2570
        %2573 = vset.pattern.permute.xlu0 1
        %2574 = vperm.xlu0 %2573, %v2084
        %v2575 = vpop.permute.xlu0 %2574
        %2577 = vset.pattern.permute.xlu0 1
        %2578 = vperm.xlu0 %2577, %v2085
        %v2579 = vpop.permute.xlu0 %2578
        %2581 = vset.pattern.permute.xlu0 1
        %2582 = vperm.xlu0 %2581, %v2086
        %v2583 = vpop.permute.xlu0 %2582
        %2585 = vset.pattern.permute.xlu0 1
        %2586 = vperm.xlu0 %2585, %v2087
        %v2587 = vpop.permute.xlu0 %2586
        %2589 = vset.pattern.permute.xlu0 1
        %2590 = vperm.xlu0 %2589, %v2088
        %v2591 = vpop.permute.xlu0 %2590
        %2593 = vset.pattern.permute.xlu0 1
        %2594 = vperm.xlu0 %2593, %v2089
        %v2595 = vpop.permute.xlu0 %2594
        %2597 = vset.pattern.permute.xlu0 1
        %2598 = vperm.xlu0 %2597, %v2090
        %v2599 = vpop.permute.xlu0 %2598
        %2601 = vset.pattern.permute.xlu0 1
        %2602 = vperm.xlu0 %2601, %v2091
        %v2603 = vpop.permute.xlu0 %2602
        %2605 = vset.pattern.permute.xlu0 1
        %2606 = vperm.xlu0 %2605, %v2092
        %v2607 = vpop.permute.xlu0 %2606
        %2609 = vset.pattern.permute.xlu0 1
        %2610 = vperm.xlu0 %2609, %v2093
        %v2611 = vpop.permute.xlu0 %2610
        %2613 = vset.pattern.permute.xlu0 1
        %2614 = vperm.xlu0 %2613, %v2094
        %v2615 = vpop.permute.xlu0 %2614
        %2617 = vset.pattern.permute.xlu0 1
        %2618 = vperm.xlu0 %2617, %v2095
        %v2619 = vpop.permute.xlu0 %2618
        %2621 = vset.pattern.permute.xlu0 1
        %2622 = vperm.xlu0 %2621, %v2096
        %v2623 = vpop.permute.xlu0 %2622
        %2625 = vset.pattern.permute.xlu0 1
        %2626 = vperm.xlu0 %2625, %v2097
        %v2627 = vpop.permute.xlu0 %2626
        %2629 = vset.pattern.permute.xlu0 1
        %2630 = vperm.xlu0 %2629, %v2098
        %v2631 = vpop.permute.xlu0 %2630
        %2633 = vset.pattern.permute.xlu0 1
        %2634 = vperm.xlu0 %2633, %v2099
        %v2635 = vpop.permute.xlu0 %2634
        %2637 = vset.pattern.permute.xlu0 1
        %2638 = vperm.xlu0 %2637, %v2100
        %v2639 = vpop.permute.xlu0 %2638
        %v2641 = vadd.f32 %v2497, %v2547
        %v2642 = vadd.f32 %v2498, %v2547
        %v2643 = vadd.f32 %v2499, %v2551
        %v2644 = vadd.f32 %v2500, %v2551
        %v2645 = vadd.f32 %v2501, %v2555
        %v2646 = vadd.f32 %v2502, %v2555
        %v2647 = vadd.f32 %v2503, %v2559
        %v2648 = vadd.f32 %v2504, %v2559
        %v2649 = vadd.f32 %v2505, %v2563
        %v2650 = vadd.f32 %v2506, %v2563
        %v2651 = vadd.f32 %v2507, %v2567
        %v2652 = vadd.f32 %v2508, %v2567
        %v2653 = vadd.f32 %v2509, %v2571
        %v2654 = vadd.f32 %v2510, %v2571
        %v2655 = vadd.f32 %v2511, %v2575
        %v2656 = vadd.f32 %v2512, %v2575
        %v2657 = vadd.f32 %v2513, %v2579
        %v2658 = vadd.f32 %v2514, %v2579
        %v2659 = vadd.f32 %v2515, %v2583
        %v2660 = vadd.f32 %v2516, %v2583
        %v2661 = vadd.f32 %v2517, %v2587
        %v2662 = vadd.f32 %v2518, %v2587
        %v2663 = vadd.f32 %v2519, %v2591
        %v2664 = vadd.f32 %v2520, %v2591
        %v2665 = vadd.f32 %v2521, %v2595
        %v2666 = vadd.f32 %v2522, %v2595
        %v2667 = vadd.f32 %v2523, %v2599
        %v2668 = vadd.f32 %v2524, %v2599
        %v2669 = vadd.f32 %v2525, %v2603
        %v2670 = vadd.f32 %v2526, %v2603
        %v2671 = vadd.f32 %v2527, %v2607
        %v2672 = vadd.f32 %v2528, %v2607
        %v2673 = vadd.f32 %v2529, %v2611
        %v2674 = vadd.f32 %v2530, %v2611
        %v2675 = vadd.f32 %v2531, %v2615
        %v2676 = vadd.f32 %v2532, %v2615
        %v2677 = vadd.f32 %v2533, %v2619
        %v2678 = vadd.f32 %v2534, %v2619
        %v2679 = vadd.f32 %v2535, %v2623
        %v2680 = vadd.f32 %v2536, %v2623
        %v2681 = vadd.f32 %v2537, %v2627
        %v2682 = vadd.f32 %v2538, %v2627
        %v2683 = vadd.f32 %v2539, %v2631
        %v2684 = vadd.f32 %v2540, %v2631
        %v2685 = vadd.f32 %v2541, %v2635
        %v2686 = vadd.f32 %v2542, %v2635
        %v2687 = vadd.f32 %v2543, %v2639
        %v2688 = vadd.f32 %v2544, %v2639
        %v2689 = vld [vmem:[#allocation7] sm:$0xff]
        %v2690 = vld [vmem:[#allocation7 + $0x8] sm:$0xff]
        %v2691 = vld [vmem:[#allocation7 + $0x10] sm:$0xff]
        %v2692 = vld [vmem:[#allocation7 + $0x18] sm:$0xff]
        %v2693 = vld [vmem:[#allocation7 + $0x20] sm:$0xff]
        %v2694 = vld [vmem:[#allocation7 + $0x28] sm:$0xff]
        %v2695 = vld [vmem:[#allocation7 + $0x30] sm:$0xff]
        %v2696 = vld [vmem:[#allocation7 + $0x38] sm:$0x77]
        %v2697 = vpack.c.bf16 %v2643, %v2641
        %v2698 = vpack.c.bf16 %v2644, %v2642
        %v2699 = vpack.c.bf16 %v2647, %v2645
        %v2700 = vpack.c.bf16 %v2648, %v2646
        %v2701 = vpack.c.bf16 %v2651, %v2649
        %v2702 = vpack.c.bf16 %v2652, %v2650
        %v2703 = vpack.c.bf16 %v2655, %v2653
        %v2704 = vpack.c.bf16 %v2656, %v2654
        %v2705 = vpack.c.bf16 %v2659, %v2657
        %v2706 = vpack.c.bf16 %v2660, %v2658
        %v2707 = vpack.c.bf16 %v2663, %v2661
        %v2708 = vpack.c.bf16 %v2664, %v2662
        %v2709 = vpack.c.bf16 %v2667, %v2665
        %v2710 = vpack.c.bf16 %v2668, %v2666
        %v2711 = vpack.c.bf16 %v2671, %v2669
        %v2712 = vpack.c.bf16 %v2672, %v2670
        %v2713 = vpack.c.bf16 %v2675, %v2673
        %v2714 = vpack.c.bf16 %v2676, %v2674
        %v2715 = vpack.c.bf16 %v2679, %v2677
        %v2716 = vpack.c.bf16 %v2680, %v2678
        %v2717 = vpack.c.bf16 %v2683, %v2681
        %v2718 = vpack.c.bf16 %v2684, %v2682
        %v2719 = vpack.c.bf16 %v2687, %v2685
        %v2720 = vpack.c.bf16 %v2688, %v2686
        %v2729 = vunpack.c.l.b16 %v2689
        %v2730 = vunpack.c.h.b16 %v2689
        %v2731 = vunpack.c.l.b16 %v2690
        %v2732 = vunpack.c.h.b16 %v2690
        %v2733 = vunpack.c.l.b16 %v2691
        %v2734 = vunpack.c.h.b16 %v2691
        %v2735 = vunpack.c.l.b16 %v2692
        %v2736 = vunpack.c.h.b16 %v2692
        %v2737 = vunpack.c.l.b16 %v2693
        %v2738 = vunpack.c.h.b16 %v2693
        %v2739 = vunpack.c.l.b16 %v2694
        %v2740 = vunpack.c.h.b16 %v2694
        %v2741 = vunpack.c.l.b16 %v2695
        %v2742 = vunpack.c.h.b16 %v2695
        %v2743 = vunpack.c.l.b16 %v2696
        %v2744 = vunpack.c.h.b16 %v2696
        %v2745 = vpack.c.b16 %v2731, %v2729
        %v2746 = vpack.c.b16 %v2732, %v2730
        %v2747 = vpack.c.b16 %v2735, %v2733
        %v2748 = vpack.c.b16 %v2736, %v2734
        %v2749 = vpack.c.b16 %v2739, %v2737
        %v2750 = vpack.c.b16 %v2740, %v2738
        %v2751 = vpack.c.b16 %v2743, %v2741
        %v2752 = vpack.c.b16 %v2744, %v2742
        %v2758 = vsel %vm1880, %v2746, 0
        %v2761 = vsel %vm1880, %v2748, 0
        %v2764 = vsel %vm1880, %v2750, 0
        %v2767 = vsel %vm1880, %v2752, 0
        %v2770 = vsel %vm1917, %v2719, 0
        %v2773 = vsel %vm1917, %v2720, 0
        %2775 = vmatprep.subr.bf16.mxu0 %v2698
        %2776 = vmatpush1.bf16.msra.mxu0 %v2697
        %2777 = vmatprep.subr.bf16.mxu0 %v2700
        %2778 = vmatpush1.bf16.msra.mxu0 %v2699
        %2779 = vmatprep.subr.bf16.mxu0 %v2702
        %2780 = vmatpush1.bf16.msra.mxu0 %v2701
        %2781 = vmatprep.subr.bf16.mxu0 %v2704
        %2782 = vmatpush1.bf16.msra.mxu0 %v2703
        %2783 = vmatprep.subr.bf16.mxu0 %v2706
        %2784 = vmatpush1.bf16.msra.mxu0 %v2705
        %2785 = vmatprep.subr.bf16.mxu0 %v2708
        %2786 = vmatpush1.bf16.msra.mxu0 %v2707
        %2787 = vmatprep.subr.bf16.mxu0 %v2710
        %2788 = vmatpush1.bf16.msra.mxu0 %v2709
        %2789 = vmatprep.subr.bf16.mxu0 %v2712
        %2790 = vmatpush1.bf16.msra.mxu0 %v2711
        %2791 = vmatprep.subr.bf16.mxu0 %v2714
        %2792 = vmatpush1.bf16.msra.mxu0 %v2713
        %2793 = vmatprep.subr.bf16.mxu0 %v2716
        %2794 = vmatpush1.bf16.msra.mxu0 %v2715
        %2795 = vmatprep.subr.bf16.mxu0 %v2718
        %2796 = vmatpush1.bf16.msra.mxu0 %v2717
        %2797 = vmatprep.subr.bf16.mxu0 %v2773
        %2798 = vmatpush1.bf16.msra.mxu0 %v2770
        %2799 = vmatprep.subr.bf16.mxu0 0
        %2800 = vmatpush1.bf16.msra.mxu0 0
        %2801 = vmatprep.subr.bf16.mxu0 0
        %2802 = vmatpush1.bf16.msra.mxu0 0
        %2803 = vmatprep.subr.bf16.mxu0 0
        %2804 = vmatpush1.bf16.msra.mxu0 0
        %2805 = vmatprep.subr.bf16.mxu0 0
        %2806 = vmatpush1.bf16.msra.mxu0 0
        %2807 = vmatprep.mubr.bf16.mxu0 %v2758
        %2808 = vmatmul.mubr.bf16.gmra.mrb[0].mxu0 %v2745
        %v2809 = vpop.f32.mrb[0].mxu0
        %v2810 = vadd.f32 0.0, %v2809
        %v2811 = vpop.f32.mrb[0].mxu0
        %v2812 = vadd.f32 0.0, %v2811
        %v2813 = vpop.f32.mrb[0].mxu0
        %v2814 = vadd.f32 0.0, %v2813
        %v2815 = vpop.f32.mrb[0].mxu0
        %v2816 = vadd.f32 0.0, %v2815
        %2817 = vmatprep.mubr.bf16.mxu0 %v2761
        %2818 = vmatmul.mubr.bf16.gmra.mrb[0].mxu0 %v2747
        %v2819 = vpop.f32.mrb[0].mxu0
        %v2820 = vadd.f32 0.0, %v2819
        %v2821 = vpop.f32.mrb[0].mxu0
        %v2822 = vadd.f32 0.0, %v2821
        %v2823 = vpop.f32.mrb[0].mxu0
        %v2824 = vadd.f32 0.0, %v2823
        %v2825 = vpop.f32.mrb[0].mxu0
        %v2826 = vadd.f32 0.0, %v2825
        %2827 = vmatprep.mubr.bf16.mxu0 %v2764
        %2828 = vmatmul.mubr.bf16.gmra.mrb[0].mxu0 %v2749
        %v2829 = vpop.f32.mrb[0].mxu0
        %v2830 = vadd.f32 0.0, %v2829
        %v2831 = vpop.f32.mrb[0].mxu0
        %v2832 = vadd.f32 0.0, %v2831
        %v2833 = vpop.f32.mrb[0].mxu0
        %v2834 = vadd.f32 0.0, %v2833
        %v2835 = vpop.f32.mrb[0].mxu0
        %v2836 = vadd.f32 0.0, %v2835
        %2837 = vmatprep.mubr.bf16.mxu0 %v2767
        %2838 = vmatmul.mubr.bf16.gmra.mrb[0].mxu0 %v2751
        %v2839 = vpop.f32.mrb[0].mxu0
        %v2840 = vadd.f32 0.0, %v2839
        %v2841 = vpop.f32.mrb[0].mxu0
        %v2842 = vadd.f32 0.0, %v2841
        %v2843 = vpop.f32.mrb[0].mxu0
        %v2844 = vadd.f32 0.0, %v2843
        %v2845 = vpop.f32.mrb[0].mxu0
        %v2846 = vadd.f32 0.0, %v2845
        %2847 = vdwg.mxu0
        %v2848 = vld [vmem:[%s6 + $0x30] sm:$0xff]
        %v2849 = vld [vmem:[%s6 + $0x38] sm:$0x3f]
        %v2850 = vadd.f32 %v2810, %v2814
        %v2851 = vadd.f32 %v2850, %v2820
        %v2852 = vadd.f32 %v2851, %v2824
        %v2853 = vadd.f32 %v2852, %v2830
        %v2854 = vadd.f32 %v2853, %v2834
        %v2855 = vadd.f32 %v2854, %v2840
        %vm2856 = vcmask 1045504
        %v2857 = vsel %vm2856, %v2844, 0.0
        %v2858 = vadd.f32 %v2855, %v2857
        %v2859 = vrot.slane %v2858, 4
        %v2860 = vadd.f32 %v2858, %v2859
        %v2861 = vrot.slane %v2860, 2
        %v2862 = vadd.f32 %v2860, %v2861
        %v2863 = vrot.slane %v2862, 1
        %v2864 = vadd.f32 %v2862, %v2863
        %v2865 = vadd.f32 %v2812, %v2816
        %v2866 = vadd.f32 %v2865, %v2822
        %v2867 = vadd.f32 %v2866, %v2826
        %v2868 = vadd.f32 %v2867, %v2832
        %v2869 = vadd.f32 %v2868, %v2836
        %v2870 = vadd.f32 %v2869, %v2842
        %v2871 = vsel %vm2856, %v2846, 0.0
        %v2872 = vadd.f32 %v2870, %v2871
        %v2873 = vrot.slane %v2872, 4
        %v2874 = vadd.f32 %v2872, %v2873
        %v2875 = vrot.slane %v2874, 2
        %v2876 = vadd.f32 %v2874, %v2875
        %v2877 = vrot.slane %v2876, 1
        %v2878 = vadd.f32 %v2876, %v2877
        %v2879 = vmul.f32 %v2864, 0.016129032
        %v2880 = vmul.f32 %v2878, 0.016129032
        %v2881 = vmul.f32 %v2810, %v2810
        %v2882 = vmul.f32 %v2812, %v2812
        %v2883 = vmul.f32 %v2814, %v2814
        %v2884 = vmul.f32 %v2816, %v2816
        %v2885 = vmul.f32 %v2820, %v2820
        %v2886 = vmul.f32 %v2822, %v2822
        %v2887 = vmul.f32 %v2824, %v2824
        %v2888 = vmul.f32 %v2826, %v2826
        %v2889 = vmul.f32 %v2830, %v2830
        %v2890 = vmul.f32 %v2832, %v2832
        %v2891 = vmul.f32 %v2834, %v2834
        %v2892 = vmul.f32 %v2836, %v2836
        %v2893 = vmul.f32 %v2840, %v2840
        %v2894 = vmul.f32 %v2842, %v2842
        %v2895 = vmul.f32 %v2844, %v2844
        %v2896 = vmul.f32 %v2846, %v2846
        %v2897 = vadd.f32 %v2881, %v2883
        %v2898 = vadd.f32 %v2897, %v2885
        %v2899 = vadd.f32 %v2898, %v2887
        %v2900 = vadd.f32 %v2899, %v2889
        %v2901 = vadd.f32 %v2900, %v2891
        %v2902 = vadd.f32 %v2901, %v2893
        %v2903 = vsel %vm2856, %v2895, 0.0
        %v2904 = vadd.f32 %v2902, %v2903
        %v2905 = vrot.slane %v2904, 4
        %v2906 = vadd.f32 %v2904, %v2905
        %v2907 = vrot.slane %v2906, 2
        %v2908 = vadd.f32 %v2906, %v2907
        %v2909 = vrot.slane %v2908, 1
        %v2910 = vadd.f32 %v2908, %v2909
        %v2911 = vadd.f32 %v2882, %v2884
        %v2912 = vadd.f32 %v2911, %v2886
        %v2913 = vadd.f32 %v2912, %v2888
        %v2914 = vadd.f32 %v2913, %v2890
        %v2915 = vadd.f32 %v2914, %v2892
        %v2916 = vadd.f32 %v2915, %v2894
        %v2917 = vsel %vm2856, %v2896, 0.0
        %v2918 = vadd.f32 %v2916, %v2917
        %v2919 = vrot.slane %v2918, 4
        %v2920 = vadd.f32 %v2918, %v2919
        %v2921 = vrot.slane %v2920, 2
        %v2922 = vadd.f32 %v2920, %v2921
        %v2923 = vrot.slane %v2922, 1
        %v2924 = vadd.f32 %v2922, %v2923
        %v2925 = vmul.f32 %v2910, 0.016129032
        %v2926 = vmul.f32 %v2924, 0.016129032
        %v2927 = vmul.f32 %v2879, %v2879
        %v2928 = vmul.f32 %v2880, %v2880
        %v2929 = vsub.f32 %v2925, %v2927
        %v2930 = vsub.f32 %v2926, %v2928
        %v2931 = vsub.f32 %v2840, %v2879
        %v2932 = vsub.f32 %v2842, %v2880
        %v2933 = vsub.f32 %v2844, %v2879
        %v2934 = vsub.f32 %v2846, %v2880
        %v2935 = vadd.f32 %v2929, 1e-05
        %v2936 = vadd.f32 %v2930, 1e-05
        %v2937 = vrsqrt.pop %v2935
        %v2938 = vrsqrt.pop %v2936
        %v2939 = vmul.f32 %v2931, %v2937
        %v2940 = vmul.f32 %v2932, %v2938
        %v2941 = vmul.f32 %v2933, %v2937
        %v2942 = vmul.f32 %v2934, %v2938
        %2944 = vset.pattern.permute.xlu0 0
        %2945 = vperm.xlu0 %2944, %v2848
        %v2946 = vpop.permute.xlu0 %2945
        %2949 = vset.pattern.permute.xlu0 0
        %2950 = vperm.xlu0 %2949, %v2849
        %v2951 = vpop.permute.xlu0 %2950
        %v2953 = vmul.f32 %v2939, %v2946
        %v2954 = vmul.f32 %v2940, %v2946
        %v2955 = vmul.f32 %v2941, %v2951
        %v2956 = vmul.f32 %v2942, %v2951
        %2957 = vset.pattern.permute.xlu0 1
        %2958 = vperm.xlu0 %2957, %v2848
        %v2959 = vpop.permute.xlu0 %2958
        %2961 = vset.pattern.permute.xlu0 1
        %2962 = vperm.xlu0 %2961, %v2849
        %v2963 = vpop.permute.xlu0 %2962
        %v2965 = vadd.f32 %v2953, %v2959
        %v2966 = vadd.f32 %v2954, %v2959
        %v2967 = vadd.f32 %v2955, %v2963
        %v2968 = vadd.f32 %v2956, %v2963
        %v2969 = vld [vmem:[%s7] sm:$0xf]
        %v2970 = vld [vmem:[%s7 + $0x4] sm:$0xf]
        %v2971 = vld [vmem:[%s7 + $0x8] sm:$0xf]
        %v2972 = vld [vmem:[%s7 + $0xc] sm:$0xf]
        %v2973 = vld [vmem:[%s7 + $0x10] sm:$0xf]
        %v2974 = vld [vmem:[%s7 + $0x14] sm:$0xf]
        %v2975 = vld [vmem:[%s7 + $0x18] sm:$0xf]
        %v2976 = vld [vmem:[%s7 + $0x1c] sm:$0xf]
        %v2977 = vld [vmem:[#allocation8] sm:$0xf]
        %v2978 = vld [vmem:[#allocation8 + $0x4] sm:$0xf]
        %v2979 = vld [vmem:[#allocation8 + $0x8] sm:$0xf]
        %v2980 = vld [vmem:[#allocation8 + $0xc] sm:$0xf]
        %v2981 = vld [vmem:[#allocation8 + $0x10] sm:$0xf]
        %v2982 = vld [vmem:[#allocation8 + $0x14] sm:$0xf]
        %v2983 = vld [vmem:[#allocation8 + $0x18] sm:$0xf]
        %v2984 = vld [vmem:[#allocation8 + $0x1c] sm:$0x1]
        %v2985 = vld [vmem:[%s11] sm:$0xf]
        %v2986 = vld [vmem:[%s11 + $0x4] sm:$0xf]
        %v2987 = vld [vmem:[%s11 + $0x8] sm:$0xf]
        %v2988 = vld [vmem:[%s11 + $0xc] sm:$0xf]
        %v2989 = vld [vmem:[%s11 + $0x10] sm:$0xf]
        %v2990 = vld [vmem:[%s11 + $0x14] sm:$0xf]
        %v2991 = vld [vmem:[%s11 + $0x18] sm:$0xf]
        %v2992 = vld [vmem:[%s11 + $0x1c] sm:$0x1]
        %v2993 = vld [vmem:[%s8] sm:$0x3]
        %v2994 = vld [vmem:[%s10] sm:$0x3]
        %v2995 = vld [vmem:[%s12] sm:$0x3]
        %v2996 = vld [vmem:[%s14] sm:$0x3]
        %v2997 = vpack.c.bf16 %v2967, %v2965
        %v2999 = vrot.slane %v2997, 3
        %v3008 = vunpack.c.l.b16 %v2969
        %v3009 = vunpack.c.l.b16 %v2970
        %v3010 = vunpack.c.l.b16 %v2971
        %v3011 = vunpack.c.l.b16 %v2972
        %v3012 = vunpack.c.l.b16 %v2973
        %v3013 = vunpack.c.l.b16 %v2974
        %v3014 = vunpack.c.l.b16 %v2975
        %v3015 = vunpack.c.l.b16 %v2976
        %v3016 = vpack.c.b16 %v3009, %v3008
        %v3017 = vpack.c.b16 %v3011, %v3010
        %v3018 = vpack.c.b16 %v3013, %v3012
        %v3019 = vpack.c.b16 %v3015, %v3014
        %v3025 = vsel %vm921, %v2999, 0
        %3027 = vmatprep.subr.bf16.mxu0 0
        %3028 = vmatpush1.bf16.msra.mxu0 %v3016
        %3029 = vmatprep.subr.bf16.mxu0 0
        %3030 = vmatpush1.bf16.msra.mxu0 %v3017
        %3031 = vmatprep.subr.bf16.mxu0 0
        %3032 = vmatpush1.bf16.msra.mxu0 %v3018
        %3033 = vmatprep.subr.bf16.mxu0 0
        %3034 = vmatpush1.bf16.msra.mxu0 %v3019
        %3035 = vmatprep.subr.bf16.mxu0 0
        %3036 = vmatpush1.bf16.msra.mxu0 0
        %3037 = vmatprep.subr.bf16.mxu0 0
        %3038 = vmatpush1.bf16.msra.mxu0 0
        %3039 = vmatprep.subr.bf16.mxu0 0
        %3040 = vmatpush1.bf16.msra.mxu0 0
        %3041 = vmatprep.subr.bf16.mxu0 0
        %3042 = vmatpush1.bf16.msra.mxu0 0
        %3043 = vmatprep.subr.bf16.mxu0 0
        %3044 = vmatpush1.bf16.msra.mxu0 0
        %3045 = vmatprep.subr.bf16.mxu0 0
        %3046 = vmatpush1.bf16.msra.mxu0 0
        %3047 = vmatprep.subr.bf16.mxu0 0
        %3048 = vmatpush1.bf16.msra.mxu0 0
        %3049 = vmatprep.subr.bf16.mxu0 0
        %3050 = vmatpush1.bf16.msra.mxu0 0
        %3051 = vmatprep.subr.bf16.mxu0 0
        %3052 = vmatpush1.bf16.msra.mxu0 0
        %3053 = vmatprep.subr.bf16.mxu0 0
        %3054 = vmatpush1.bf16.msra.mxu0 0
        %3055 = vmatprep.subr.bf16.mxu0 0
        %3056 = vmatpush1.bf16.msra.mxu0 0
        %3057 = vmatprep.subr.bf16.mxu0 0
        %3058 = vmatpush1.bf16.msra.mxu0 0
        %3059 = vmatprep.mubr.bf16.mxu0 0
        %3060 = vmatmul.mubr.bf16.gmra.mrb[0].mxu0 %v3025
        %v3061 = vpop.f32.mrb[0].mxu0
        %v3062 = vadd.f32 0.0, %v3061
        %v3063 = vpop.f32.mrb[0].mxu0
        %v3064 = vpop.f32.mrb[0].mxu0
        %v3065 = vpop.f32.mrb[0].mxu0
        %3066 = vdwg.mxu0
        %vm3067 = vcmask 465920
        %v3068 = vsel %vm3067, %v3062, 0.0
        %3069 = vadd.xlane.f32.xlu0 %v3068
        %v3070 = vpop.xlane.xlu0 %3069
        %v3071 = vmul.f32 %v3070, 0.01754386
        %v3072 = vmul.f32 %v3062, %v3062
        %v3073 = vsel %vm3067, %v3072, 0.0
        %3074 = vadd.xlane.f32.xlu0 %v3073
        %v3075 = vpop.xlane.xlu0 %3074
        %v3076 = vmul.f32 %v3075, 0.01754386
        %v3077 = vmul.f32 %v3071, %v3071
        %v3078 = vsub.f32 %v3076, %v3077
        %v3079 = vsub.f32 %v3062, %v3071
        %v3080 = vadd.f32 %v3078, 1e-05
        %v3081 = vrsqrt.pop %v3080
        %v3082 = vmul.f32 %v3079, %v3081
        %v3083 = vlaneseq
        %v3084 = vshrl.u32 %v3083, 7
        %v3085 = vsub.s32 0, %v3084
        %v3086 = vrot.slane %v2993, %v3085
        %v3087 = vmul.f32 %v3082, %v3086
        %v3088 = vlaneseq
        %v3089 = vshrl.u32 %v3088, 7
        %v3090 = vsub.s32 1, %v3089
        %v3091 = vrot.slane %v2993, %v3090
        %v3092 = vadd.f32 %v3087, %v3091
        %v3093 = vpack.c.bf16 %v3092, %v3092
        %v3102 = vunpack.c.l.b16 %v2977
        %v3103 = vunpack.c.l.b16 %v2978
        %v3104 = vunpack.c.l.b16 %v2979
        %v3105 = vunpack.c.l.b16 %v2980
        %v3106 = vunpack.c.l.b16 %v2981
        %v3107 = vunpack.c.l.b16 %v2982
        %v3108 = vunpack.c.l.b16 %v2983
        %v3109 = vunpack.c.l.b16 %v2984
        %v3110 = vpack.c.b16 %v3103, %v3102
        %v3111 = vpack.c.b16 %v3105, %v3104
        %v3112 = vpack.c.b16 %v3107, %v3106
        %v3113 = vpack.c.b16 %v3109, %v3108
        %v3118 = vsel %vm3067, %v3093, 0
        %vm3120 = vcmask 1043456
        %v3121 = vsel %vm3120, 4294967295, 65535
        %v3122 = vsel %vm1917, %v3121, 0
        %v3124 = vand.u32 %v3113, %v3122
        %3126 = vmatprep.subr.bf16.mxu0 0
        %3127 = vmatpush1.bf16.msra.mxu0 %v3110
        %3128 = vmatprep.subr.bf16.mxu0 0
        %3129 = vmatpush1.bf16.msra.mxu0 %v3111
        %3130 = vmatprep.subr.bf16.mxu0 0
        %3131 = vmatpush1.bf16.msra.mxu0 %v3112
        %3132 = vmatprep.subr.bf16.mxu0 0
        %3133 = vmatpush1.bf16.msra.mxu0 %v3124
        %3134 = vmatprep.subr.bf16.mxu0 0
        %3135 = vmatpush1.bf16.msra.mxu0 0
        %3136 = vmatprep.subr.bf16.mxu0 0
        %3137 = vmatpush1.bf16.msra.mxu0 0
        %3138 = vmatprep.subr.bf16.mxu0 0
        %3139 = vmatpush1.bf16.msra.mxu0 0
        %3140 = vmatprep.subr.bf16.mxu0 0
        %3141 = vmatpush1.bf16.msra.mxu0 0
        %3142 = vmatprep.subr.bf16.mxu0 0
        %3143 = vmatpush1.bf16.msra.mxu0 0
        %3144 = vmatprep.subr.bf16.mxu0 0
        %3145 = vmatpush1.bf16.msra.mxu0 0
        %3146 = vmatprep.subr.bf16.mxu0 0
        %3147 = vmatpush1.bf16.msra.mxu0 0
        %3148 = vmatprep.subr.bf16.mxu0 0
        %3149 = vmatpush1.bf16.msra.mxu0 0
        %3150 = vmatprep.subr.bf16.mxu0 0
        %3151 = vmatpush1.bf16.msra.mxu0 0
        %3152 = vmatprep.subr.bf16.mxu0 0
        %3153 = vmatpush1.bf16.msra.mxu0 0
        %3154 = vmatprep.subr.bf16.mxu0 0
        %3155 = vmatpush1.bf16.msra.mxu0 0
        %3156 = vmatprep.subr.bf16.mxu0 0
        %3157 = vmatpush1.bf16.msra.mxu0 0
        %3158 = vmatprep.mubr.bf16.mxu0 0
        %3159 = vmatmul.mubr.bf16.gmra.mrb[0].mxu0 %v3118
        %v3160 = vpop.f32.mrb[0].mxu0
        %v3161 = vadd.f32 0.0, %v3160
        %v3162 = vpop.f32.mrb[0].mxu0
        %v3163 = vpop.f32.mrb[0].mxu0
        %v3164 = vpop.f32.mrb[0].mxu0
        %3165 = vdwg.mxu0
        %v3166 = vsel %vm3067, %v3161, 0.0
        %3167 = vadd.xlane.f32.xlu0 %v3166
        %v3168 = vpop.xlane.xlu0 %3167
        %v3169 = vmul.f32 %v3168, 0.01754386
        %v3170 = vmul.f32 %v3161, %v3161
        %v3171 = vsel %vm3067, %v3170, 0.0
        %3172 = vadd.xlane.f32.xlu0 %v3171
        %v3173 = vpop.xlane.xlu0 %3172
        %v3174 = vmul.f32 %v3173, 0.01754386
        %v3175 = vmul.f32 %v3169, %v3169
        %v3176 = vsub.f32 %v3174, %v3175
        %v3177 = vsub.f32 %v3161, %v3169
        %v3178 = vadd.f32 %v3176, 1e-05
        %v3179 = vrsqrt.pop %v3178
        %v3180 = vmul.f32 %v3177, %v3179
        %v3181 = vlaneseq
        %v3182 = vshrl.u32 %v3181, 7
        %v3183 = vsub.s32 0, %v3182
        %v3184 = vrot.slane %v2994, %v3183
        %v3185 = vmul.f32 %v3180, %v3184
        %v3186 = vlaneseq
        %v3187 = vshrl.u32 %v3186, 7
        %v3188 = vsub.s32 1, %v3187
        %v3189 = vrot.slane %v2994, %v3188
        %v3190 = vadd.f32 %v3185, %v3189
        %v3191 = vpack.c.bf16 %v3190, %v3190
        %v3200 = vunpack.c.l.b16 %v2985
        %v3201 = vunpack.c.l.b16 %v2986
        %v3202 = vunpack.c.l.b16 %v2987
        %v3203 = vunpack.c.l.b16 %v2988
        %v3204 = vunpack.c.l.b16 %v2989
        %v3205 = vunpack.c.l.b16 %v2990
        %v3206 = vunpack.c.l.b16 %v2991
        %v3207 = vunpack.c.l.b16 %v2992
        %v3208 = vpack.c.b16 %v3201, %v3200
        %v3209 = vpack.c.b16 %v3203, %v3202
        %v3210 = vpack.c.b16 %v3205, %v3204
        %v3211 = vpack.c.b16 %v3207, %v3206
        %v3216 = vsel %vm3067, %v3191, 0
        %v3219 = vand.u32 %v3211, %v3122
        %3221 = vmatprep.subr.bf16.mxu0 0
        %3222 = vmatpush1.bf16.msra.mxu0 %v3208
        %3223 = vmatprep.subr.bf16.mxu0 0
        %3224 = vmatpush1.bf16.msra.mxu0 %v3209
        %3225 = vmatprep.subr.bf16.mxu0 0
        %3226 = vmatpush1.bf16.msra.mxu0 %v3210
        %3227 = vmatprep.subr.bf16.mxu0 0
        %3228 = vmatpush1.bf16.msra.mxu0 %v3219
        %3229 = vmatprep.subr.bf16.mxu0 0
        %3230 = vmatpush1.bf16.msra.mxu0 0
        %3231 = vmatprep.subr.bf16.mxu0 0
        %3232 = vmatpush1.bf16.msra.mxu0 0
        %3233 = vmatprep.subr.bf16.mxu0 0
        %3234 = vmatpush1.bf16.msra.mxu0 0
        %3235 = vmatprep.subr.bf16.mxu0 0
        %3236 = vmatpush1.bf16.msra.mxu0 0
        %3237 = vmatprep.subr.bf16.mxu0 0
        %3238 = vmatpush1.bf16.msra.mxu0 0
        %3239 = vmatprep.subr.bf16.mxu0 0
        %3240 = vmatpush1.bf16.msra.mxu0 0
        %3241 = vmatprep.subr.bf16.mxu0 0
        %3242 = vmatpush1.bf16.msra.mxu0 0
        %3243 = vmatprep.subr.bf16.mxu0 0
        %3244 = vmatpush1.bf16.msra.mxu0 0
        %3245 = vmatprep.subr.bf16.mxu0 0
        %3246 = vmatpush1.bf16.msra.mxu0 0
        %3247 = vmatprep.subr.bf16.mxu0 0
        %3248 = vmatpush1.bf16.msra.mxu0 0
        %3249 = vmatprep.subr.bf16.mxu0 0
        %3250 = vmatpush1.bf16.msra.mxu0 0
        %3251 = vmatprep.subr.bf16.mxu0 0
        %3252 = vmatpush1.bf16.msra.mxu0 0
        %3253 = vmatprep.mubr.bf16.mxu0 0
        %3254 = vmatmul.mubr.bf16.gmra.mrb[0].mxu0 %v3216
        %v3255 = vpop.f32.mrb[0].mxu0
        %v3256 = vadd.f32 0.0, %v3255
        %v3257 = vpop.f32.mrb[0].mxu0
        %v3258 = vpop.f32.mrb[0].mxu0
        %v3259 = vpop.f32.mrb[0].mxu0
        %3260 = vdwg.mxu0
        %vm3261 = vcmask 154624
        %v3262 = vsel %vm3261, %v3256, 0.0
        %3263 = vadd.xlane.f32.xlu0 %v3262
        %v3264 = vpop.xlane.xlu0 %3263
        %v3265 = vmul.f32 %v3264, 0.05263158
        %v3266 = vmul.f32 %v3256, %v3256
        %v3267 = vsel %vm3261, %v3266, 0.0
        %3268 = vadd.xlane.f32.xlu0 %v3267
        %v3269 = vpop.xlane.xlu0 %3268
        %v3270 = vmul.f32 %v3269, 0.05263158
        %v3271 = vmul.f32 %v3265, %v3265
        %v3272 = vsub.f32 %v3270, %v3271
        %v3273 = vsub.f32 %v3256, %v3265
        %v3274 = vadd.f32 %v3272, 1e-05
        %v3275 = vrsqrt.pop %v3274
        %v3276 = vmul.f32 %v3273, %v3275
        %v3277 = vlaneseq
        %v3278 = vshrl.u32 %v3277, 7
        %v3279 = vsub.s32 0, %v3278
        %v3280 = vrot.slane %v2995, %v3279
        %v3281 = vmul.f32 %v3276, %v3280
        %v3282 = vlaneseq
        %v3283 = vshrl.u32 %v3282, 7
        %v3284 = vsub.s32 1, %v3283
        %v3285 = vrot.slane %v2995, %v3284
        %v3286 = vadd.f32 %v3281, %v3285
        %v3287 = vld [vmem:[%s13] sm:$0xff]
        %v3288 = vld [vmem:[%s13 + $0x8] sm:$0xff]
        %v3289 = vld [vmem:[%s13 + $0x10] sm:$0xff]
        %v3290 = vld [vmem:[%s13 + $0x18] sm:$0xff]
        %v3291 = vld [vmem:[%s13 + $0x20] sm:$0x7]
        %v3292 = vld [vmem:[%s13 + $0x28] sm:$0x7]
        %v3294 = vsel %vm3261, %v3286, 0
        %vm3296 = vcmask 1042432
        %v3298 = vsel %vm3296, %v3291, 0
        %v3301 = vsel %vm3296, %v3292, 0
        %3303 = vmatprep.subr.mxu0 %v3288
        %3304 = vmatpush1.msra.mxu0 %v3287
        %3305 = vmatprep.subr.mxu0 %v3290
        %3306 = vmatpush1.msra.mxu0 %v3289
        %3307 = vmatprep.subr.mxu0 %v3301
        %3308 = vmatpush1.msra.mxu0 %v3298
        %3309 = vmatprep.subr.mxu0 0.0
        %3310 = vmatpush1.msra.mxu0 0.0
        %3311 = vmatprep.subr.mxu0 0.0
        %3312 = vmatpush1.msra.mxu0 0.0
        %3313 = vmatprep.subr.mxu0 0.0
        %3314 = vmatpush1.msra.mxu0 0.0
        %3315 = vmatprep.subr.mxu0 0.0
        %3316 = vmatpush1.msra.mxu0 0.0
        %3317 = vmatprep.subr.mxu0 0.0
        %3318 = vmatpush1.msra.mxu0 0.0
        %3319 = vmatprep.subr.mxu0 0.0
        %3320 = vmatpush1.msra.mxu0 0.0
        %3321 = vmatprep.subr.mxu0 0.0
        %3322 = vmatpush1.msra.mxu0 0.0
        %3323 = vmatprep.subr.mxu0 0.0
        %3324 = vmatpush1.msra.mxu0 0.0
        %3325 = vmatprep.subr.mxu0 0.0
        %3326 = vmatpush1.msra.mxu0 0.0
        %3327 = vmatprep.subr.mxu0 0.0
        %3328 = vmatpush1.msra.mxu0 0.0
        %3329 = vmatprep.subr.mxu0 0.0
        %3330 = vmatpush1.msra.mxu0 0.0
        %3331 = vmatprep.subr.mxu0 0.0
        %3332 = vmatpush1.msra.mxu0 0.0
        %3333 = vmatprep.subr.mxu0 0.0
        %3334 = vmatpush1.msra.mxu0 0.0
        %3335 = vmatprep.subr.mxu0 0.0
        %3336 = vmatpush1.msra.mxu0 0.0
        %3337 = vmatprep.subr.mxu0 0.0
        %3338 = vmatpush1.msra.mxu0 0.0
        %3339 = vmatprep.subr.mxu0 0.0
        %3340 = vmatpush1.msra.mxu0 0.0
        %3341 = vmatprep.subr.mxu0 0.0
        %3342 = vmatpush1.msra.mxu0 0.0
        %3343 = vmatprep.subr.mxu0 0.0
        %3344 = vmatpush1.msra.mxu0 0.0
        %3345 = vmatprep.subr.mxu0 0.0
        %3346 = vmatpush1.msra.mxu0 0.0
        %3347 = vmatprep.subr.mxu0 0.0
        %3348 = vmatpush1.msra.mxu0 0.0
        %3349 = vmatprep.subr.mxu0 0.0
        %3350 = vmatpush1.msra.mxu0 0.0
        %3351 = vmatprep.subr.mxu0 0.0
        %3352 = vmatpush1.msra.mxu0 0.0
        %3353 = vmatprep.subr.mxu0 0.0
        %3354 = vmatpush1.msra.mxu0 0.0
        %3355 = vmatprep.subr.mxu0 0.0
        %3356 = vmatpush1.msra.mxu0 0.0
        %3357 = vmatprep.subr.mxu0 0.0
        %3358 = vmatpush1.msra.mxu0 0.0
        %3359 = vmatprep.subr.mxu0 0.0
        %3360 = vmatpush1.msra.mxu0 0.0
        %3361 = vmatprep.subr.mxu0 0.0
        %3362 = vmatpush1.msra.mxu0 0.0
        %3363 = vmatprep.subr.mxu0 0.0
        %3364 = vmatpush1.msra.mxu0 0.0
        %3365 = vmatprep.subr.mxu0 0.0
        %3366 = vmatpush1.msra.mxu0 0.0
        %3367 = vmatprep.mubr.f32.mxu0 0.0
        %3368 = vmatmul.mubr.f32.gmra.mrb[0].mxu0 %v3294
        %v3369 = vpop.f32.mrb[0].mxu0
        %v3370 = vadd.f32 0.0, %v3369
        %v3371 = vpop.f32.mrb[0].mxu0
        %v3372 = vadd.f32 0.0, %v3371
        %3373 = vdwg.mxu0
        %v3375 = vlaneseq
        %v3376 = vshrl.u32 %v3375, 7
        %v3377 = vsub.s32 0, %v3376
        %v3378 = vrot.slane %v2996, %v3377
        %v3379 = vlaneseq
        %v3380 = vshrl.u32 %v3379, 7
        %v3381 = vsub.s32 1, %v3380
        %v3382 = vrot.slane %v2996, %v3381
        %v3385 = vadd.f32 %v3378, %v3370
        %v3386 = vadd.f32 %v3382, %v3372
        %3387 = vrot.lane.b32.xlu0 %v2999, 64
        %v3388 = vpop.permute.xlu0 %3387
        %v3390 = vsel %vm921, %v3388, 0
        %3392 = vmatprep.subr.bf16.mxu0 0
        %3393 = vmatpush1.bf16.msra.mxu0 %v3016
        %3394 = vmatprep.subr.bf16.mxu0 0
        %3395 = vmatpush1.bf16.msra.mxu0 %v3017
        %3396 = vmatprep.subr.bf16.mxu0 0
        %3397 = vmatpush1.bf16.msra.mxu0 %v3018
        %3398 = vmatprep.subr.bf16.mxu0 0
        %3399 = vmatpush1.bf16.msra.mxu0 %v3019
        %3400 = vmatprep.subr.bf16.mxu0 0
        %3401 = vmatpush1.bf16.msra.mxu0 0
        %3402 = vmatprep.subr.bf16.mxu0 0
        %3403 = vmatpush1.bf16.msra.mxu0 0
        %3404 = vmatprep.subr.bf16.mxu0 0
        %3405 = vmatpush1.bf16.msra.mxu0 0
        %3406 = vmatprep.subr.bf16.mxu0 0
        %3407 = vmatpush1.bf16.msra.mxu0 0
        %3408 = vmatprep.subr.bf16.mxu0 0
        %3409 = vmatpush1.bf16.msra.mxu0 0
        %3410 = vmatprep.subr.bf16.mxu0 0
        %3411 = vmatpush1.bf16.msra.mxu0 0
        %3412 = vmatprep.subr.bf16.mxu0 0
        %3413 = vmatpush1.bf16.msra.mxu0 0
        %3414 = vmatprep.subr.bf16.mxu0 0
        %3415 = vmatpush1.bf16.msra.mxu0 0
        %3416 = vmatprep.subr.bf16.mxu0 0
        %3417 = vmatpush1.bf16.msra.mxu0 0
        %3418 = vmatprep.subr.bf16.mxu0 0
        %3419 = vmatpush1.bf16.msra.mxu0 0
        %3420 = vmatprep.subr.bf16.mxu0 0
        %3421 = vmatpush1.bf16.msra.mxu0 0
        %3422 = vmatprep.subr.bf16.mxu0 0
        %3423 = vmatpush1.bf16.msra.mxu0 0
        %3424 = vmatprep.mubr.bf16.mxu0 0
        %3425 = vmatmul.mubr.bf16.gmra.mrb[0].mxu0 %v3390
        %v3426 = vpop.f32.mrb[0].mxu0
        %v3427 = vadd.f32 0.0, %v3426
        %v3428 = vpop.f32.mrb[0].mxu0
        %v3429 = vpop.f32.mrb[0].mxu0
        %v3430 = vpop.f32.mrb[0].mxu0
        %3431 = vdwg.mxu0
        %v3432 = vsel %vm3067, %v3427, 0.0
        %3433 = vadd.xlane.f32.xlu0 %v3432
        %v3434 = vpop.xlane.xlu0 %3433
        %v3435 = vmul.f32 %v3434, 0.01754386
        %v3436 = vmul.f32 %v3427, %v3427
        %v3437 = vsel %vm3067, %v3436, 0.0
        %3438 = vadd.xlane.f32.xlu0 %v3437
        %v3439 = vpop.xlane.xlu0 %3438
        %v3440 = vmul.f32 %v3439, 0.01754386
        %v3441 = vmul.f32 %v3435, %v3435
        %v3442 = vsub.f32 %v3440, %v3441
        %v3443 = vsub.f32 %v3427, %v3435
        %v3444 = vadd.f32 %v3442, 1e-05
        %v3445 = vrsqrt.pop %v3444
        %v3446 = vmul.f32 %v3443, %v3445
        %v3447 = vmul.f32 %v3446, %v3086
        %v3448 = vadd.f32 %v3447, %v3091
        %v3449 = vpack.c.bf16 %v3448, %v3448
        %v3451 = vsel %vm3067, %v3449, 0
        %3453 = vmatprep.subr.bf16.mxu0 0
        %3454 = vmatpush1.bf16.msra.mxu0 %v3110
        %3455 = vmatprep.subr.bf16.mxu0 0
        %3456 = vmatpush1.bf16.msra.mxu0 %v3111
        %3457 = vmatprep.subr.bf16.mxu0 0
        %3458 = vmatpush1.bf16.msra.mxu0 %v3112
        %3459 = vmatprep.subr.bf16.mxu0 0
        %3460 = vmatpush1.bf16.msra.mxu0 %v3124
        %3461 = vmatprep.subr.bf16.mxu0 0
        %3462 = vmatpush1.bf16.msra.mxu0 0
        %3463 = vmatprep.subr.bf16.mxu0 0
        %3464 = vmatpush1.bf16.msra.mxu0 0
        %3465 = vmatprep.subr.bf16.mxu0 0
        %3466 = vmatpush1.bf16.msra.mxu0 0
        %3467 = vmatprep.subr.bf16.mxu0 0
        %3468 = vmatpush1.bf16.msra.mxu0 0
        %3469 = vmatprep.subr.bf16.mxu0 0
        %3470 = vmatpush1.bf16.msra.mxu0 0
        %3471 = vmatprep.subr.bf16.mxu0 0
        %3472 = vmatpush1.bf16.msra.mxu0 0
        %3473 = vmatprep.subr.bf16.mxu0 0
        %3474 = vmatpush1.bf16.msra.mxu0 0
        %3475 = vmatprep.subr.bf16.mxu0 0
        %3476 = vmatpush1.bf16.msra.mxu0 0
        %3477 = vmatprep.subr.bf16.mxu0 0
        %3478 = vmatpush1.bf16.msra.mxu0 0
        %3479 = vmatprep.subr.bf16.mxu0 0
        %3480 = vmatpush1.bf16.msra.mxu0 0
        %3481 = vmatprep.subr.bf16.mxu0 0
        %3482 = vmatpush1.bf16.msra.mxu0 0
        %3483 = vmatprep.subr.bf16.mxu0 0
        %3484 = vmatpush1.bf16.msra.mxu0 0
        %3485 = vmatprep.mubr.bf16.mxu0 0
        %3486 = vmatmul.mubr.bf16.gmra.mrb[0].mxu0 %v3451
        %v3487 = vpop.f32.mrb[0].mxu0
        %v3488 = vadd.f32 0.0, %v3487
        %v3489 = vpop.f32.mrb[0].mxu0
        %v3490 = vpop.f32.mrb[0].mxu0
        %v3491 = vpop.f32.mrb[0].mxu0
        %3492 = vdwg.mxu0
        %v3493 = vsel %vm3067, %v3488, 0.0
        %3494 = vadd.xlane.f32.xlu0 %v3493
        %v3495 = vpop.xlane.xlu0 %3494
        %v3496 = vmul.f32 %v3495, 0.01754386
        %v3497 = vmul.f32 %v3488, %v3488
        %v3498 = vsel %vm3067, %v3497, 0.0
        %3499 = vadd.xlane.f32.xlu0 %v3498
        %v3500 = vpop.xlane.xlu0 %3499
        %v3501 = vmul.f32 %v3500, 0.01754386
        %v3502 = vmul.f32 %v3496, %v3496
        %v3503 = vsub.f32 %v3501, %v3502
        %v3504 = vsub.f32 %v3488, %v3496
        %v3505 = vadd.f32 %v3503, 1e-05
        %v3506 = vrsqrt.pop %v3505
        %v3507 = vmul.f32 %v3504, %v3506
        %v3508 = vmul.f32 %v3507, %v3184
        %v3509 = vadd.f32 %v3508, %v3189
        %v3510 = vpack.c.bf16 %v3509, %v3509
        %v3512 = vsel %vm3067, %v3510, 0
        %3514 = vmatprep.subr.bf16.mxu0 0
        %3515 = vmatpush1.bf16.msra.mxu0 %v3208
        %3516 = vmatprep.subr.bf16.mxu0 0
        %3517 = vmatpush1.bf16.msra.mxu0 %v3209
        %3518 = vmatprep.subr.bf16.mxu0 0
        %3519 = vmatpush1.bf16.msra.mxu0 %v3210
        %3520 = vmatprep.subr.bf16.mxu0 0
        %3521 = vmatpush1.bf16.msra.mxu0 %v3219
        %3522 = vmatprep.subr.bf16.mxu0 0
        %3523 = vmatpush1.bf16.msra.mxu0 0
        %3524 = vmatprep.subr.bf16.mxu0 0
        %3525 = vmatpush1.bf16.msra.mxu0 0
        %3526 = vmatprep.subr.bf16.mxu0 0
        %3527 = vmatpush1.bf16.msra.mxu0 0
        %3528 = vmatprep.subr.bf16.mxu0 0
        %3529 = vmatpush1.bf16.msra.mxu0 0
        %3530 = vmatprep.subr.bf16.mxu0 0
        %3531 = vmatpush1.bf16.msra.mxu0 0
        %3532 = vmatprep.subr.bf16.mxu0 0
        %3533 = vmatpush1.bf16.msra.mxu0 0
        %3534 = vmatprep.subr.bf16.mxu0 0
        %3535 = vmatpush1.bf16.msra.mxu0 0
        %3536 = vmatprep.subr.bf16.mxu0 0
        %3537 = vmatpush1.bf16.msra.mxu0 0
        %3538 = vmatprep.subr.bf16.mxu0 0
        %3539 = vmatpush1.bf16.msra.mxu0 0
        %3540 = vmatprep.subr.bf16.mxu0 0
        %3541 = vmatpush1.bf16.msra.mxu0 0
        %3542 = vmatprep.subr.bf16.mxu0 0
        %3543 = vmatpush1.bf16.msra.mxu0 0
        %3544 = vmatprep.subr.bf16.mxu0 0
        %3545 = vmatpush1.bf16.msra.mxu0 0
        %3546 = vmatprep.mubr.bf16.mxu0 0
        %3547 = vmatmul.mubr.bf16.gmra.mrb[0].mxu0 %v3512
        %v3548 = vpop.f32.mrb[0].mxu0
        %v3549 = vadd.f32 0.0, %v3548
        %v3550 = vpop.f32.mrb[0].mxu0
        %v3551 = vpop.f32.mrb[0].mxu0
        %v3552 = vpop.f32.mrb[0].mxu0
        %3553 = vdwg.mxu0
        %v3554 = vsel %vm3261, %v3549, 0.0
        %3555 = vadd.xlane.f32.xlu0 %v3554
        %v3556 = vpop.xlane.xlu0 %3555
        %v3557 = vmul.f32 %v3556, 0.05263158
        %v3558 = vmul.f32 %v3549, %v3549
        %v3559 = vsel %vm3261, %v3558, 0.0
        %3560 = vadd.xlane.f32.xlu0 %v3559
        %v3561 = vpop.xlane.xlu0 %3560
        %v3562 = vmul.f32 %v3561, 0.05263158
        %v3563 = vmul.f32 %v3557, %v3557
        %v3564 = vsub.f32 %v3562, %v3563
        %v3565 = vsub.f32 %v3549, %v3557
        %v3566 = vadd.f32 %v3564, 1e-05
        %v3567 = vrsqrt.pop %v3566
        %v3568 = vmul.f32 %v3565, %v3567
        %v3569 = vmul.f32 %v3568, %v3280
        %v3570 = vadd.f32 %v3569, %v3285
        %s3571 = scalar_lea.vmem %s13, 48
        %v3572 = vld [vmem:[%s3571] sm:$0xff]
        %v3573 = vld [vmem:[%s3571 + $0x8] sm:$0xff]
        %v3574 = vld [vmem:[%s3571 + $0x10] sm:$0xff]
        %v3575 = vld [vmem:[%s3571 + $0x18] sm:$0xff]
        %v3576 = vld [vmem:[%s3571 + $0x20] sm:$0x7]
        %v3577 = vld [vmem:[%s3571 + $0x28] sm:$0x7]
        %v3579 = vsel %vm3261, %v3570, 0
        %v3582 = vsel %vm3296, %v3576, 0
        %v3585 = vsel %vm3296, %v3577, 0
        %3587 = vmatprep.subr.mxu0 %v3573
        %3588 = vmatpush1.msra.mxu0 %v3572
        %3589 = vmatprep.subr.mxu0 %v3575
        %3590 = vmatpush1.msra.mxu0 %v3574
        %3591 = vmatprep.subr.mxu0 %v3585
        %3592 = vmatpush1.msra.mxu0 %v3582
        %3593 = vmatprep.subr.mxu0 0.0
        %3594 = vmatpush1.msra.mxu0 0.0
        %3595 = vmatprep.subr.mxu0 0.0
        %3596 = vmatpush1.msra.mxu0 0.0
        %3597 = vmatprep.subr.mxu0 0.0
        %3598 = vmatpush1.msra.mxu0 0.0
        %3599 = vmatprep.subr.mxu0 0.0
        %3600 = vmatpush1.msra.mxu0 0.0
        %3601 = vmatprep.subr.mxu0 0.0
        %3602 = vmatpush1.msra.mxu0 0.0
        %3603 = vmatprep.subr.mxu0 0.0
        %3604 = vmatpush1.msra.mxu0 0.0
        %3605 = vmatprep.subr.mxu0 0.0
        %3606 = vmatpush1.msra.mxu0 0.0
        %3607 = vmatprep.subr.mxu0 0.0
        %3608 = vmatpush1.msra.mxu0 0.0
        %3609 = vmatprep.subr.mxu0 0.0
        %3610 = vmatpush1.msra.mxu0 0.0
        %3611 = vmatprep.subr.mxu0 0.0
        %3612 = vmatpush1.msra.mxu0 0.0
        %3613 = vmatprep.subr.mxu0 0.0
        %3614 = vmatpush1.msra.mxu0 0.0
        %3615 = vmatprep.subr.mxu0 0.0
        %3616 = vmatpush1.msra.mxu0 0.0
        %3617 = vmatprep.subr.mxu0 0.0
        %3618 = vmatpush1.msra.mxu0 0.0
        %3619 = vmatprep.subr.mxu0 0.0
        %3620 = vmatpush1.msra.mxu0 0.0
        %3621 = vmatprep.subr.mxu0 0.0
        %3622 = vmatpush1.msra.mxu0 0.0
        %3623 = vmatprep.subr.mxu0 0.0
        %3624 = vmatpush1.msra.mxu0 0.0
        %3625 = vmatprep.subr.mxu0 0.0
        %3626 = vmatpush1.msra.mxu0 0.0
        %3627 = vmatprep.subr.mxu0 0.0
        %3628 = vmatpush1.msra.mxu0 0.0
        %3629 = vmatprep.subr.mxu0 0.0
        %3630 = vmatpush1.msra.mxu0 0.0
        %3631 = vmatprep.subr.mxu0 0.0
        %3632 = vmatpush1.msra.mxu0 0.0
        %3633 = vmatprep.subr.mxu0 0.0
        %3634 = vmatpush1.msra.mxu0 0.0
        %3635 = vmatprep.subr.mxu0 0.0
        %3636 = vmatpush1.msra.mxu0 0.0
        %3637 = vmatprep.subr.mxu0 0.0
        %3638 = vmatpush1.msra.mxu0 0.0
        %3639 = vmatprep.subr.mxu0 0.0
        %3640 = vmatpush1.msra.mxu0 0.0
        %3641 = vmatprep.subr.mxu0 0.0
        %3642 = vmatpush1.msra.mxu0 0.0
        %3643 = vmatprep.subr.mxu0 0.0
        %3644 = vmatpush1.msra.mxu0 0.0
        %3645 = vmatprep.subr.mxu0 0.0
        %3646 = vmatpush1.msra.mxu0 0.0
        %3647 = vmatprep.subr.mxu0 0.0
        %3648 = vmatpush1.msra.mxu0 0.0
        %3649 = vmatprep.subr.mxu0 0.0
        %3650 = vmatpush1.msra.mxu0 0.0
        %3651 = vmatprep.mubr.f32.mxu0 0.0
        %3652 = vmatmul.mubr.f32.gmra.mrb[0].mxu0 %v3579
        %v3653 = vpop.f32.mrb[0].mxu0
        %v3654 = vadd.f32 0.0, %v3653
        %v3655 = vpop.f32.mrb[0].mxu0
        %v3656 = vadd.f32 0.0, %v3655
        %3657 = vdwg.mxu0
        %v3658 = vadd.f32 %v3385, %v3654
        %v3659 = vadd.f32 %v3386, %v3656
        %v3660 = vpack.c.bf16 %v2968, %v2966
        %v3662 = vrot.slane %v3660, 3
        %v3664 = vsel %vm921, %v3662, 0
        %3666 = vmatprep.subr.bf16.mxu0 0
        %3667 = vmatpush1.bf16.msra.mxu0 %v3016
        %3668 = vmatprep.subr.bf16.mxu0 0
        %3669 = vmatpush1.bf16.msra.mxu0 %v3017
        %3670 = vmatprep.subr.bf16.mxu0 0
        %3671 = vmatpush1.bf16.msra.mxu0 %v3018
        %3672 = vmatprep.subr.bf16.mxu0 0
        %3673 = vmatpush1.bf16.msra.mxu0 %v3019
        %3674 = vmatprep.subr.bf16.mxu0 0
        %3675 = vmatpush1.bf16.msra.mxu0 0
        %3676 = vmatprep.subr.bf16.mxu0 0
        %3677 = vmatpush1.bf16.msra.mxu0 0
        %3678 = vmatprep.subr.bf16.mxu0 0
        %3679 = vmatpush1.bf16.msra.mxu0 0
        %3680 = vmatprep.subr.bf16.mxu0 0
        %3681 = vmatpush1.bf16.msra.mxu0 0
        %3682 = vmatprep.subr.bf16.mxu0 0
        %3683 = vmatpush1.bf16.msra.mxu0 0
        %3684 = vmatprep.subr.bf16.mxu0 0
        %3685 = vmatpush1.bf16.msra.mxu0 0
        %3686 = vmatprep.subr.bf16.mxu0 0
        %3687 = vmatpush1.bf16.msra.mxu0 0
        %3688 = vmatprep.subr.bf16.mxu0 0
        %3689 = vmatpush1.bf16.msra.mxu0 0
        %3690 = vmatprep.subr.bf16.mxu0 0
        %3691 = vmatpush1.bf16.msra.mxu0 0
        %3692 = vmatprep.subr.bf16.mxu0 0
        %3693 = vmatpush1.bf16.msra.mxu0 0
        %3694 = vmatprep.subr.bf16.mxu0 0
        %3695 = vmatpush1.bf16.msra.mxu0 0
        %3696 = vmatprep.subr.bf16.mxu0 0
        %3697 = vmatpush1.bf16.msra.mxu0 0
        %3698 = vmatprep.mubr.bf16.mxu0 0
        %3699 = vmatmul.mubr.bf16.gmra.mrb[0].mxu0 %v3664
        %v3700 = vpop.f32.mrb[0].mxu0
        %v3701 = vadd.f32 0.0, %v3700
        %v3702 = vpop.f32.mrb[0].mxu0
        %v3703 = vpop.f32.mrb[0].mxu0
        %v3704 = vpop.f32.mrb[0].mxu0
        %3705 = vdwg.mxu0
        %v3706 = vsel %vm3067, %v3701, 0.0
        %3707 = vadd.xlane.f32.xlu0 %v3706
        %v3708 = vpop.xlane.xlu0 %3707
        %v3709 = vmul.f32 %v3708, 0.01754386
        %v3710 = vmul.f32 %v3701, %v3701
        %v3711 = vsel %vm3067, %v3710, 0.0
        %3712 = vadd.xlane.f32.xlu0 %v3711
        %v3713 = vpop.xlane.xlu0 %3712
        %v3714 = vmul.f32 %v3713, 0.01754386
        %v3715 = vmul.f32 %v3709, %v3709
        %v3716 = vsub.f32 %v3714, %v3715
        %v3717 = vsub.f32 %v3701, %v3709
        %v3718 = vadd.f32 %v3716, 1e-05
        %v3719 = vrsqrt.pop %v3718
        %v3720 = vmul.f32 %v3717, %v3719
        %v3721 = vmul.f32 %v3720, %v3086
        %v3722 = vadd.f32 %v3721, %v3091
        %v3723 = vpack.c.bf16 %v3722, %v3722
        %v3725 = vsel %vm3067, %v3723, 0
        %3727 = vmatprep.subr.bf16.mxu0 0
        %3728 = vmatpush1.bf16.msra.mxu0 %v3110
        %3729 = vmatprep.subr.bf16.mxu0 0
        %3730 = vmatpush1.bf16.msra.mxu0 %v3111
        %3731 = vmatprep.subr.bf16.mxu0 0
        %3732 = vmatpush1.bf16.msra.mxu0 %v3112
        %3733 = vmatprep.subr.bf16.mxu0 0
        %3734 = vmatpush1.bf16.msra.mxu0 %v3124
        %3735 = vmatprep.subr.bf16.mxu0 0
        %3736 = vmatpush1.bf16.msra.mxu0 0
        %3737 = vmatprep.subr.bf16.mxu0 0
        %3738 = vmatpush1.bf16.msra.mxu0 0
        %3739 = vmatprep.subr.bf16.mxu0 0
        %3740 = vmatpush1.bf16.msra.mxu0 0
        %3741 = vmatprep.subr.bf16.mxu0 0
        %3742 = vmatpush1.bf16.msra.mxu0 0
        %3743 = vmatprep.subr.bf16.mxu0 0
        %3744 = vmatpush1.bf16.msra.mxu0 0
        %3745 = vmatprep.subr.bf16.mxu0 0
        %3746 = vmatpush1.bf16.msra.mxu0 0
        %3747 = vmatprep.subr.bf16.mxu0 0
        %3748 = vmatpush1.bf16.msra.mxu0 0
        %3749 = vmatprep.subr.bf16.mxu0 0
        %3750 = vmatpush1.bf16.msra.mxu0 0
        %3751 = vmatprep.subr.bf16.mxu0 0
        %3752 = vmatpush1.bf16.msra.mxu0 0
        %3753 = vmatprep.subr.bf16.mxu0 0
        %3754 = vmatpush1.bf16.msra.mxu0 0
        %3755 = vmatprep.subr.bf16.mxu0 0
        %3756 = vmatpush1.bf16.msra.mxu0 0
        %3757 = vmatprep.subr.bf16.mxu0 0
        %3758 = vmatpush1.bf16.msra.mxu0 0
        %3759 = vmatprep.mubr.bf16.mxu0 0
        %3760 = vmatmul.mubr.bf16.gmra.mrb[0].mxu0 %v3725
        %v3761 = vpop.f32.mrb[0].mxu0
        %v3762 = vadd.f32 0.0, %v3761
        %v3763 = vpop.f32.mrb[0].mxu0
        %v3764 = vpop.f32.mrb[0].mxu0
        %v3765 = vpop.f32.mrb[0].mxu0
        %3766 = vdwg.mxu0
        %v3767 = vsel %vm3067, %v3762, 0.0
        %3768 = vadd.xlane.f32.xlu0 %v3767
        %v3769 = vpop.xlane.xlu0 %3768
        %v3770 = vmul.f32 %v3769, 0.01754386
        %v3771 = vmul.f32 %v3762, %v3762
        %v3772 = vsel %vm3067, %v3771, 0.0
        %3773 = vadd.xlane.f32.xlu0 %v3772
        %v3774 = vpop.xlane.xlu0 %3773
        %v3775 = vmul.f32 %v3774, 0.01754386
        %v3776 = vmul.f32 %v3770, %v3770
        %v3777 = vsub.f32 %v3775, %v3776
        %v3778 = vsub.f32 %v3762, %v3770
        %v3779 = vadd.f32 %v3777, 1e-05
        %v3780 = vrsqrt.pop %v3779
        %v3781 = vmul.f32 %v3778, %v3780
        %v3782 = vmul.f32 %v3781, %v3184
        %v3783 = vadd.f32 %v3782, %v3189
        %v3784 = vpack.c.bf16 %v3783, %v3783
        %v3786 = vsel %vm3067, %v3784, 0
        %3788 = vmatprep.subr.bf16.mxu0 0
        %3789 = vmatpush1.bf16.msra.mxu0 %v3208
        %3790 = vmatprep.subr.bf16.mxu0 0
        %3791 = vmatpush1.bf16.msra.mxu0 %v3209
        %3792 = vmatprep.subr.bf16.mxu0 0
        %3793 = vmatpush1.bf16.msra.mxu0 %v3210
        %3794 = vmatprep.subr.bf16.mxu0 0
        %3795 = vmatpush1.bf16.msra.mxu0 %v3219
        %3796 = vmatprep.subr.bf16.mxu0 0
        %3797 = vmatpush1.bf16.msra.mxu0 0
        %3798 = vmatprep.subr.bf16.mxu0 0
        %3799 = vmatpush1.bf16.msra.mxu0 0
        %3800 = vmatprep.subr.bf16.mxu0 0
        %3801 = vmatpush1.bf16.msra.mxu0 0
        %3802 = vmatprep.subr.bf16.mxu0 0
        %3803 = vmatpush1.bf16.msra.mxu0 0
        %3804 = vmatprep.subr.bf16.mxu0 0
        %3805 = vmatpush1.bf16.msra.mxu0 0
        %3806 = vmatprep.subr.bf16.mxu0 0
        %3807 = vmatpush1.bf16.msra.mxu0 0
        %3808 = vmatprep.subr.bf16.mxu0 0
        %3809 = vmatpush1.bf16.msra.mxu0 0
        %3810 = vmatprep.subr.bf16.mxu0 0
        %3811 = vmatpush1.bf16.msra.mxu0 0
        %3812 = vmatprep.subr.bf16.mxu0 0
        %3813 = vmatpush1.bf16.msra.mxu0 0
        %3814 = vmatprep.subr.bf16.mxu0 0
        %3815 = vmatpush1.bf16.msra.mxu0 0
        %3816 = vmatprep.subr.bf16.mxu0 0
        %3817 = vmatpush1.bf16.msra.mxu0 0
        %3818 = vmatprep.subr.bf16.mxu0 0
        %3819 = vmatpush1.bf16.msra.mxu0 0
        %3820 = vmatprep.mubr.bf16.mxu0 0
        %3821 = vmatmul.mubr.bf16.gmra.mrb[0].mxu0 %v3786
        %v3822 = vpop.f32.mrb[0].mxu0
        %v3823 = vadd.f32 0.0, %v3822
        %v3824 = vpop.f32.mrb[0].mxu0
        %v3825 = vpop.f32.mrb[0].mxu0
        %v3826 = vpop.f32.mrb[0].mxu0
        %3827 = vdwg.mxu0
        %v3828 = vsel %vm3261, %v3823, 0.0
        %3829 = vadd.xlane.f32.xlu0 %v3828
        %v3830 = vpop.xlane.xlu0 %3829
        %v3831 = vmul.f32 %v3830, 0.05263158
        %v3832 = vmul.f32 %v3823, %v3823
        %v3833 = vsel %vm3261, %v3832, 0.0
        %3834 = vadd.xlane.f32.xlu0 %v3833
        %v3835 = vpop.xlane.xlu0 %3834
        %v3836 = vmul.f32 %v3835, 0.05263158
        %v3837 = vmul.f32 %v3831, %v3831
        %v3838 = vsub.f32 %v3836, %v3837
        %v3839 = vsub.f32 %v3823, %v3831
        %v3840 = vadd.f32 %v3838, 1e-05
        %v3841 = vrsqrt.pop %v3840
        %v3842 = vmul.f32 %v3839, %v3841
        %v3843 = vmul.f32 %v3842, %v3280
        %v3844 = vadd.f32 %v3843, %v3285
        %s3845 = scalar_lea.vmem %s13, 96
        %v3846 = vld [vmem:[%s3845] sm:$0xff]
        %v3847 = vld [vmem:[%s3845 + $0x8] sm:$0xff]
        %v3848 = vld [vmem:[%s3845 + $0x10] sm:$0xff]
        %v3849 = vld [vmem:[%s3845 + $0x18] sm:$0xff]
        %v3850 = vld [vmem:[%s3845 + $0x20] sm:$0x7]
        %v3851 = vld [vmem:[%s3845 + $0x28] sm:$0x7]
        %v3853 = vsel %vm3261, %v3844, 0
        %v3856 = vsel %vm3296, %v3850, 0
        %v3859 = vsel %vm3296, %v3851, 0
        %3861 = vmatprep.subr.mxu0 %v3847
        %3862 = vmatpush1.msra.mxu0 %v3846
        %3863 = vmatprep.subr.mxu0 %v3849
        %3864 = vmatpush1.msra.mxu0 %v3848
        %3865 = vmatprep.subr.mxu0 %v3859
        %3866 = vmatpush1.msra.mxu0 %v3856
        %3867 = vmatprep.subr.mxu0 0.0
        %3868 = vmatpush1.msra.mxu0 0.0
        %3869 = vmatprep.subr.mxu0 0.0
        %3870 = vmatpush1.msra.mxu0 0.0
        %3871 = vmatprep.subr.mxu0 0.0
        %3872 = vmatpush1.msra.mxu0 0.0
        %3873 = vmatprep.subr.mxu0 0.0
        %3874 = vmatpush1.msra.mxu0 0.0
        %3875 = vmatprep.subr.mxu0 0.0
        %3876 = vmatpush1.msra.mxu0 0.0
        %3877 = vmatprep.subr.mxu0 0.0
        %3878 = vmatpush1.msra.mxu0 0.0
        %3879 = vmatprep.subr.mxu0 0.0
        %3880 = vmatpush1.msra.mxu0 0.0
        %3881 = vmatprep.subr.mxu0 0.0
        %3882 = vmatpush1.msra.mxu0 0.0
        %3883 = vmatprep.subr.mxu0 0.0
        %3884 = vmatpush1.msra.mxu0 0.0
        %3885 = vmatprep.subr.mxu0 0.0
        %3886 = vmatpush1.msra.mxu0 0.0
        %3887 = vmatprep.subr.mxu0 0.0
        %3888 = vmatpush1.msra.mxu0 0.0
        %3889 = vmatprep.subr.mxu0 0.0
        %3890 = vmatpush1.msra.mxu0 0.0
        %3891 = vmatprep.subr.mxu0 0.0
        %3892 = vmatpush1.msra.mxu0 0.0
        %3893 = vmatprep.subr.mxu0 0.0
        %3894 = vmatpush1.msra.mxu0 0.0
        %3895 = vmatprep.subr.mxu0 0.0
        %3896 = vmatpush1.msra.mxu0 0.0
        %3897 = vmatprep.subr.mxu0 0.0
        %3898 = vmatpush1.msra.mxu0 0.0
        %3899 = vmatprep.subr.mxu0 0.0
        %3900 = vmatpush1.msra.mxu0 0.0
        %3901 = vmatprep.subr.mxu0 0.0
        %3902 = vmatpush1.msra.mxu0 0.0
        %3903 = vmatprep.subr.mxu0 0.0
        %3904 = vmatpush1.msra.mxu0 0.0
        %3905 = vmatprep.subr.mxu0 0.0
        %3906 = vmatpush1.msra.mxu0 0.0
        %3907 = vmatprep.subr.mxu0 0.0
        %3908 = vmatpush1.msra.mxu0 0.0
        %3909 = vmatprep.subr.mxu0 0.0
        %3910 = vmatpush1.msra.mxu0 0.0
        %3911 = vmatprep.subr.mxu0 0.0
        %3912 = vmatpush1.msra.mxu0 0.0
        %3913 = vmatprep.subr.mxu0 0.0
        %3914 = vmatpush1.msra.mxu0 0.0
        %3915 = vmatprep.subr.mxu0 0.0
        %3916 = vmatpush1.msra.mxu0 0.0
        %3917 = vmatprep.subr.mxu0 0.0
        %3918 = vmatpush1.msra.mxu0 0.0
        %3919 = vmatprep.subr.mxu0 0.0
        %3920 = vmatpush1.msra.mxu0 0.0
        %3921 = vmatprep.subr.mxu0 0.0
        %3922 = vmatpush1.msra.mxu0 0.0
        %3923 = vmatprep.subr.mxu0 0.0
        %3924 = vmatpush1.msra.mxu0 0.0
        %3925 = vmatprep.mubr.f32.mxu0 0.0
        %3926 = vmatmul.mubr.f32.gmra.mrb[0].mxu0 %v3853
        %v3927 = vpop.f32.mrb[0].mxu0
        %v3928 = vadd.f32 0.0, %v3927
        %v3929 = vpop.f32.mrb[0].mxu0
        %v3930 = vadd.f32 0.0, %v3929
        %3931 = vdwg.mxu0
        %v3932 = vadd.f32 %v3658, %v3928
        %v3933 = vadd.f32 %v3659, %v3930
        %3934 = vrot.lane.b32.xlu0 %v3662, 64
        %v3935 = vpop.permute.xlu0 %3934
        %v3937 = vsel %vm921, %v3935, 0
        %3939 = vmatprep.subr.bf16.mxu0 0
        %3940 = vmatpush1.bf16.msra.mxu0 %v3016
        %3941 = vmatprep.subr.bf16.mxu0 0
        %3942 = vmatpush1.bf16.msra.mxu0 %v3017
        %3943 = vmatprep.subr.bf16.mxu0 0
        %3944 = vmatpush1.bf16.msra.mxu0 %v3018
        %3945 = vmatprep.subr.bf16.mxu0 0
        %3946 = vmatpush1.bf16.msra.mxu0 %v3019
        %3947 = vmatprep.subr.bf16.mxu0 0
        %3948 = vmatpush1.bf16.msra.mxu0 0
        %3949 = vmatprep.subr.bf16.mxu0 0
        %3950 = vmatpush1.bf16.msra.mxu0 0
        %3951 = vmatprep.subr.bf16.mxu0 0
        %3952 = vmatpush1.bf16.msra.mxu0 0
        %3953 = vmatprep.subr.bf16.mxu0 0
        %3954 = vmatpush1.bf16.msra.mxu0 0
        %3955 = vmatprep.subr.bf16.mxu0 0
        %3956 = vmatpush1.bf16.msra.mxu0 0
        %3957 = vmatprep.subr.bf16.mxu0 0
        %3958 = vmatpush1.bf16.msra.mxu0 0
        %3959 = vmatprep.subr.bf16.mxu0 0
        %3960 = vmatpush1.bf16.msra.mxu0 0
        %3961 = vmatprep.subr.bf16.mxu0 0
        %3962 = vmatpush1.bf16.msra.mxu0 0
        %3963 = vmatprep.subr.bf16.mxu0 0
        %3964 = vmatpush1.bf16.msra.mxu0 0
        %3965 = vmatprep.subr.bf16.mxu0 0
        %3966 = vmatpush1.bf16.msra.mxu0 0
        %3967 = vmatprep.subr.bf16.mxu0 0
        %3968 = vmatpush1.bf16.msra.mxu0 0
        %3969 = vmatprep.subr.bf16.mxu0 0
        %3970 = vmatpush1.bf16.msra.mxu0 0
        %3971 = vmatprep.mubr.bf16.mxu0 0
        %3972 = vmatmul.mubr.bf16.gmra.mrb[0].mxu0 %v3937
        %v3973 = vpop.f32.mrb[0].mxu0
        %v3974 = vadd.f32 0.0, %v3973
        %v3975 = vpop.f32.mrb[0].mxu0
        %v3976 = vpop.f32.mrb[0].mxu0
        %v3977 = vpop.f32.mrb[0].mxu0
        %3978 = vdwg.mxu0
        %v3979 = vsel %vm3067, %v3974, 0.0
        %3980 = vadd.xlane.f32.xlu0 %v3979
        %v3981 = vpop.xlane.xlu0 %3980
        %v3982 = vmul.f32 %v3981, 0.01754386
        %v3983 = vmul.f32 %v3974, %v3974
        %v3984 = vsel %vm3067, %v3983, 0.0
        %3985 = vadd.xlane.f32.xlu0 %v3984
        %v3986 = vpop.xlane.xlu0 %3985
        %v3987 = vmul.f32 %v3986, 0.01754386
        %v3988 = vmul.f32 %v3982, %v3982
        %v3989 = vsub.f32 %v3987, %v3988
        %v3990 = vsub.f32 %v3974, %v3982
        %v3991 = vadd.f32 %v3989, 1e-05
        %v3992 = vrsqrt.pop %v3991
        %v3993 = vmul.f32 %v3990, %v3992
        %v3994 = vmul.f32 %v3993, %v3086
        %v3995 = vadd.f32 %v3994, %v3091
        %v3996 = vpack.c.bf16 %v3995, %v3995
        %v3998 = vsel %vm3067, %v3996, 0
        %4000 = vmatprep.subr.bf16.mxu0 0
        %4001 = vmatpush1.bf16.msra.mxu0 %v3110
        %4002 = vmatprep.subr.bf16.mxu0 0
        %4003 = vmatpush1.bf16.msra.mxu0 %v3111
        %4004 = vmatprep.subr.bf16.mxu0 0
        %4005 = vmatpush1.bf16.msra.mxu0 %v3112
        %4006 = vmatprep.subr.bf16.mxu0 0
        %4007 = vmatpush1.bf16.msra.mxu0 %v3124
        %4008 = vmatprep.subr.bf16.mxu0 0
        %4009 = vmatpush1.bf16.msra.mxu0 0
        %4010 = vmatprep.subr.bf16.mxu0 0
        %4011 = vmatpush1.bf16.msra.mxu0 0
        %4012 = vmatprep.subr.bf16.mxu0 0
        %4013 = vmatpush1.bf16.msra.mxu0 0
        %4014 = vmatprep.subr.bf16.mxu0 0
        %4015 = vmatpush1.bf16.msra.mxu0 0
        %4016 = vmatprep.subr.bf16.mxu0 0
        %4017 = vmatpush1.bf16.msra.mxu0 0
        %4018 = vmatprep.subr.bf16.mxu0 0
        %4019 = vmatpush1.bf16.msra.mxu0 0
        %4020 = vmatprep.subr.bf16.mxu0 0
        %4021 = vmatpush1.bf16.msra.mxu0 0
        %4022 = vmatprep.subr.bf16.mxu0 0
        %4023 = vmatpush1.bf16.msra.mxu0 0
        %4024 = vmatprep.subr.bf16.mxu0 0
        %4025 = vmatpush1.bf16.msra.mxu0 0
        %4026 = vmatprep.subr.bf16.mxu0 0
        %4027 = vmatpush1.bf16.msra.mxu0 0
        %4028 = vmatprep.subr.bf16.mxu0 0
        %4029 = vmatpush1.bf16.msra.mxu0 0
        %4030 = vmatprep.subr.bf16.mxu0 0
        %4031 = vmatpush1.bf16.msra.mxu0 0
        %4032 = vmatprep.mubr.bf16.mxu0 0
        %4033 = vmatmul.mubr.bf16.gmra.mrb[0].mxu0 %v3998
        %v4034 = vpop.f32.mrb[0].mxu0
        %v4035 = vadd.f32 0.0, %v4034
        %v4036 = vpop.f32.mrb[0].mxu0
        %v4037 = vpop.f32.mrb[0].mxu0
        %v4038 = vpop.f32.mrb[0].mxu0
        %4039 = vdwg.mxu0
        %v4040 = vsel %vm3067, %v4035, 0.0
        %4041 = vadd.xlane.f32.xlu0 %v4040
        %v4042 = vpop.xlane.xlu0 %4041
        %v4043 = vmul.f32 %v4042, 0.01754386
        %v4044 = vmul.f32 %v4035, %v4035
        %v4045 = vsel %vm3067, %v4044, 0.0
        %4046 = vadd.xlane.f32.xlu0 %v4045
        %v4047 = vpop.xlane.xlu0 %4046
        %v4048 = vmul.f32 %v4047, 0.01754386
        %v4049 = vmul.f32 %v4043, %v4043
        %v4050 = vsub.f32 %v4048, %v4049
        %v4051 = vsub.f32 %v4035, %v4043
        %v4052 = vadd.f32 %v4050, 1e-05
        %v4053 = vrsqrt.pop %v4052
        %v4054 = vmul.f32 %v4051, %v4053
        %v4055 = vmul.f32 %v4054, %v3184
        %v4056 = vadd.f32 %v4055, %v3189
        %v4057 = vpack.c.bf16 %v4056, %v4056
        %v4059 = vsel %vm3067, %v4057, 0
        %4061 = vmatprep.subr.bf16.mxu0 0
        %4062 = vmatpush1.bf16.msra.mxu0 %v3208
        %4063 = vmatprep.subr.bf16.mxu0 0
        %4064 = vmatpush1.bf16.msra.mxu0 %v3209
        %4065 = vmatprep.subr.bf16.mxu0 0
        %4066 = vmatpush1.bf16.msra.mxu0 %v3210
        %4067 = vmatprep.subr.bf16.mxu0 0
        %4068 = vmatpush1.bf16.msra.mxu0 %v3219
        %4069 = vmatprep.subr.bf16.mxu0 0
        %4070 = vmatpush1.bf16.msra.mxu0 0
        %4071 = vmatprep.subr.bf16.mxu0 0
        %4072 = vmatpush1.bf16.msra.mxu0 0
        %4073 = vmatprep.subr.bf16.mxu0 0
        %4074 = vmatpush1.bf16.msra.mxu0 0
        %4075 = vmatprep.subr.bf16.mxu0 0
        %4076 = vmatpush1.bf16.msra.mxu0 0
        %4077 = vmatprep.subr.bf16.mxu0 0
        %4078 = vmatpush1.bf16.msra.mxu0 0
        %4079 = vmatprep.subr.bf16.mxu0 0
        %4080 = vmatpush1.bf16.msra.mxu0 0
        %4081 = vmatprep.subr.bf16.mxu0 0
        %4082 = vmatpush1.bf16.msra.mxu0 0
        %4083 = vmatprep.subr.bf16.mxu0 0
        %4084 = vmatpush1.bf16.msra.mxu0 0
        %4085 = vmatprep.subr.bf16.mxu0 0
        %4086 = vmatpush1.bf16.msra.mxu0 0
        %4087 = vmatprep.subr.bf16.mxu0 0
        %4088 = vmatpush1.bf16.msra.mxu0 0
        %4089 = vmatprep.subr.bf16.mxu0 0
        %4090 = vmatpush1.bf16.msra.mxu0 0
        %4091 = vmatprep.subr.bf16.mxu0 0
        %4092 = vmatpush1.bf16.msra.mxu0 0
        %4093 = vmatprep.mubr.bf16.mxu0 0
        %4094 = vmatmul.mubr.bf16.gmra.mrb[0].mxu0 %v4059
        %v4095 = vpop.f32.mrb[0].mxu0
        %v4096 = vadd.f32 0.0, %v4095
        %v4097 = vpop.f32.mrb[0].mxu0
        %v4098 = vpop.f32.mrb[0].mxu0
        %v4099 = vpop.f32.mrb[0].mxu0
        %4100 = vdwg.mxu0
        %v4101 = vsel %vm3261, %v4096, 0.0
        %4102 = vadd.xlane.f32.xlu0 %v4101
        %v4103 = vpop.xlane.xlu0 %4102
        %v4104 = vmul.f32 %v4103, 0.05263158
        %v4105 = vmul.f32 %v4096, %v4096
        %v4106 = vsel %vm3261, %v4105, 0.0
        %4107 = vadd.xlane.f32.xlu0 %v4106
        %v4108 = vpop.xlane.xlu0 %4107
        %v4109 = vmul.f32 %v4108, 0.05263158
        %v4110 = vmul.f32 %v4104, %v4104
        %v4111 = vsub.f32 %v4109, %v4110
        %v4112 = vsub.f32 %v4096, %v4104
        %v4113 = vadd.f32 %v4111, 1e-05
        %v4114 = vrsqrt.pop %v4113
        %v4115 = vmul.f32 %v4112, %v4114
        %v4116 = vmul.f32 %v4115, %v3280
        %v4117 = vadd.f32 %v4116, %v3285
        %s4118 = scalar_lea.vmem %s13, 144
        %v4119 = vld [vmem:[%s4118] sm:$0xff]
        %v4120 = vld [vmem:[%s4118 + $0x8] sm:$0xff]
        %v4121 = vld [vmem:[%s4118 + $0x10] sm:$0xff]
        %v4122 = vld [vmem:[%s4118 + $0x18] sm:$0xff]
        %v4123 = vld [vmem:[%s4118 + $0x20] sm:$0x7]
        %v4124 = vld [vmem:[%s4118 + $0x28] sm:$0x7]
        %v4126 = vsel %vm3261, %v4117, 0
        %v4129 = vsel %vm3296, %v4123, 0
        %v4132 = vsel %vm3296, %v4124, 0
        %4134 = vmatprep.subr.mxu0 %v4120
        %4135 = vmatpush1.msra.mxu0 %v4119
        %4136 = vmatprep.subr.mxu0 %v4122
        %4137 = vmatpush1.msra.mxu0 %v4121
        %4138 = vmatprep.subr.mxu0 %v4132
        %4139 = vmatpush1.msra.mxu0 %v4129
        %4140 = vmatprep.subr.mxu0 0.0
        %4141 = vmatpush1.msra.mxu0 0.0
        %4142 = vmatprep.subr.mxu0 0.0
        %4143 = vmatpush1.msra.mxu0 0.0
        %4144 = vmatprep.subr.mxu0 0.0
        %4145 = vmatpush1.msra.mxu0 0.0
        %4146 = vmatprep.subr.mxu0 0.0
        %4147 = vmatpush1.msra.mxu0 0.0
        %4148 = vmatprep.subr.mxu0 0.0
        %4149 = vmatpush1.msra.mxu0 0.0
        %4150 = vmatprep.subr.mxu0 0.0
        %4151 = vmatpush1.msra.mxu0 0.0
        %4152 = vmatprep.subr.mxu0 0.0
        %4153 = vmatpush1.msra.mxu0 0.0
        %4154 = vmatprep.subr.mxu0 0.0
        %4155 = vmatpush1.msra.mxu0 0.0
        %4156 = vmatprep.subr.mxu0 0.0
        %4157 = vmatpush1.msra.mxu0 0.0
        %4158 = vmatprep.subr.mxu0 0.0
        %4159 = vmatpush1.msra.mxu0 0.0
        %4160 = vmatprep.subr.mxu0 0.0
        %4161 = vmatpush1.msra.mxu0 0.0
        %4162 = vmatprep.subr.mxu0 0.0
        %4163 = vmatpush1.msra.mxu0 0.0
        %4164 = vmatprep.subr.mxu0 0.0
        %4165 = vmatpush1.msra.mxu0 0.0
        %4166 = vmatprep.subr.mxu0 0.0
        %4167 = vmatpush1.msra.mxu0 0.0
        %4168 = vmatprep.subr.mxu0 0.0
        %4169 = vmatpush1.msra.mxu0 0.0
        %4170 = vmatprep.subr.mxu0 0.0
        %4171 = vmatpush1.msra.mxu0 0.0
        %4172 = vmatprep.subr.mxu0 0.0
        %4173 = vmatpush1.msra.mxu0 0.0
        %4174 = vmatprep.subr.mxu0 0.0
        %4175 = vmatpush1.msra.mxu0 0.0
        %4176 = vmatprep.subr.mxu0 0.0
        %4177 = vmatpush1.msra.mxu0 0.0
        %4178 = vmatprep.subr.mxu0 0.0
        %4179 = vmatpush1.msra.mxu0 0.0
        %4180 = vmatprep.subr.mxu0 0.0
        %4181 = vmatpush1.msra.mxu0 0.0
        %4182 = vmatprep.subr.mxu0 0.0
        %4183 = vmatpush1.msra.mxu0 0.0
        %4184 = vmatprep.subr.mxu0 0.0
        %4185 = vmatpush1.msra.mxu0 0.0
        %4186 = vmatprep.subr.mxu0 0.0
        %4187 = vmatpush1.msra.mxu0 0.0
        %4188 = vmatprep.subr.mxu0 0.0
        %4189 = vmatpush1.msra.mxu0 0.0
        %4190 = vmatprep.subr.mxu0 0.0
        %4191 = vmatpush1.msra.mxu0 0.0
        %4192 = vmatprep.subr.mxu0 0.0
        %4193 = vmatpush1.msra.mxu0 0.0
        %4194 = vmatprep.subr.mxu0 0.0
        %4195 = vmatpush1.msra.mxu0 0.0
        %4196 = vmatprep.subr.mxu0 0.0
        %4197 = vmatpush1.msra.mxu0 0.0
        %4198 = vmatprep.mubr.f32.mxu0 0.0
        %4199 = vmatmul.mubr.f32.gmra.mrb[0].mxu0 %v4126
        %v4200 = vpop.f32.mrb[0].mxu0
        %v4201 = vadd.f32 0.0, %v4200
        %v4202 = vpop.f32.mrb[0].mxu0
        %v4203 = vadd.f32 0.0, %v4202
        %4204 = vdwg.mxu0
        %v4205 = vadd.f32 %v3932, %v4201
        %v4206 = vadd.f32 %v3933, %v4203
        %v4207 = vmax.f32 %v4205, 0.0
        %v4208 = vmax.f32 %v4206, 0.0
        %4209 = vst [vmem:[%s631] sm:$0xff] %v4207
        %vm4210 = vcmask 195584
        %4211 = vst.msk [vmem:[%s631 + $0x8] sm:$0xff] %vm4210, %v4208
        %v4212 = vld [vmem:[%s15] sm:$0xff]
        %v4213 = vld [vmem:[%s15 + $0x8] sm:$0xff]
        %v4214 = vld [vmem:[%s15 + $0x10] sm:$0xff]
        %v4215 = vld [vmem:[%s15 + $0x18] sm:$0xff]
        %v4216 = vld [vmem:[%s15 + $0x20] sm:$0xff]
        %v4217 = vld [vmem:[%s15 + $0x28] sm:$0xff]
        %v4218 = vld [vmem:[%s15 + $0x30] sm:$0xff]
        %v4219 = vld [vmem:[%s15 + $0x38] sm:$0xff]
        %v4220 = vld [vmem:[%s15 + $0x40] sm:$0xff]
        %v4221 = vld [vmem:[%s15 + $0x48] sm:$0xff]
        %v4222 = vld [vmem:[%s15 + $0x50] sm:$0xff]
        %v4223 = vld [vmem:[%s15 + $0x58] sm:$0xff]
        %v4224 = vld [vmem:[%s15 + $0x60] sm:$0xff]
        %v4225 = vld [vmem:[%s15 + $0x68] sm:$0xff]
        %v4226 = vld [vmem:[%s15 + $0x70] sm:$0xff]
        %v4227 = vld [vmem:[%s15 + $0x78] sm:$0xff]
        %v4228 = vld [vmem:[%s15 + $0x80] sm:$0xff]
        %v4229 = vld [vmem:[%s15 + $0x88] sm:$0xff]
        %v4230 = vld [vmem:[%s15 + $0x90] sm:$0xff]
        %v4231 = vld [vmem:[%s15 + $0x98] sm:$0xff]
        %v4232 = vld [vmem:[%s15 + $0xa0] sm:$0xff]
        %v4233 = vld [vmem:[%s15 + $0xa8] sm:$0xff]
        %v4234 = vld [vmem:[%s15 + $0xb0] sm:$0xff]
        %v4235 = vld [vmem:[%s15 + $0xb8] sm:$0xff]
        %v4236 = vld [vmem:[%s15 + $0xc0] sm:$0xff]
        %v4237 = vld [vmem:[%s15 + $0xc8] sm:$0xff]
        %v4238 = vld [vmem:[%s15 + $0xd0] sm:$0xff]
        %v4239 = vld [vmem:[%s15 + $0xd8] sm:$0xff]
        %v4240 = vld [vmem:[%s15 + $0xe0] sm:$0xff]
        %v4241 = vld [vmem:[%s15 + $0xe8] sm:$0xff]
        %v4242 = vld [vmem:[%s15 + $0xf0] sm:$0xff]
        %v4243 = vld [vmem:[%s15 + $0xf8] sm:$0xff]
        %v4244 = vld [vmem:[%s15 + $0x100] sm:$0xff]
        %v4245 = vld [vmem:[%s15 + $0x108] sm:$0xff]
        %v4246 = vld [vmem:[%s15 + $0x110] sm:$0xff]
        %v4247 = vld [vmem:[%s15 + $0x118] sm:$0xff]
        %v4248 = vld [vmem:[%s15 + $0x120] sm:$0xff]
        %v4249 = vld [vmem:[%s15 + $0x128] sm:$0xff]
        %v4250 = vld [vmem:[%s15 + $0x130] sm:$0xff]
        %v4251 = vld [vmem:[%s15 + $0x138] sm:$0xff]
        %v4252 = vld [vmem:[%s15 + $0x140] sm:$0xff]
        %v4253 = vld [vmem:[%s15 + $0x148] sm:$0xff]
        %v4254 = vld [vmem:[%s15 + $0x150] sm:$0xff]
        %v4255 = vld [vmem:[%s15 + $0x158] sm:$0xff]
        %v4256 = vld [vmem:[%s15 + $0x160] sm:$0xff]
        %v4257 = vld [vmem:[%s15 + $0x168] sm:$0xff]
        %v4258 = vld [vmem:[%s15 + $0x170] sm:$0xff]
        %v4259 = vld [vmem:[%s15 + $0x178] sm:$0xff]
        %v4260 = vld [vmem:[%s15 + $0x180] sm:$0xff]
        %v4261 = vld [vmem:[%s15 + $0x188] sm:$0xff]
        %v4262 = vld [vmem:[%s15 + $0x190] sm:$0xff]
        %v4263 = vld [vmem:[%s15 + $0x198] sm:$0xff]
        %v4264 = vld [vmem:[%s15 + $0x1a0] sm:$0xff]
        %v4265 = vld [vmem:[%s15 + $0x1a8] sm:$0xff]
        %v4266 = vld [vmem:[%s15 + $0x1b0] sm:$0xff]
        %v4267 = vld [vmem:[%s15 + $0x1b8] sm:$0xff]
        %v4268 = vld [vmem:[%s15 + $0x1c0] sm:$0xff]
        %v4269 = vld [vmem:[%s16] sm:$0x7]
        %v4271 = vlaneseq
        %v4272 = vshrl.u32 %v4271, 7
        %v4273 = vsub.s32 0, %v4272
        %v4274 = vrot.slane %v4269, %v4273
        %v4275 = vlaneseq
        %v4276 = vshrl.u32 %v4275, 7
        %v4277 = vsub.s32 1, %v4276
        %v4278 = vrot.slane %v4269, %v4277
        %v4279 = vlaneseq
        %v4280 = vshrl.u32 %v4279, 7
        %v4281 = vsub.s32 2, %v4280
        %v4282 = vrot.slane %v4269, %v4281
        %v4287 = vsel %vm4210, %v4208, 0
        %4289 = vmatprep.subr.mxu0 %v4213
        %4290 = vmatpush1.msra.mxu0 %v4212
        %4291 = vmatprep.subr.mxu0 %v4216
        %4292 = vmatpush1.msra.mxu0 %v4215
        %4293 = vmatprep.subr.mxu0 %v4219
        %4294 = vmatpush1.msra.mxu0 %v4218
        %4295 = vmatprep.subr.mxu0 %v4222
        %4296 = vmatpush1.msra.mxu0 %v4221
        %4297 = vmatprep.subr.mxu0 %v4225
        %4298 = vmatpush1.msra.mxu0 %v4224
        %4299 = vmatprep.subr.mxu0 %v4228
        %4300 = vmatpush1.msra.mxu0 %v4227
        %4301 = vmatprep.subr.mxu0 %v4231
        %4302 = vmatpush1.msra.mxu0 %v4230
        %4303 = vmatprep.subr.mxu0 %v4234
        %4304 = vmatpush1.msra.mxu0 %v4233
        %4305 = vmatprep.subr.mxu0 %v4237
        %4306 = vmatpush1.msra.mxu0 %v4236
        %4307 = vmatprep.subr.mxu0 %v4240
        %4308 = vmatpush1.msra.mxu0 %v4239
        %4309 = vmatprep.subr.mxu0 %v4243
        %4310 = vmatpush1.msra.mxu0 %v4242
        %4311 = vmatprep.subr.mxu0 %v4246
        %4312 = vmatpush1.msra.mxu0 %v4245
        %4313 = vmatprep.subr.mxu0 %v4249
        %4314 = vmatpush1.msra.mxu0 %v4248
        %4315 = vmatprep.subr.mxu0 %v4252
        %4316 = vmatpush1.msra.mxu0 %v4251
        %4317 = vmatprep.subr.mxu0 %v4255
        %4318 = vmatpush1.msra.mxu0 %v4254
        %4319 = vmatprep.subr.mxu0 %v4258
        %4320 = vmatpush1.msra.mxu0 %v4257
        %4321 = vmatprep.subr.mxu0 %v4261
        %4322 = vmatpush1.msra.mxu0 %v4260
        %4323 = vmatprep.subr.mxu0 %v4264
        %4324 = vmatpush1.msra.mxu0 %v4263
        %4325 = vmatprep.subr.mxu0 %v4267
        %4326 = vmatpush1.msra.mxu0 %v4266
        %4327 = vmatprep.subr.mxu0 0.0
        %4328 = vmatpush1.msra.mxu0 0.0
        %4329 = vmatprep.subr.mxu0 0.0
        %4330 = vmatpush1.msra.mxu0 0.0
        %4331 = vmatprep.subr.mxu0 0.0
        %4332 = vmatpush1.msra.mxu0 0.0
        %4333 = vmatprep.subr.mxu0 0.0
        %4334 = vmatpush1.msra.mxu0 0.0
        %4335 = vmatprep.subr.mxu0 0.0
        %4336 = vmatpush1.msra.mxu0 0.0
        %4337 = vmatprep.subr.mxu0 0.0
        %4338 = vmatpush1.msra.mxu0 0.0
        %4339 = vmatprep.subr.mxu0 0.0
        %4340 = vmatpush1.msra.mxu0 0.0
        %4341 = vmatprep.subr.mxu0 0.0
        %4342 = vmatpush1.msra.mxu0 0.0
        %4343 = vmatprep.subr.mxu0 0.0
        %4344 = vmatpush1.msra.mxu0 0.0
        %4345 = vmatprep.subr.mxu0 0.0
        %4346 = vmatpush1.msra.mxu0 0.0
        %4347 = vmatprep.subr.mxu0 0.0
        %4348 = vmatpush1.msra.mxu0 0.0
        %4349 = vmatprep.subr.mxu0 0.0
        %4350 = vmatpush1.msra.mxu0 0.0
        %4351 = vmatprep.subr.mxu0 0.0
        %4352 = vmatpush1.msra.mxu0 0.0
        %4353 = vmatprep.mubr.f32.mxu0 %v4287
        %4354 = vmatmul.mubr.f32.gmra.mrb[0].mxu0 %v4207
        %v4355 = vpop.f32.mrb[0].mxu0
        %v4356 = vadd.f32 %v4274, %v4355
        %v4357 = vpop.f32.mrb[0].mxu0
        %v4358 = vadd.f32 %v4278, %v4357
        %4359 = vdwg.mxu0
        %4360 = vmatprep.subr.mxu0 0.0
        %4361 = vmatpush1.msra.mxu0 %v4214
        %4362 = vmatprep.subr.mxu0 0.0
        %4363 = vmatpush1.msra.mxu0 %v4217
        %4364 = vmatprep.subr.mxu0 0.0
        %4365 = vmatpush1.msra.mxu0 %v4220
        %4366 = vmatprep.subr.mxu0 0.0
        %4367 = vmatpush1.msra.mxu0 %v4223
        %4368 = vmatprep.subr.mxu0 0.0
        %4369 = vmatpush1.msra.mxu0 %v4226
        %4370 = vmatprep.subr.mxu0 0.0
        %4371 = vmatpush1.msra.mxu0 %v4229
        %4372 = vmatprep.subr.mxu0 0.0
        %4373 = vmatpush1.msra.mxu0 %v4232
        %4374 = vmatprep.subr.mxu0 0.0
        %4375 = vmatpush1.msra.mxu0 %v4235
        %4376 = vmatprep.subr.mxu0 0.0
        %4377 = vmatpush1.msra.mxu0 %v4238
        %4378 = vmatprep.subr.mxu0 0.0
        %4379 = vmatpush1.msra.mxu0 %v4241
        %4380 = vmatprep.subr.mxu0 0.0
        %4381 = vmatpush1.msra.mxu0 %v4244
        %4382 = vmatprep.subr.mxu0 0.0
        %4383 = vmatpush1.msra.mxu0 %v4247
        %4384 = vmatprep.subr.mxu0 0.0
        %4385 = vmatpush1.msra.mxu0 %v4250
        %4386 = vmatprep.subr.mxu0 0.0
        %4387 = vmatpush1.msra.mxu0 %v4253
        %4388 = vmatprep.subr.mxu0 0.0
        %4389 = vmatpush1.msra.mxu0 %v4256
        %4390 = vmatprep.subr.mxu0 0.0
        %4391 = vmatpush1.msra.mxu0 %v4259
        %4392 = vmatprep.subr.mxu0 0.0
        %4393 = vmatpush1.msra.mxu0 %v4262
        %4394 = vmatprep.subr.mxu0 0.0
        %4395 = vmatpush1.msra.mxu0 %v4265
        %4396 = vmatprep.subr.mxu0 0.0
        %4397 = vmatpush1.msra.mxu0 %v4268
        %4398 = vmatprep.subr.mxu0 0.0
        %4399 = vmatpush1.msra.mxu0 0.0
        %4400 = vmatprep.subr.mxu0 0.0
        %4401 = vmatpush1.msra.mxu0 0.0
        %4402 = vmatprep.subr.mxu0 0.0
        %4403 = vmatpush1.msra.mxu0 0.0
        %4404 = vmatprep.subr.mxu0 0.0
        %4405 = vmatpush1.msra.mxu0 0.0
        %4406 = vmatprep.subr.mxu0 0.0
        %4407 = vmatpush1.msra.mxu0 0.0
        %4408 = vmatprep.subr.mxu0 0.0
        %4409 = vmatpush1.msra.mxu0 0.0
        %4410 = vmatprep.subr.mxu0 0.0
        %4411 = vmatpush1.msra.mxu0 0.0
        %4412 = vmatprep.subr.mxu0 0.0
        %4413 = vmatpush1.msra.mxu0 0.0
        %4414 = vmatprep.subr.mxu0 0.0
        %4415 = vmatpush1.msra.mxu0 0.0
        %4416 = vmatprep.subr.mxu0 0.0
        %4417 = vmatpush1.msra.mxu0 0.0
        %4418 = vmatprep.subr.mxu0 0.0
        %4419 = vmatpush1.msra.mxu0 0.0
        %4420 = vmatprep.subr.mxu0 0.0
        %4421 = vmatpush1.msra.mxu0 0.0
        %4422 = vmatprep.subr.mxu0 0.0
        %4423 = vmatpush1.msra.mxu0 0.0
        %4424 = vmatprep.mubr.f32.mxu0 %v4287
        %4425 = vmatmul.mubr.f32.gmra.mrb[0].mxu0 %v4207
        %v4426 = vpop.f32.mrb[0].mxu0
        %v4427 = vadd.f32 %v4282, %v4426
        %v4428 = vpop.f32.mrb[0].mxu0
        %4429 = vdwg.mxu0
        %v4430 = vmax.f32 %v4356, 0.0
        %v4431 = vmax.f32 %v4358, 0.0
        %v4432 = vmax.f32 %v4427, 0.0
        %4433 = vst [vmem:[%s638] sm:$0xff] %v4430
        %4434 = vst [vmem:[%s638 + $0x8] sm:$0xff] %v4431
        %vm4435 = vcmask 392192
        %4436 = vst.msk [vmem:[%s638 + $0x10] sm:$0xff] %vm4435, %v4432
        %s4437 = sand.u32 %s409, 1
        %s4438 = scalar_lea.sflag [#allocation4], %s4437
        %s4439 = sand.u32 %s409, 1
        %s4440 = smul.addr %s4439, 16
        %s4441 = scalar_lea.vmem [#allocation10], %s4440
        %s4442 = sand.u32 %s435, 1
        %s4443 = scalar_lea.sflag [#allocation12], %s4442
        %s4444 = sand.u32 %s435, 1
        %s4445 = smul.addr %s4444, 24
        %s4446 = scalar_lea.vmem [#allocation11], %s4445
        // Predicated region
        $region105: #{tpu_custom_call.1} parent=87 // pred_check
          %p4447 = pneg %p419
        $region106: #{tpu_custom_call.1} parent=87 // pred_check_branch
          %4449 = sbr.rel (%p4447) target = $region108
        $region107: #{tpu_custom_call.1} parent=87 // pred_region
          %s4451 = ssub.s32 256, 256
          %4452 = vsyncadd %s4438, %s4451
          %s4453 = smul.addr %s39, 2
          %s4454 = smul.addr %s4453, 128
          %s4455 = scalar_lea.hbm %s17, %s4454
          %s4457 = sshll.u32 %s4441, 4
          %s4458 = int_to_ptr.vmem [resolvable:$true] %s4457
          %4460 = dma.vmem_to_hbm [thread:$0]  %s4458, 256, %s4455, %s4438
        $region108: #{tpu_custom_call.1} parent=87 // pred_fallthru
          _
        // Predicated region
        $region109: #{tpu_custom_call.1} parent=87 // pred_check
          %p4461 = pneg %p445
        $region110: #{tpu_custom_call.1} parent=87 // pred_check_branch
          %4463 = sbr.rel (%p4461) target = $region112
        $region111: #{tpu_custom_call.1} parent=87 // pred_region
          %s4465 = ssub.s32 384, 384
          %4466 = vsyncadd %s4443, %s4465
          %s4467 = smul.addr %s39, 3
          %s4468 = smul.addr %s4467, 128
          %s4469 = scalar_lea.hbm %s18, %s4468
          %s4471 = sshll.u32 %s4446, 4
          %s4472 = int_to_ptr.vmem [resolvable:$true] %s4471
          %4474 = dma.vmem_to_hbm [thread:$0]  %s4472, 384, %s4469, %s4443
        $region112: #{tpu_custom_call.1} parent=87 // pred_fallthru
          _
      $region88: #{tpu_custom_call.1} parent=5 // pred_fallthru
        _
      %p4475 = scmp.le.s32.totalorder 2, %s34
      // Predicated region
      $region113: #{tpu_custom_call.1} parent=5 // pred_check
        %p4476 = pneg %p4475
      $region114: #{tpu_custom_call.1} parent=5 // pred_check_branch
        %4478 = sbr.rel (%p4476) target = $region116
      $region115: #{tpu_custom_call.1} parent=5 // pred_region
        %s4479 = ssub.s32 %s34, 2
        // Predicated region
        $region117: #{tpu_custom_call.1} parent=115 // pred_check
          %p4480 = pneg %p425
        $region118: #{tpu_custom_call.1} parent=115 // pred_check_branch
          %4482 = sbr.rel (%p4480) target = $region120
        $region119: #{tpu_custom_call.1} parent=115 // pred_region
          %s4483 = sand.u32 %s410, 1
          %s4484 = scalar_lea.sflag [#allocation4], %s4483
          %s4485 = sand.u32 %s410, 1
          %s4486 = smul.addr %s4485, 16
          %s4487 = scalar_lea.vmem [#allocation10], %s4486
          %4488 = dma.done %s4484, 256
        $region120: #{tpu_custom_call.1} parent=115 // pred_fallthru
          _
        // Predicated region
        $region121: #{tpu_custom_call.1} parent=115 // pred_check
          %p4489 = pneg %p451
        $region122: #{tpu_custom_call.1} parent=115 // pred_check_branch
          %4491 = sbr.rel (%p4489) target = $region124
        $region123: #{tpu_custom_call.1} parent=115 // pred_region
          %s4492 = sand.u32 %s436, 1
          %s4493 = scalar_lea.sflag [#allocation12], %s4492
          %s4494 = sand.u32 %s436, 1
          %s4495 = smul.addr %s4494, 24
          %s4496 = scalar_lea.vmem [#allocation11], %s4495
          %4497 = dma.done %s4493, 384
        $region124: #{tpu_custom_call.1} parent=115 // pred_fallthru
          _
      $region116: #{tpu_custom_call.1} parent=5 // pred_fallthru
        _
    $region6: #{tpu_custom_call.1} parent=1 // loop_footer
      %s38 = sadd.s32 1, %s34
    $region7: #{tpu_custom_call.1} parent=1 // loop_footer_branch
      %33 = sbr.rel target = $region3
    $region8: #{tpu_custom_call.1} parent=1 // loop_exit
      _
    %4498 = vsyncpa [#allocation3], 1
    %s4499 = scalar_lea.sflag [#allocation3], 1
    %4500 = vsyncpa %s4499, 1
    %4501 = vsyncpa [#allocation6], 1
    %4502 = vsyncpa [#allocation9], 1
    %4503 = vsyncpa [#allocation4], 1
    %s4504 = scalar_lea.sflag [#allocation4], 1
    %4505 = vsyncpa %s4504, 1
    %4506 = vsyncpa [#allocation12], 1
    %s4507 = scalar_lea.sflag [#allocation12], 1
    %4508 = vsyncpa %s4507, 1

</llo_original>
